<compile_context>
chip_gen: v5e
topology: v5e:2x2
jax: 0.10.0
libtpu: 0.0.40
codegen_flags: <defaults>
</compile_context>

<pallas_src>
import functools

import jax
import jax.numpy as jnp
from jax.experimental import pallas as pl
from jax.experimental.pallas import tpu as pltpu

C_IN = 2048
C_MID = 512
ROWS_TARGET = 256   # M-tile target: fills the 256-row MXU on v6e/v7x (128 suffices on v5e)


def _attention_kernel(x_ref, w1_ref, shift_ref, w2_ref, o_ref, *, nb, hw):
    # x_ref:     (nb*hw, C_IN) f32  -- nb whole batch items, spatial-major rows
    # w1_ref:    (C_IN, C_MID) bf16 -- conv1 weight with BN scale folded in
    # shift_ref: (1, C_MID)    f32  -- folded conv1 bias + BN shift
    # w2_ref:    (1, C_MID)    f32  -- conv2 weight (bias omitted: softmax-invariant)
    # o_ref:     (nb, C_IN)    f32
    x = x_ref[...]                                                    # (TM, C_IN)

    # Conv1x1 (2048->512) + folded BN + ReLU == bf16 matmul + shift + relu.
    h = jnp.dot(x.astype(jnp.bfloat16), w1_ref[...],
                preferred_element_type=jnp.float32)                   # (TM, C_MID)
    h = jnp.maximum(h + shift_ref[...], 0.0)

    # Conv1x1 (512->1): N=1 matmul replaced by VPU multiply + lane reduce.
    logits = jnp.sum(h * w2_ref[...], axis=-1, keepdims=True)         # (TM, 1)

    # Per-batch-item softmax over the spatial axis.
    l3 = logits.reshape(nb, hw, 1)                                    # (nb, hw, 1)
    m = jnp.max(l3, axis=1, keepdims=True)                            # (nb, 1, 1)
    p = jnp.exp(l3 - m)
    attn = p * pl.reciprocal(jnp.sum(p, axis=1, keepdims=True), approx=True)

    # y = x + x*attn (attn broadcast over channels), global max-pool over HW.
    x3 = x.reshape(nb, hw, C_IN)
    pooled = jnp.max(x3 * (1.0 + attn), axis=1)                       # (nb, C_IN)

    # F.normalize:  x / max(||x||, 1e-12)  ==  x * rsqrt(max(||x||^2, 1e-24)).
    sumsq = jnp.sum(pooled * pooled, axis=-1, keepdims=True)          # (nb, 1)
    o_ref[...] = pooled * jax.lax.rsqrt(jnp.maximum(sumsq, 1e-24))


def attention_forward(x_nchw, params):
    """x_nchw: (B, 2048, H, W) float32 -> (B, 2048) float32"""
    B, C, H, W = x_nchw.shape
    assert C == C_IN
    HW = H * W

    # NCHW -> (B*HW, C) channels-last rows (lane-dense, matmul-ready).
    # TODO(synk): have the producer emit channels-last (NHWC) so this extra
    # mem-bound transpose pass over B*C*HW elements disappears end-to-end.
    x_rows = jnp.transpose(x_nchw, (0, 2, 3, 1)).reshape(B * HW, C)

    # Fold conv1 bias + BatchNorm (eval stats) into w1 / shift.
    bn_scale = params["bn_gamma"] / jnp.sqrt(params["bn_var"] + 1e-5)     # (C_MID,)
    w1 = (params["conv1_w"].reshape(C_MID, C_IN).T * bn_scale[None, :])   # (C_IN, C_MID)
    w1 = w1.astype(jnp.bfloat16)
    shift = ((params["conv1_b"] - params["bn_mean"]) * bn_scale
             + params["bn_beta"]).reshape(1, C_MID).astype(jnp.float32)
    w2 = params["conv2_w"].reshape(1, C_MID).astype(jnp.float32)

    # Fuse whole batch items into the matmul M tile (TM = nb*HW rows).
    nb = max(1, min(B, ROWS_TARGET // max(HW, 1)))
    if nb < B and nb % 8 != 0:
        nb = B                              # keep blocks tile-aligned / full-array sized
    b_pad = ((B + nb - 1) // nb) * nb
    if b_pad != B:
        # Padding *whole* batch items is safe: softmax / max-pool never mix
        # batch items, and the padded rows are sliced off below.
        pad = jnp.zeros(((b_pad - B) * HW, C), x_rows.dtype)
        x_rows = jnp.concatenate([x_rows, pad], axis=0)
    tm = nb * HW

    # TODO(synk): for very large HW on v7x (64 MiB VMEM), tile the spatial axis
    # with a two-pass softmax instead of one full-HW block per batch item.
    out = pl.pallas_call(
        functools.partial(_attention_kernel, nb=nb, hw=HW),
        out_shape=jax.ShapeDtypeStruct((b_pad, C_IN), jnp.float32),
        grid_spec=pltpu.PrefetchScalarGridSpec(
            num_scalar_prefetch=0,
            grid=(b_pad // nb,),
            in_specs=[
                pl.BlockSpec((tm, C_IN), lambda i: (i, 0)),        # x rows
                # Grid-invariant operands (constant index_map): Pallas keeps the
                # resident copy and skips re-DMA across grid steps.
                pl.BlockSpec((C_IN, C_MID), lambda i: (0, 0)),     # w1 (bf16)
                pl.BlockSpec((1, C_MID), lambda i: (0, 0)),        # shift
                pl.BlockSpec((1, C_MID), lambda i: (0, 0)),        # w2
            ],
            out_specs=pl.BlockSpec((nb, C_IN), lambda i: (i, 0)),
        ),
        compiler_params=pltpu.CompilerParams(
            dimension_semantics=("parallel",),   # shards across the 2 TCs on v7x
            vmem_limit_bytes=48 << 20,           # > default scoped limit, < v7x 64 MiB
        ),
    )(x_rows, w1, shift, w2)
    return out[:B]


def attention_reference(x_nchw, params):
    """Pure-JAX f32 reference mirroring the PyTorch forward (BN in eval mode)."""
    B, C, H, W = x_nchw.shape
    x_flat = jnp.transpose(x_nchw, (0, 2, 3, 1)).reshape(B, H * W, C)
    w1 = params["conv1_w"].reshape(C_MID, C_IN).T
    h = x_flat @ w1 + params["conv1_b"]
    h = (h - params["bn_mean"]) / jnp.sqrt(params["bn_var"] + 1e-5)
    h = h * params["bn_gamma"] + params["bn_beta"]
    h = jnp.maximum(h, 0.0)
    logits = (h @ params["conv2_w"].reshape(1, C_MID).T + params["conv2_b"])[..., 0]
    attn = jax.nn.softmax(logits, axis=1)[..., None]                    # (B, HW, 1)
    y = x_flat + x_flat * attn
    pooled = jnp.max(y, axis=1)                                         # (B, C)
    norm = jnp.maximum(jnp.linalg.norm(pooled, axis=1, keepdims=True), 1e-12)
    return pooled / norm


def make_params(key):
    ks = jax.random.split(key, 8)
    return {
        "conv1_w": jax.random.normal(ks[0], (C_MID, C_IN, 1, 1), jnp.float32) * 0.02,
        "conv1_b": jax.random.normal(ks[1], (C_MID,), jnp.float32) * 0.01,
        "bn_gamma": 1.0 + 0.1 * jax.random.normal(ks[2], (C_MID,), jnp.float32),
        "bn_beta": 0.1 * jax.random.normal(ks[3], (C_MID,), jnp.float32),
        "bn_mean": 0.05 * jax.random.normal(ks[4], (C_MID,), jnp.float32),
        "bn_var": jnp.abs(1.0 + 0.1 * jax.random.normal(ks[5], (C_MID,), jnp.float32)),
        "conv2_w": jax.random.normal(ks[6], (1, C_MID, 1, 1), jnp.float32) * 0.05,
        "conv2_b": jax.random.normal(ks[7], (1,), jnp.float32) * 0.01,
    }


if __name__ == "__main__":
    key = jax.random.PRNGKey(0)
    k_x, k_p = jax.random.split(key)

    B, H, W = 2, 4, 4                      # channels fixed at 2048 by the module
    x = jax.random.normal(k_x, (B, C_IN, H, W), jnp.float32)
    params = make_params(k_p)

    out = jax.block_until_ready(attention_forward(x, params))
    ref = attention_reference(x, params)

    assert out.shape == (B, C_IN)
    # bf16 matmul weights + approx reciprocal -> compare against the f32
    # reference with a correspondingly looser tolerance.
    assert jnp.allclose(out, ref, atol=5e-3, rtol=5e-2), "mismatch vs reference"

    print("KERNEL_OK")
</pallas_src>

<mosaic_0001>
module attributes {stable_mosaic.version = 11 : i64} {
  func.func @_attention_kernel(%arg0: i32, %arg1: memref<32x2048xf32, #tpu.memory_space<vmem>>, %arg2: memref<2048x512xbf16, #tpu.memory_space<vmem>>, %arg3: memref<1x512xf32, #tpu.memory_space<vmem>>, %arg4: memref<1x512xf32, #tpu.memory_space<vmem>>, %arg5: memref<2x2048xf32, #tpu.memory_space<vmem>>) attributes {dimension_semantics = [#tpu.dimension_semantics<parallel>], iteration_bounds = array<i64: 1>, scalar_prefetch = 0 : i64, scratch_operands = 0 : i64, tpu.core_type = #tpu.core_type<tc>, window_params = [{transform_indices = @transform_0, window_bounds = array<i64: 32, 2048>}, {pipeline_mode = #tpu.pipeline_mode<synchronous>, transform_indices = @transform_1, window_bounds = array<i64: 2048, 512>}, {pipeline_mode = #tpu.pipeline_mode<synchronous>, transform_indices = @transform_2, window_bounds = array<i64: 1, 512>}, {pipeline_mode = #tpu.pipeline_mode<synchronous>, transform_indices = @transform_3, window_bounds = array<i64: 1, 512>}, {transform_indices = @transform_4, window_bounds = array<i64: 2, 2048>}]} {
    %c0 = arith.constant 0 : index
    %c0_0 = arith.constant 0 : index
    %0 = vector.load %arg1[%c0, %c0_0] : memref<32x2048xf32, #tpu.memory_space<vmem>>, vector<32x2048xf32>
    %1 = arith.truncf %0 : vector<32x2048xf32> to vector<32x2048xbf16>
    %c0_1 = arith.constant 0 : index
    %c0_2 = arith.constant 0 : index
    %2 = vector.load %arg2[%c0_1, %c0_2] : memref<2048x512xbf16, #tpu.memory_space<vmem>>, vector<2048x512xbf16>
    %cst = arith.constant dense<0.000000e+00> : vector<32x512xf32>
    %3 = tpu.matmul %1, %2, %cst {dimension_numbers = #tpu.dot_dimension_numbers<[1], [0], [0], [1], [0, 0, 1, 1], [], []>} : vector<32x2048xbf16>, vector<2048x512xbf16>, vector<32x512xf32> -> vector<32x512xf32>
    %c0_3 = arith.constant 0 : index
    %c0_4 = arith.constant 0 : index
    %4 = vector.load %arg3[%c0_3, %c0_4] : memref<1x512xf32, #tpu.memory_space<vmem>>, vector<1x512xf32>
    %5 = vector.broadcast %4 : vector<1x512xf32> to vector<32x512xf32>
    %6 = arith.addf %3, %5 : vector<32x512xf32>
    %cst_5 = arith.constant 0.000000e+00 : f32
    %7 = vector.broadcast %cst_5 : f32 to vector<32x512xf32>
    %8 = arith.maximumf %6, %7 : vector<32x512xf32>
    %c0_6 = arith.constant 0 : index
    %c0_7 = arith.constant 0 : index
    %9 = vector.load %arg4[%c0_6, %c0_7] : memref<1x512xf32, #tpu.memory_space<vmem>>, vector<1x512xf32>
    %10 = vector.broadcast %9 : vector<1x512xf32> to vector<32x512xf32>
    %11 = arith.mulf %8, %10 : vector<32x512xf32>
    %cst_8 = arith.constant dense<0.000000e+00> : vector<32xf32>
    %12 = vector.multi_reduction <add>, %11, %cst_8 [1] : vector<32x512xf32> to vector<32xf32>
    %13 = vector.shape_cast %12 : vector<32xf32> to vector<32x1xf32>
    %14 = vector.shape_cast %13 : vector<32x1xf32> to vector<2x16x1xf32>
    %cst_9 = arith.constant dense<0xFF800000> : vector<2x1xf32>
    %15 = vector.multi_reduction <maximumf>, %14, %cst_9 [1] : vector<2x16x1xf32> to vector<2x1xf32>
    %16 = vector.shape_cast %15 : vector<2x1xf32> to vector<2x1x1xf32>
    %17 = vector.broadcast %16 : vector<2x1x1xf32> to vector<2x16x1xf32>
    %18 = arith.subf %14, %17 : vector<2x16x1xf32>
    %19 = math.exp %18 : vector<2x16x1xf32>
    %cst_10 = arith.constant dense<0.000000e+00> : vector<2x1xf32>
    %20 = vector.multi_reduction <add>, %19, %cst_10 [1] : vector<2x16x1xf32> to vector<2x1xf32>
    %21 = vector.shape_cast %20 : vector<2x1xf32> to vector<2x1x1xf32>
    %22 = tpu.reciprocal %21 {approx = true} : vector<2x1x1xf32> -> vector<2x1x1xf32>
    %23 = vector.broadcast %22 : vector<2x1x1xf32> to vector<2x16x1xf32>
    %24 = arith.mulf %19, %23 : vector<2x16x1xf32>
    %25 = vector.shape_cast %0 : vector<32x2048xf32> to vector<2x16x2048xf32>
    %cst_11 = arith.constant 1.000000e+00 : f32
    %26 = vector.broadcast %cst_11 : f32 to vector<2x16x1xf32>
    %27 = arith.addf %26, %24 : vector<2x16x1xf32>
    %28 = vector.broadcast %27 : vector<2x16x1xf32> to vector<2x16x2048xf32>
    %29 = arith.mulf %25, %28 : vector<2x16x2048xf32>
    %cst_12 = arith.constant dense<0xFF800000> : vector<2x2048xf32>
    %30 = vector.multi_reduction <maximumf>, %29, %cst_12 [1] : vector<2x16x2048xf32> to vector<2x2048xf32>
    %31 = arith.mulf %30, %30 : vector<2x2048xf32>
    %cst_13 = arith.constant dense<0.000000e+00> : vector<2xf32>
    %32 = vector.multi_reduction <add>, %31, %cst_13 [1] : vector<2x2048xf32> to vector<2xf32>
    %33 = vector.shape_cast %32 : vector<2xf32> to vector<2x1xf32>
    %cst_14 = arith.constant 1.000000e-24 : f32
    %34 = vector.broadcast %cst_14 : f32 to vector<2x1xf32>
    %35 = arith.maximumf %33, %34 : vector<2x1xf32>
    %36 = math.rsqrt %35 : vector<2x1xf32>
    %37 = vector.broadcast %36 : vector<2x1xf32> to vector<2x2048xf32>
    %38 = arith.mulf %30, %37 : vector<2x2048xf32>
    %c0_15 = arith.constant 0 : index
    %c0_16 = arith.constant 0 : index
    %39 = vector.load %arg5[%c0_15, %c0_16] : memref<2x2048xf32, #tpu.memory_space<vmem>>, vector<2x2048xf32>
    tpu.vector_store %arg5[%c0_15, %c0_16], %38 {strides = array<i32>} : memref<2x2048xf32, #tpu.memory_space<vmem>>, vector<2x2048xf32>,
    return
  }
  func.func @transform_0(%arg0: i32) -> (i32, i32) {
    %c0_i32 = arith.constant 0 : i32
    %c0_i32_0 = arith.constant 0 : i32
    return %arg0, %c0_i32 : i32, i32
  }
  func.func @transform_1(%arg0: i32) -> (i32, i32) {
    %c0_i32 = arith.constant 0 : i32
    %c0_i32_0 = arith.constant 0 : i32
    %c0_i32_1 = arith.constant 0 : i32
    return %c0_i32, %c0_i32_0 : i32, i32
  }
  func.func @transform_2(%arg0: i32) -> (i32, i32) {
    %c0_i32 = arith.constant 0 : i32
    %c0_i32_0 = arith.constant 0 : i32
    %c0_i32_1 = arith.constant 0 : i32
    return %c0_i32, %c0_i32_0 : i32, i32
  }
  func.func @transform_3(%arg0: i32) -> (i32, i32) {
    %c0_i32 = arith.constant 0 : i32
    %c0_i32_0 = arith.constant 0 : i32
    %c0_i32_1 = arith.constant 0 : i32
    return %c0_i32, %c0_i32_0 : i32, i32
  }
  func.func @transform_4(%arg0: i32) -> (i32, i32) {
    %c0_i32 = arith.constant 0 : i32
    %c0_i32_0 = arith.constant 0 : i32
    return %arg0, %c0_i32 : i32, i32
  }
}

</mosaic_0001>

<llo_original>
// kernel: tpu_custom_call.1
$region0: #{tpu_custom_call.1}
  #allocation0 [shape = 'u32[]', space=smem, size = 0x4, offset = 0x4, fixed_abs, tag = 'smem constant byte address 0x4 - core index']
  #allocation1 [shape = 'u32[72,128]{1,0:T(1,128)}', space=vmem, size = 0x9000, scoped, tag = 'internal scratch']
  %s0 = inlined_call_operand.hbm [shape: f32[32,2048], index: 0, kind: input, shape index: {}]
  %s1 = inlined_call_operand.hbm [shape: bf16[2048,512], index: 1, kind: input, shape index: {}]
  %s2 = inlined_call_operand.hbm [shape: f32[1,512], index: 2, kind: input, shape index: {}]
  %s3 = inlined_call_operand.hbm [shape: f32[1,512], index: 3, kind: input, shape index: {}]
  %s4 = inlined_call_operand.hbm [shape: f32[2,2048], index: 4, kind: output, shape index: {}]
  %s5 = sld [smem:[#allocation0]]
  $region42: #{tpu_custom_call.1} parent=0
    _
  %s7 = ssub.s32 1, %s5
  %s8 = scalar_select 0, %s7, %s5
  $region1: #{tpu_custom_call.1} parent=0
    #allocation2 [shape = 'u8[262144]{0}', space=vmem, size = 0x40000, scoped, tag = 'input window, operand 0, single buffered']
    #allocation3 [shape = 's32[1]{0}', space=sflag, size = 0x4, scoped, tag = 'scoped memory for tpu_custom_call.1']
    #allocation4 [shape = 's32[1]{0}', space=sflag, size = 0x4, scoped, tag = 'scoped memory for tpu_custom_call.1']
    #allocation5 [shape = 'u8[2097152]{0}', space=vmem, size = 0x200000, scoped, tag = 'input window, operand 1, single buffered']
    #allocation6 [shape = 's32[1]{0}', space=sflag, size = 0x4, scoped, tag = 'scoped memory for tpu_custom_call.1']
    #allocation7 [shape = 'u8[2048]{0}', space=vmem, size = 0x800, scoped, tag = 'input window, operand 2, single buffered']
    #allocation8 [shape = 'u8[2048]{0}', space=vmem, size = 0x800, scoped, tag = 'input window, operand 3, single buffered']
    #allocation9 [shape = 's32[1]{0}', space=sflag, size = 0x4, scoped, tag = 'scoped memory for tpu_custom_call.1']
    #allocation10 [shape = 'u8[16384]{0}', space=vmem, size = 0x4000, scoped, tag = 'output window, operand 0, single buffered']
    %9 = vsyncpa [#allocation3], 0
    %10 = vsyncpa [#allocation6], 0
    %11 = vsyncpa [#allocation9], 0
    %12 = vsyncpa [#allocation4], 0
    // Predicated region
    $region2: #{tpu_custom_call.1} parent=1 // pred_check
      _
    $region3: #{tpu_custom_call.1} parent=1 // pred_check_branch
      %14 = sbr.rel (0) target = $region5
    $region4: #{tpu_custom_call.1} parent=1 // pred_region
      %16 = vsyncadd [#allocation3], 0
      %s17 = sshll.u32 %s0, 4
      %s18 = int_to_ptr.hbm [resolvable:$true] %s17
      %s19 = sshll.u32 [#allocation2], 4
      %s20 = int_to_ptr.vmem [resolvable:$true] %s19
      %25 = dma.hbm_to_vmem [thread:$0]  %s18, 8192, %s20, [#allocation3], 2048, 2048, 128
    $region5: #{tpu_custom_call.1} parent=1 // pred_fallthru
      _
    // Predicated region
    $region6: #{tpu_custom_call.1} parent=1 // pred_check
      _
    $region7: #{tpu_custom_call.1} parent=1 // pred_check_branch
      %27 = sbr.rel (0) target = $region9
    $region8: #{tpu_custom_call.1} parent=1 // pred_region
      %29 = vsyncadd [#allocation6], 0
      %s30 = sshll.u32 %s1, 4
      %s31 = int_to_ptr.hbm [resolvable:$true] %s30
      %s32 = sshll.u32 [#allocation5], 4
      %s33 = int_to_ptr.vmem [resolvable:$true] %s32
      %38 = dma.hbm_to_vmem [thread:$0]  %s31, 65536, %s33, [#allocation6], 256, 256, 16
    $region9: #{tpu_custom_call.1} parent=1 // pred_fallthru
      _
    // Predicated region
    $region10: #{tpu_custom_call.1} parent=1 // pred_check
      _
    $region11: #{tpu_custom_call.1} parent=1 // pred_check_branch
      %40 = sbr.rel (0) target = $region13
    $region12: #{tpu_custom_call.1} parent=1 // pred_region
      %42 = vsyncadd [#allocation6], 0
      %s44 = sshll.u32 %s2, 4
      %s45 = int_to_ptr.hbm [resolvable:$true] %s44
      %s46 = sshll.u32 [#allocation7], 4
      %s47 = int_to_ptr.vmem [resolvable:$true] %s46
      %49 = dma.hbm_to_vmem [thread:$0]  %s45, 64, %s47, [#allocation6]
    $region13: #{tpu_custom_call.1} parent=1 // pred_fallthru
      _
    // Predicated region
    $region14: #{tpu_custom_call.1} parent=1 // pred_check
      _
    $region15: #{tpu_custom_call.1} parent=1 // pred_check_branch
      %51 = sbr.rel (0) target = $region17
    $region16: #{tpu_custom_call.1} parent=1 // pred_region
      %53 = vsyncadd [#allocation9], 0
      %s55 = sshll.u32 %s3, 4
      %s56 = int_to_ptr.hbm [resolvable:$true] %s55
      %s57 = sshll.u32 [#allocation8], 4
      %s58 = int_to_ptr.vmem [resolvable:$true] %s57
      %60 = dma.hbm_to_vmem [thread:$0]  %s56, 64, %s58, [#allocation9]
    $region17: #{tpu_custom_call.1} parent=1 // pred_fallthru
      _
    // Predicated region
    $region18: #{tpu_custom_call.1} parent=1 // pred_check
      _
    $region19: #{tpu_custom_call.1} parent=1 // pred_check_branch
      %62 = sbr.rel (0) target = $region21
    $region20: #{tpu_custom_call.1} parent=1 // pred_region
      %64 = dma.done [#allocation3], 8192
    $region21: #{tpu_custom_call.1} parent=1 // pred_fallthru
      _
    // Predicated region
    $region22: #{tpu_custom_call.1} parent=1 // pred_check
      _
    $region23: #{tpu_custom_call.1} parent=1 // pred_check_branch
      %66 = sbr.rel (0) target = $region25
    $region24: #{tpu_custom_call.1} parent=1 // pred_region
      %68 = dma.done [#allocation6], 65536
    $region25: #{tpu_custom_call.1} parent=1 // pred_fallthru
      _
    // Predicated region
    $region26: #{tpu_custom_call.1} parent=1 // pred_check
      _
    $region27: #{tpu_custom_call.1} parent=1 // pred_check_branch
      %70 = sbr.rel (0) target = $region29
    $region28: #{tpu_custom_call.1} parent=1 // pred_region
      %72 = dma.done [#allocation6], 64
    $region29: #{tpu_custom_call.1} parent=1 // pred_fallthru
      _
    // Predicated region
    $region30: #{tpu_custom_call.1} parent=1 // pred_check
      _
    $region31: #{tpu_custom_call.1} parent=1 // pred_check_branch
      %74 = sbr.rel (0) target = $region33
    $region32: #{tpu_custom_call.1} parent=1 // pred_region
      %76 = dma.done [#allocation9], 64
    $region33: #{tpu_custom_call.1} parent=1 // pred_fallthru
      _
    %v77 = vld [vmem:[#allocation2] sm:$0xff]
    %v78 = vld [vmem:[#allocation2 + $0x8] sm:$0xff]
    %v79 = vld [vmem:[#allocation2 + $0x10] sm:$0xff]
    %v80 = vld [vmem:[#allocation2 + $0x18] sm:$0xff]
    %v81 = vld [vmem:[#allocation2 + $0x20] sm:$0xff]
    %v82 = vld [vmem:[#allocation2 + $0x28] sm:$0xff]
    %v83 = vld [vmem:[#allocation2 + $0x30] sm:$0xff]
    %v84 = vld [vmem:[#allocation2 + $0x38] sm:$0xff]
    %v85 = vld [vmem:[#allocation2 + $0x40] sm:$0xff]
    %v86 = vld [vmem:[#allocation2 + $0x48] sm:$0xff]
    %v87 = vld [vmem:[#allocation2 + $0x50] sm:$0xff]
    %v88 = vld [vmem:[#allocation2 + $0x58] sm:$0xff]
    %v89 = vld [vmem:[#allocation2 + $0x60] sm:$0xff]
    %v90 = vld [vmem:[#allocation2 + $0x68] sm:$0xff]
    %v91 = vld [vmem:[#allocation2 + $0x70] sm:$0xff]
    %v92 = vld [vmem:[#allocation2 + $0x78] sm:$0xff]
    %v93 = vld [vmem:[#allocation2 + $0x80] sm:$0xff]
    %v94 = vld [vmem:[#allocation2 + $0x88] sm:$0xff]
    %v95 = vld [vmem:[#allocation2 + $0x90] sm:$0xff]
    %v96 = vld [vmem:[#allocation2 + $0x98] sm:$0xff]
    %v97 = vld [vmem:[#allocation2 + $0xa0] sm:$0xff]
    %v98 = vld [vmem:[#allocation2 + $0xa8] sm:$0xff]
    %v99 = vld [vmem:[#allocation2 + $0xb0] sm:$0xff]
    %v100 = vld [vmem:[#allocation2 + $0xb8] sm:$0xff]
    %v101 = vld [vmem:[#allocation2 + $0xc0] sm:$0xff]
    %v102 = vld [vmem:[#allocation2 + $0xc8] sm:$0xff]
    %v103 = vld [vmem:[#allocation2 + $0xd0] sm:$0xff]
    %v104 = vld [vmem:[#allocation2 + $0xd8] sm:$0xff]
    %v105 = vld [vmem:[#allocation2 + $0xe0] sm:$0xff]
    %v106 = vld [vmem:[#allocation2 + $0xe8] sm:$0xff]
    %v107 = vld [vmem:[#allocation2 + $0xf0] sm:$0xff]
    %v108 = vld [vmem:[#allocation2 + $0xf8] sm:$0xff]
    %v109 = vld [vmem:[#allocation2 + $0x100] sm:$0xff]
    %v110 = vld [vmem:[#allocation2 + $0x108] sm:$0xff]
    %v111 = vld [vmem:[#allocation2 + $0x110] sm:$0xff]
    %v112 = vld [vmem:[#allocation2 + $0x118] sm:$0xff]
    %v113 = vld [vmem:[#allocation2 + $0x120] sm:$0xff]
    %v114 = vld [vmem:[#allocation2 + $0x128] sm:$0xff]
    %v115 = vld [vmem:[#allocation2 + $0x130] sm:$0xff]
    %v116 = vld [vmem:[#allocation2 + $0x138] sm:$0xff]
    %v117 = vld [vmem:[#allocation2 + $0x140] sm:$0xff]
    %v118 = vld [vmem:[#allocation2 + $0x148] sm:$0xff]
    %v119 = vld [vmem:[#allocation2 + $0x150] sm:$0xff]
    %v120 = vld [vmem:[#allocation2 + $0x158] sm:$0xff]
    %v121 = vld [vmem:[#allocation2 + $0x160] sm:$0xff]
    %v122 = vld [vmem:[#allocation2 + $0x168] sm:$0xff]
    %v123 = vld [vmem:[#allocation2 + $0x170] sm:$0xff]
    %v124 = vld [vmem:[#allocation2 + $0x178] sm:$0xff]
    %v125 = vld [vmem:[#allocation2 + $0x180] sm:$0xff]
    %v126 = vld [vmem:[#allocation2 + $0x188] sm:$0xff]
    %v127 = vld [vmem:[#allocation2 + $0x190] sm:$0xff]
    %v128 = vld [vmem:[#allocation2 + $0x198] sm:$0xff]
    %v129 = vld [vmem:[#allocation2 + $0x1a0] sm:$0xff]
    %v130 = vld [vmem:[#allocation2 + $0x1a8] sm:$0xff]
    %v131 = vld [vmem:[#allocation2 + $0x1b0] sm:$0xff]
    %v132 = vld [vmem:[#allocation2 + $0x1b8] sm:$0xff]
    %v133 = vld [vmem:[#allocation2 + $0x1c0] sm:$0xff]
    %v134 = vld [vmem:[#allocation2 + $0x1c8] sm:$0xff]
    %v135 = vld [vmem:[#allocation2 + $0x1d0] sm:$0xff]
    %v136 = vld [vmem:[#allocation2 + $0x1d8] sm:$0xff]
    %v137 = vld [vmem:[#allocation2 + $0x1e0] sm:$0xff]
    %v138 = vld [vmem:[#allocation2 + $0x1e8] sm:$0xff]
    %v139 = vld [vmem:[#allocation2 + $0x1f0] sm:$0xff]
    %v140 = vld [vmem:[#allocation2 + $0x1f8] sm:$0xff]
    %v141 = vpack.c.bf16 %v93, %v77
    %v142 = vpack.c.bf16 %v94, %v78
    %v143 = vpack.c.bf16 %v95, %v79
    %v144 = vpack.c.bf16 %v96, %v80
    %v145 = vpack.c.bf16 %v97, %v81
    %v146 = vpack.c.bf16 %v98, %v82
    %v147 = vpack.c.bf16 %v99, %v83
    %v148 = vpack.c.bf16 %v100, %v84
    %v149 = vpack.c.bf16 %v101, %v85
    %v150 = vpack.c.bf16 %v102, %v86
    %v151 = vpack.c.bf16 %v103, %v87
    %v152 = vpack.c.bf16 %v104, %v88
    %v153 = vpack.c.bf16 %v105, %v89
    %v154 = vpack.c.bf16 %v106, %v90
    %v155 = vpack.c.bf16 %v107, %v91
    %v156 = vpack.c.bf16 %v108, %v92
    %v157 = vpack.c.bf16 %v125, %v109
    %v158 = vpack.c.bf16 %v126, %v110
    %v159 = vpack.c.bf16 %v127, %v111
    %v160 = vpack.c.bf16 %v128, %v112
    %v161 = vpack.c.bf16 %v129, %v113
    %v162 = vpack.c.bf16 %v130, %v114
    %v163 = vpack.c.bf16 %v131, %v115
    %v164 = vpack.c.bf16 %v132, %v116
    %v165 = vpack.c.bf16 %v133, %v117
    %v166 = vpack.c.bf16 %v134, %v118
    %v167 = vpack.c.bf16 %v135, %v119
    %v168 = vpack.c.bf16 %v136, %v120
    %v169 = vpack.c.bf16 %v137, %v121
    %v170 = vpack.c.bf16 %v138, %v122
    %v171 = vpack.c.bf16 %v139, %v123
    %v172 = vpack.c.bf16 %v140, %v124
    %v173 = vld [vmem:[#allocation5] sm:$0xff]
    %v174 = vld [vmem:[#allocation5 + $0x8] sm:$0xff]
    %v175 = vld [vmem:[#allocation5 + $0x10] sm:$0xff]
    %v176 = vld [vmem:[#allocation5 + $0x18] sm:$0xff]
    %v177 = vld [vmem:[#allocation5 + $0x20] sm:$0xff]
    %v178 = vld [vmem:[#allocation5 + $0x28] sm:$0xff]
    %v179 = vld [vmem:[#allocation5 + $0x30] sm:$0xff]
    %v180 = vld [vmem:[#allocation5 + $0x38] sm:$0xff]
    %v181 = vld [vmem:[#allocation5 + $0x40] sm:$0xff]
    %v182 = vld [vmem:[#allocation5 + $0x48] sm:$0xff]
    %v183 = vld [vmem:[#allocation5 + $0x50] sm:$0xff]
    %v184 = vld [vmem:[#allocation5 + $0x58] sm:$0xff]
    %v185 = vld [vmem:[#allocation5 + $0x60] sm:$0xff]
    %v186 = vld [vmem:[#allocation5 + $0x68] sm:$0xff]
    %v187 = vld [vmem:[#allocation5 + $0x70] sm:$0xff]
    %v188 = vld [vmem:[#allocation5 + $0x78] sm:$0xff]
    %v189 = vld [vmem:[#allocation5 + $0x80] sm:$0xff]
    %v190 = vld [vmem:[#allocation5 + $0x88] sm:$0xff]
    %v191 = vld [vmem:[#allocation5 + $0x90] sm:$0xff]
    %v192 = vld [vmem:[#allocation5 + $0x98] sm:$0xff]
    %v193 = vld [vmem:[#allocation5 + $0xa0] sm:$0xff]
    %v194 = vld [vmem:[#allocation5 + $0xa8] sm:$0xff]
    %v195 = vld [vmem:[#allocation5 + $0xb0] sm:$0xff]
    %v196 = vld [vmem:[#allocation5 + $0xb8] sm:$0xff]
    %v197 = vld [vmem:[#allocation5 + $0xc0] sm:$0xff]
    %v198 = vld [vmem:[#allocation5 + $0xc8] sm:$0xff]
    %v199 = vld [vmem:[#allocation5 + $0xd0] sm:$0xff]
    %v200 = vld [vmem:[#allocation5 + $0xd8] sm:$0xff]
    %v201 = vld [vmem:[#allocation5 + $0xe0] sm:$0xff]
    %v202 = vld [vmem:[#allocation5 + $0xe8] sm:$0xff]
    %v203 = vld [vmem:[#allocation5 + $0xf0] sm:$0xff]
    %v204 = vld [vmem:[#allocation5 + $0xf8] sm:$0xff]
    %v205 = vld [vmem:[#allocation5 + $0x100] sm:$0xff]
    %v206 = vld [vmem:[#allocation5 + $0x108] sm:$0xff]
    %v207 = vld [vmem:[#allocation5 + $0x110] sm:$0xff]
    %v208 = vld [vmem:[#allocation5 + $0x118] sm:$0xff]
    %v209 = vld [vmem:[#allocation5 + $0x120] sm:$0xff]
    %v210 = vld [vmem:[#allocation5 + $0x128] sm:$0xff]
    %v211 = vld [vmem:[#allocation5 + $0x130] sm:$0xff]
    %v212 = vld [vmem:[#allocation5 + $0x138] sm:$0xff]
    %v213 = vld [vmem:[#allocation5 + $0x140] sm:$0xff]
    %v214 = vld [vmem:[#allocation5 + $0x148] sm:$0xff]
    %v215 = vld [vmem:[#allocation5 + $0x150] sm:$0xff]
    %v216 = vld [vmem:[#allocation5 + $0x158] sm:$0xff]
    %v217 = vld [vmem:[#allocation5 + $0x160] sm:$0xff]
    %v218 = vld [vmem:[#allocation5 + $0x168] sm:$0xff]
    %v219 = vld [vmem:[#allocation5 + $0x170] sm:$0xff]
    %v220 = vld [vmem:[#allocation5 + $0x178] sm:$0xff]
    %v221 = vld [vmem:[#allocation5 + $0x180] sm:$0xff]
    %v222 = vld [vmem:[#allocation5 + $0x188] sm:$0xff]
    %v223 = vld [vmem:[#allocation5 + $0x190] sm:$0xff]
    %v224 = vld [vmem:[#allocation5 + $0x198] sm:$0xff]
    %v225 = vld [vmem:[#allocation5 + $0x1a0] sm:$0xff]
    %v226 = vld [vmem:[#allocation5 + $0x1a8] sm:$0xff]
    %v227 = vld [vmem:[#allocation5 + $0x1b0] sm:$0xff]
    %v228 = vld [vmem:[#allocation5 + $0x1b8] sm:$0xff]
    %v229 = vld [vmem:[#allocation5 + $0x1c0] sm:$0xff]
    %v230 = vld [vmem:[#allocation5 + $0x1c8] sm:$0xff]
    %v231 = vld [vmem:[#allocation5 + $0x1d0] sm:$0xff]
    %v232 = vld [vmem:[#allocation5 + $0x1d8] sm:$0xff]
    %v233 = vld [vmem:[#allocation5 + $0x1e0] sm:$0xff]
    %v234 = vld [vmem:[#allocation5 + $0x1e8] sm:$0xff]
    %v235 = vld [vmem:[#allocation5 + $0x1f0] sm:$0xff]
    %v236 = vld [vmem:[#allocation5 + $0x1f8] sm:$0xff]
    %v237 = vld [vmem:[#allocation5 + $0x200] sm:$0xff]
    %v238 = vld [vmem:[#allocation5 + $0x208] sm:$0xff]
    %v239 = vld [vmem:[#allocation5 + $0x210] sm:$0xff]
    %v240 = vld [vmem:[#allocation5 + $0x218] sm:$0xff]
    %v241 = vld [vmem:[#allocation5 + $0x220] sm:$0xff]
    %v242 = vld [vmem:[#allocation5 + $0x228] sm:$0xff]
    %v243 = vld [vmem:[#allocation5 + $0x230] sm:$0xff]
    %v244 = vld [vmem:[#allocation5 + $0x238] sm:$0xff]
    %v245 = vld [vmem:[#allocation5 + $0x240] sm:$0xff]
    %v246 = vld [vmem:[#allocation5 + $0x248] sm:$0xff]
    %v247 = vld [vmem:[#allocation5 + $0x250] sm:$0xff]
    %v248 = vld [vmem:[#allocation5 + $0x258] sm:$0xff]
    %v249 = vld [vmem:[#allocation5 + $0x260] sm:$0xff]
    %v250 = vld [vmem:[#allocation5 + $0x268] sm:$0xff]
    %v251 = vld [vmem:[#allocation5 + $0x270] sm:$0xff]
    %v252 = vld [vmem:[#allocation5 + $0x278] sm:$0xff]
    %v253 = vld [vmem:[#allocation5 + $0x280] sm:$0xff]
    %v254 = vld [vmem:[#allocation5 + $0x288] sm:$0xff]
    %v255 = vld [vmem:[#allocation5 + $0x290] sm:$0xff]
    %v256 = vld [vmem:[#allocation5 + $0x298] sm:$0xff]
    %v257 = vld [vmem:[#allocation5 + $0x2a0] sm:$0xff]
    %v258 = vld [vmem:[#allocation5 + $0x2a8] sm:$0xff]
    %v259 = vld [vmem:[#allocation5 + $0x2b0] sm:$0xff]
    %v260 = vld [vmem:[#allocation5 + $0x2b8] sm:$0xff]
    %v261 = vld [vmem:[#allocation5 + $0x2c0] sm:$0xff]
    %v262 = vld [vmem:[#allocation5 + $0x2c8] sm:$0xff]
    %v263 = vld [vmem:[#allocation5 + $0x2d0] sm:$0xff]
    %v264 = vld [vmem:[#allocation5 + $0x2d8] sm:$0xff]
    %v265 = vld [vmem:[#allocation5 + $0x2e0] sm:$0xff]
    %v266 = vld [vmem:[#allocation5 + $0x2e8] sm:$0xff]
    %v267 = vld [vmem:[#allocation5 + $0x2f0] sm:$0xff]
    %v268 = vld [vmem:[#allocation5 + $0x2f8] sm:$0xff]
    %v269 = vld [vmem:[#allocation5 + $0x300] sm:$0xff]
    %v270 = vld [vmem:[#allocation5 + $0x308] sm:$0xff]
    %v271 = vld [vmem:[#allocation5 + $0x310] sm:$0xff]
    %v272 = vld [vmem:[#allocation5 + $0x318] sm:$0xff]
    %v273 = vld [vmem:[#allocation5 + $0x320] sm:$0xff]
    %v274 = vld [vmem:[#allocation5 + $0x328] sm:$0xff]
    %v275 = vld [vmem:[#allocation5 + $0x330] sm:$0xff]
    %v276 = vld [vmem:[#allocation5 + $0x338] sm:$0xff]
    %v277 = vld [vmem:[#allocation5 + $0x340] sm:$0xff]
    %v278 = vld [vmem:[#allocation5 + $0x348] sm:$0xff]
    %v279 = vld [vmem:[#allocation5 + $0x350] sm:$0xff]
    %v280 = vld [vmem:[#allocation5 + $0x358] sm:$0xff]
    %v281 = vld [vmem:[#allocation5 + $0x360] sm:$0xff]
    %v282 = vld [vmem:[#allocation5 + $0x368] sm:$0xff]
    %v283 = vld [vmem:[#allocation5 + $0x370] sm:$0xff]
    %v284 = vld [vmem:[#allocation5 + $0x378] sm:$0xff]
    %v285 = vld [vmem:[#allocation5 + $0x380] sm:$0xff]
    %v286 = vld [vmem:[#allocation5 + $0x388] sm:$0xff]
    %v287 = vld [vmem:[#allocation5 + $0x390] sm:$0xff]
    %v288 = vld [vmem:[#allocation5 + $0x398] sm:$0xff]
    %v289 = vld [vmem:[#allocation5 + $0x3a0] sm:$0xff]
    %v290 = vld [vmem:[#allocation5 + $0x3a8] sm:$0xff]
    %v291 = vld [vmem:[#allocation5 + $0x3b0] sm:$0xff]
    %v292 = vld [vmem:[#allocation5 + $0x3b8] sm:$0xff]
    %v293 = vld [vmem:[#allocation5 + $0x3c0] sm:$0xff]
    %v294 = vld [vmem:[#allocation5 + $0x3c8] sm:$0xff]
    %v295 = vld [vmem:[#allocation5 + $0x3d0] sm:$0xff]
    %v296 = vld [vmem:[#allocation5 + $0x3d8] sm:$0xff]
    %v297 = vld [vmem:[#allocation5 + $0x3e0] sm:$0xff]
    %v298 = vld [vmem:[#allocation5 + $0x3e8] sm:$0xff]
    %v299 = vld [vmem:[#allocation5 + $0x3f0] sm:$0xff]
    %v300 = vld [vmem:[#allocation5 + $0x3f8] sm:$0xff]
    %v301 = vld [vmem:[#allocation5 + $0x400] sm:$0xff]
    %v302 = vld [vmem:[#allocation5 + $0x408] sm:$0xff]
    %v303 = vld [vmem:[#allocation5 + $0x410] sm:$0xff]
    %v304 = vld [vmem:[#allocation5 + $0x418] sm:$0xff]
    %v305 = vld [vmem:[#allocation5 + $0x420] sm:$0xff]
    %v306 = vld [vmem:[#allocation5 + $0x428] sm:$0xff]
    %v307 = vld [vmem:[#allocation5 + $0x430] sm:$0xff]
    %v308 = vld [vmem:[#allocation5 + $0x438] sm:$0xff]
    %v309 = vld [vmem:[#allocation5 + $0x440] sm:$0xff]
    %v310 = vld [vmem:[#allocation5 + $0x448] sm:$0xff]
    %v311 = vld [vmem:[#allocation5 + $0x450] sm:$0xff]
    %v312 = vld [vmem:[#allocation5 + $0x458] sm:$0xff]
    %v313 = vld [vmem:[#allocation5 + $0x460] sm:$0xff]
    %v314 = vld [vmem:[#allocation5 + $0x468] sm:$0xff]
    %v315 = vld [vmem:[#allocation5 + $0x470] sm:$0xff]
    %v316 = vld [vmem:[#allocation5 + $0x478] sm:$0xff]
    %v317 = vld [vmem:[#allocation5 + $0x480] sm:$0xff]
    %v318 = vld [vmem:[#allocation5 + $0x488] sm:$0xff]
    %v319 = vld [vmem:[#allocation5 + $0x490] sm:$0xff]
    %v320 = vld [vmem:[#allocation5 + $0x498] sm:$0xff]
    %v321 = vld [vmem:[#allocation5 + $0x4a0] sm:$0xff]
    %v322 = vld [vmem:[#allocation5 + $0x4a8] sm:$0xff]
    %v323 = vld [vmem:[#allocation5 + $0x4b0] sm:$0xff]
    %v324 = vld [vmem:[#allocation5 + $0x4b8] sm:$0xff]
    %v325 = vld [vmem:[#allocation5 + $0x4c0] sm:$0xff]
    %v326 = vld [vmem:[#allocation5 + $0x4c8] sm:$0xff]
    %v327 = vld [vmem:[#allocation5 + $0x4d0] sm:$0xff]
    %v328 = vld [vmem:[#allocation5 + $0x4d8] sm:$0xff]
    %v329 = vld [vmem:[#allocation5 + $0x4e0] sm:$0xff]
    %v330 = vld [vmem:[#allocation5 + $0x4e8] sm:$0xff]
    %v331 = vld [vmem:[#allocation5 + $0x4f0] sm:$0xff]
    %v332 = vld [vmem:[#allocation5 + $0x4f8] sm:$0xff]
    %v333 = vld [vmem:[#allocation5 + $0x500] sm:$0xff]
    %v334 = vld [vmem:[#allocation5 + $0x508] sm:$0xff]
    %v335 = vld [vmem:[#allocation5 + $0x510] sm:$0xff]
    %v336 = vld [vmem:[#allocation5 + $0x518] sm:$0xff]
    %v337 = vld [vmem:[#allocation5 + $0x520] sm:$0xff]
    %v338 = vld [vmem:[#allocation5 + $0x528] sm:$0xff]
    %v339 = vld [vmem:[#allocation5 + $0x530] sm:$0xff]
    %v340 = vld [vmem:[#allocation5 + $0x538] sm:$0xff]
    %v341 = vld [vmem:[#allocation5 + $0x540] sm:$0xff]
    %v342 = vld [vmem:[#allocation5 + $0x548] sm:$0xff]
    %v343 = vld [vmem:[#allocation5 + $0x550] sm:$0xff]
    %v344 = vld [vmem:[#allocation5 + $0x558] sm:$0xff]
    %v345 = vld [vmem:[#allocation5 + $0x560] sm:$0xff]
    %v346 = vld [vmem:[#allocation5 + $0x568] sm:$0xff]
    %v347 = vld [vmem:[#allocation5 + $0x570] sm:$0xff]
    %v348 = vld [vmem:[#allocation5 + $0x578] sm:$0xff]
    %v349 = vld [vmem:[#allocation5 + $0x580] sm:$0xff]
    %v350 = vld [vmem:[#allocation5 + $0x588] sm:$0xff]
    %v351 = vld [vmem:[#allocation5 + $0x590] sm:$0xff]
    %v352 = vld [vmem:[#allocation5 + $0x598] sm:$0xff]
    %v353 = vld [vmem:[#allocation5 + $0x5a0] sm:$0xff]
    %v354 = vld [vmem:[#allocation5 + $0x5a8] sm:$0xff]
    %v355 = vld [vmem:[#allocation5 + $0x5b0] sm:$0xff]
    %v356 = vld [vmem:[#allocation5 + $0x5b8] sm:$0xff]
    %v357 = vld [vmem:[#allocation5 + $0x5c0] sm:$0xff]
    %v358 = vld [vmem:[#allocation5 + $0x5c8] sm:$0xff]
    %v359 = vld [vmem:[#allocation5 + $0x5d0] sm:$0xff]
    %v360 = vld [vmem:[#allocation5 + $0x5d8] sm:$0xff]
    %v361 = vld [vmem:[#allocation5 + $0x5e0] sm:$0xff]
    %v362 = vld [vmem:[#allocation5 + $0x5e8] sm:$0xff]
    %v363 = vld [vmem:[#allocation5 + $0x5f0] sm:$0xff]
    %v364 = vld [vmem:[#allocation5 + $0x5f8] sm:$0xff]
    %v365 = vld [vmem:[#allocation5 + $0x600] sm:$0xff]
    %v366 = vld [vmem:[#allocation5 + $0x608] sm:$0xff]
    %v367 = vld [vmem:[#allocation5 + $0x610] sm:$0xff]
    %v368 = vld [vmem:[#allocation5 + $0x618] sm:$0xff]
    %v369 = vld [vmem:[#allocation5 + $0x620] sm:$0xff]
    %v370 = vld [vmem:[#allocation5 + $0x628] sm:$0xff]
    %v371 = vld [vmem:[#allocation5 + $0x630] sm:$0xff]
    %v372 = vld [vmem:[#allocation5 + $0x638] sm:$0xff]
    %v373 = vld [vmem:[#allocation5 + $0x640] sm:$0xff]
    %v374 = vld [vmem:[#allocation5 + $0x648] sm:$0xff]
    %v375 = vld [vmem:[#allocation5 + $0x650] sm:$0xff]
    %v376 = vld [vmem:[#allocation5 + $0x658] sm:$0xff]
    %v377 = vld [vmem:[#allocation5 + $0x660] sm:$0xff]
    %v378 = vld [vmem:[#allocation5 + $0x668] sm:$0xff]
    %v379 = vld [vmem:[#allocation5 + $0x670] sm:$0xff]
    %v380 = vld [vmem:[#allocation5 + $0x678] sm:$0xff]
    %v381 = vld [vmem:[#allocation5 + $0x680] sm:$0xff]
    %v382 = vld [vmem:[#allocation5 + $0x688] sm:$0xff]
    %v383 = vld [vmem:[#allocation5 + $0x690] sm:$0xff]
    %v384 = vld [vmem:[#allocation5 + $0x698] sm:$0xff]
    %v385 = vld [vmem:[#allocation5 + $0x6a0] sm:$0xff]
    %v386 = vld [vmem:[#allocation5 + $0x6a8] sm:$0xff]
    %v387 = vld [vmem:[#allocation5 + $0x6b0] sm:$0xff]
    %v388 = vld [vmem:[#allocation5 + $0x6b8] sm:$0xff]
    %v389 = vld [vmem:[#allocation5 + $0x6c0] sm:$0xff]
    %v390 = vld [vmem:[#allocation5 + $0x6c8] sm:$0xff]
    %v391 = vld [vmem:[#allocation5 + $0x6d0] sm:$0xff]
    %v392 = vld [vmem:[#allocation5 + $0x6d8] sm:$0xff]
    %v393 = vld [vmem:[#allocation5 + $0x6e0] sm:$0xff]
    %v394 = vld [vmem:[#allocation5 + $0x6e8] sm:$0xff]
    %v395 = vld [vmem:[#allocation5 + $0x6f0] sm:$0xff]
    %v396 = vld [vmem:[#allocation5 + $0x6f8] sm:$0xff]
    %v397 = vld [vmem:[#allocation5 + $0x700] sm:$0xff]
    %v398 = vld [vmem:[#allocation5 + $0x708] sm:$0xff]
    %v399 = vld [vmem:[#allocation5 + $0x710] sm:$0xff]
    %v400 = vld [vmem:[#allocation5 + $0x718] sm:$0xff]
    %v401 = vld [vmem:[#allocation5 + $0x720] sm:$0xff]
    %v402 = vld [vmem:[#allocation5 + $0x728] sm:$0xff]
    %v403 = vld [vmem:[#allocation5 + $0x730] sm:$0xff]
    %v404 = vld [vmem:[#allocation5 + $0x738] sm:$0xff]
    %v405 = vld [vmem:[#allocation5 + $0x740] sm:$0xff]
    %v406 = vld [vmem:[#allocation5 + $0x748] sm:$0xff]
    %v407 = vld [vmem:[#allocation5 + $0x750] sm:$0xff]
    %v408 = vld [vmem:[#allocation5 + $0x758] sm:$0xff]
    %v409 = vld [vmem:[#allocation5 + $0x760] sm:$0xff]
    %v410 = vld [vmem:[#allocation5 + $0x768] sm:$0xff]
    %v411 = vld [vmem:[#allocation5 + $0x770] sm:$0xff]
    %v412 = vld [vmem:[#allocation5 + $0x778] sm:$0xff]
    %v413 = vld [vmem:[#allocation5 + $0x780] sm:$0xff]
    %v414 = vld [vmem:[#allocation5 + $0x788] sm:$0xff]
    %v415 = vld [vmem:[#allocation5 + $0x790] sm:$0xff]
    %v416 = vld [vmem:[#allocation5 + $0x798] sm:$0xff]
    %v417 = vld [vmem:[#allocation5 + $0x7a0] sm:$0xff]
    %v418 = vld [vmem:[#allocation5 + $0x7a8] sm:$0xff]
    %v419 = vld [vmem:[#allocation5 + $0x7b0] sm:$0xff]
    %v420 = vld [vmem:[#allocation5 + $0x7b8] sm:$0xff]
    %v421 = vld [vmem:[#allocation5 + $0x7c0] sm:$0xff]
    %v422 = vld [vmem:[#allocation5 + $0x7c8] sm:$0xff]
    %v423 = vld [vmem:[#allocation5 + $0x7d0] sm:$0xff]
    %v424 = vld [vmem:[#allocation5 + $0x7d8] sm:$0xff]
    %v425 = vld [vmem:[#allocation5 + $0x7e0] sm:$0xff]
    %v426 = vld [vmem:[#allocation5 + $0x7e8] sm:$0xff]
    %v427 = vld [vmem:[#allocation5 + $0x7f0] sm:$0xff]
    %v428 = vld [vmem:[#allocation5 + $0x7f8] sm:$0xff]
    %v429 = vld [vmem:[#allocation5 + $0x800] sm:$0xff]
    %v430 = vld [vmem:[#allocation5 + $0x808] sm:$0xff]
    %v431 = vld [vmem:[#allocation5 + $0x810] sm:$0xff]
    %v432 = vld [vmem:[#allocation5 + $0x818] sm:$0xff]
    %v433 = vld [vmem:[#allocation5 + $0x820] sm:$0xff]
    %v434 = vld [vmem:[#allocation5 + $0x828] sm:$0xff]
    %v435 = vld [vmem:[#allocation5 + $0x830] sm:$0xff]
    %v436 = vld [vmem:[#allocation5 + $0x838] sm:$0xff]
    %v437 = vld [vmem:[#allocation5 + $0x840] sm:$0xff]
    %v438 = vld [vmem:[#allocation5 + $0x848] sm:$0xff]
    %v439 = vld [vmem:[#allocation5 + $0x850] sm:$0xff]
    %v440 = vld [vmem:[#allocation5 + $0x858] sm:$0xff]
    %v441 = vld [vmem:[#allocation5 + $0x860] sm:$0xff]
    %v442 = vld [vmem:[#allocation5 + $0x868] sm:$0xff]
    %v443 = vld [vmem:[#allocation5 + $0x870] sm:$0xff]
    %v444 = vld [vmem:[#allocation5 + $0x878] sm:$0xff]
    %v445 = vld [vmem:[#allocation5 + $0x880] sm:$0xff]
    %v446 = vld [vmem:[#allocation5 + $0x888] sm:$0xff]
    %v447 = vld [vmem:[#allocation5 + $0x890] sm:$0xff]
    %v448 = vld [vmem:[#allocation5 + $0x898] sm:$0xff]
    %v449 = vld [vmem:[#allocation5 + $0x8a0] sm:$0xff]
    %v450 = vld [vmem:[#allocation5 + $0x8a8] sm:$0xff]
    %v451 = vld [vmem:[#allocation5 + $0x8b0] sm:$0xff]
    %v452 = vld [vmem:[#allocation5 + $0x8b8] sm:$0xff]
    %v453 = vld [vmem:[#allocation5 + $0x8c0] sm:$0xff]
    %v454 = vld [vmem:[#allocation5 + $0x8c8] sm:$0xff]
    %v455 = vld [vmem:[#allocation5 + $0x8d0] sm:$0xff]
    %v456 = vld [vmem:[#allocation5 + $0x8d8] sm:$0xff]
    %v457 = vld [vmem:[#allocation5 + $0x8e0] sm:$0xff]
    %v458 = vld [vmem:[#allocation5 + $0x8e8] sm:$0xff]
    %v459 = vld [vmem:[#allocation5 + $0x8f0] sm:$0xff]
    %v460 = vld [vmem:[#allocation5 + $0x8f8] sm:$0xff]
    %v461 = vld [vmem:[#allocation5 + $0x900] sm:$0xff]
    %v462 = vld [vmem:[#allocation5 + $0x908] sm:$0xff]
    %v463 = vld [vmem:[#allocation5 + $0x910] sm:$0xff]
    %v464 = vld [vmem:[#allocation5 + $0x918] sm:$0xff]
    %v465 = vld [vmem:[#allocation5 + $0x920] sm:$0xff]
    %v466 = vld [vmem:[#allocation5 + $0x928] sm:$0xff]
    %v467 = vld [vmem:[#allocation5 + $0x930] sm:$0xff]
    %v468 = vld [vmem:[#allocation5 + $0x938] sm:$0xff]
    %v469 = vld [vmem:[#allocation5 + $0x940] sm:$0xff]
    %v470 = vld [vmem:[#allocation5 + $0x948] sm:$0xff]
    %v471 = vld [vmem:[#allocation5 + $0x950] sm:$0xff]
    %v472 = vld [vmem:[#allocation5 + $0x958] sm:$0xff]
    %v473 = vld [vmem:[#allocation5 + $0x960] sm:$0xff]
    %v474 = vld [vmem:[#allocation5 + $0x968] sm:$0xff]
    %v475 = vld [vmem:[#allocation5 + $0x970] sm:$0xff]
    %v476 = vld [vmem:[#allocation5 + $0x978] sm:$0xff]
    %v477 = vld [vmem:[#allocation5 + $0x980] sm:$0xff]
    %v478 = vld [vmem:[#allocation5 + $0x988] sm:$0xff]
    %v479 = vld [vmem:[#allocation5 + $0x990] sm:$0xff]
    %v480 = vld [vmem:[#allocation5 + $0x998] sm:$0xff]
    %v481 = vld [vmem:[#allocation5 + $0x9a0] sm:$0xff]
    %v482 = vld [vmem:[#allocation5 + $0x9a8] sm:$0xff]
    %v483 = vld [vmem:[#allocation5 + $0x9b0] sm:$0xff]
    %v484 = vld [vmem:[#allocation5 + $0x9b8] sm:$0xff]
    %v485 = vld [vmem:[#allocation5 + $0x9c0] sm:$0xff]
    %v486 = vld [vmem:[#allocation5 + $0x9c8] sm:$0xff]
    %v487 = vld [vmem:[#allocation5 + $0x9d0] sm:$0xff]
    %v488 = vld [vmem:[#allocation5 + $0x9d8] sm:$0xff]
    %v489 = vld [vmem:[#allocation5 + $0x9e0] sm:$0xff]
    %v490 = vld [vmem:[#allocation5 + $0x9e8] sm:$0xff]
    %v491 = vld [vmem:[#allocation5 + $0x9f0] sm:$0xff]
    %v492 = vld [vmem:[#allocation5 + $0x9f8] sm:$0xff]
    %v493 = vld [vmem:[#allocation5 + $0xa00] sm:$0xff]
    %v494 = vld [vmem:[#allocation5 + $0xa08] sm:$0xff]
    %v495 = vld [vmem:[#allocation5 + $0xa10] sm:$0xff]
    %v496 = vld [vmem:[#allocation5 + $0xa18] sm:$0xff]
    %v497 = vld [vmem:[#allocation5 + $0xa20] sm:$0xff]
    %v498 = vld [vmem:[#allocation5 + $0xa28] sm:$0xff]
    %v499 = vld [vmem:[#allocation5 + $0xa30] sm:$0xff]
    %v500 = vld [vmem:[#allocation5 + $0xa38] sm:$0xff]
    %v501 = vld [vmem:[#allocation5 + $0xa40] sm:$0xff]
    %v502 = vld [vmem:[#allocation5 + $0xa48] sm:$0xff]
    %v503 = vld [vmem:[#allocation5 + $0xa50] sm:$0xff]
    %v504 = vld [vmem:[#allocation5 + $0xa58] sm:$0xff]
    %v505 = vld [vmem:[#allocation5 + $0xa60] sm:$0xff]
    %v506 = vld [vmem:[#allocation5 + $0xa68] sm:$0xff]
    %v507 = vld [vmem:[#allocation5 + $0xa70] sm:$0xff]
    %v508 = vld [vmem:[#allocation5 + $0xa78] sm:$0xff]
    %v509 = vld [vmem:[#allocation5 + $0xa80] sm:$0xff]
    %v510 = vld [vmem:[#allocation5 + $0xa88] sm:$0xff]
    %v511 = vld [vmem:[#allocation5 + $0xa90] sm:$0xff]
    %v512 = vld [vmem:[#allocation5 + $0xa98] sm:$0xff]
    %v513 = vld [vmem:[#allocation5 + $0xaa0] sm:$0xff]
    %v514 = vld [vmem:[#allocation5 + $0xaa8] sm:$0xff]
    %v515 = vld [vmem:[#allocation5 + $0xab0] sm:$0xff]
    %v516 = vld [vmem:[#allocation5 + $0xab8] sm:$0xff]
    %v517 = vld [vmem:[#allocation5 + $0xac0] sm:$0xff]
    %v518 = vld [vmem:[#allocation5 + $0xac8] sm:$0xff]
    %v519 = vld [vmem:[#allocation5 + $0xad0] sm:$0xff]
    %v520 = vld [vmem:[#allocation5 + $0xad8] sm:$0xff]
    %v521 = vld [vmem:[#allocation5 + $0xae0] sm:$0xff]
    %v522 = vld [vmem:[#allocation5 + $0xae8] sm:$0xff]
    %v523 = vld [vmem:[#allocation5 + $0xaf0] sm:$0xff]
    %v524 = vld [vmem:[#allocation5 + $0xaf8] sm:$0xff]
    %v525 = vld [vmem:[#allocation5 + $0xb00] sm:$0xff]
    %v526 = vld [vmem:[#allocation5 + $0xb08] sm:$0xff]
    %v527 = vld [vmem:[#allocation5 + $0xb10] sm:$0xff]
    %v528 = vld [vmem:[#allocation5 + $0xb18] sm:$0xff]
    %v529 = vld [vmem:[#allocation5 + $0xb20] sm:$0xff]
    %v530 = vld [vmem:[#allocation5 + $0xb28] sm:$0xff]
    %v531 = vld [vmem:[#allocation5 + $0xb30] sm:$0xff]
    %v532 = vld [vmem:[#allocation5 + $0xb38] sm:$0xff]
    %v533 = vld [vmem:[#allocation5 + $0xb40] sm:$0xff]
    %v534 = vld [vmem:[#allocation5 + $0xb48] sm:$0xff]
    %v535 = vld [vmem:[#allocation5 + $0xb50] sm:$0xff]
    %v536 = vld [vmem:[#allocation5 + $0xb58] sm:$0xff]
    %v537 = vld [vmem:[#allocation5 + $0xb60] sm:$0xff]
    %v538 = vld [vmem:[#allocation5 + $0xb68] sm:$0xff]
    %v539 = vld [vmem:[#allocation5 + $0xb70] sm:$0xff]
    %v540 = vld [vmem:[#allocation5 + $0xb78] sm:$0xff]
    %v541 = vld [vmem:[#allocation5 + $0xb80] sm:$0xff]
    %v542 = vld [vmem:[#allocation5 + $0xb88] sm:$0xff]
    %v543 = vld [vmem:[#allocation5 + $0xb90] sm:$0xff]
    %v544 = vld [vmem:[#allocation5 + $0xb98] sm:$0xff]
    %v545 = vld [vmem:[#allocation5 + $0xba0] sm:$0xff]
    %v546 = vld [vmem:[#allocation5 + $0xba8] sm:$0xff]
    %v547 = vld [vmem:[#allocation5 + $0xbb0] sm:$0xff]
    %v548 = vld [vmem:[#allocation5 + $0xbb8] sm:$0xff]
    %v549 = vld [vmem:[#allocation5 + $0xbc0] sm:$0xff]
    %v550 = vld [vmem:[#allocation5 + $0xbc8] sm:$0xff]
    %v551 = vld [vmem:[#allocation5 + $0xbd0] sm:$0xff]
    %v552 = vld [vmem:[#allocation5 + $0xbd8] sm:$0xff]
    %v553 = vld [vmem:[#allocation5 + $0xbe0] sm:$0xff]
    %v554 = vld [vmem:[#allocation5 + $0xbe8] sm:$0xff]
    %v555 = vld [vmem:[#allocation5 + $0xbf0] sm:$0xff]
    %v556 = vld [vmem:[#allocation5 + $0xbf8] sm:$0xff]
    %v557 = vld [vmem:[#allocation5 + $0xc00] sm:$0xff]
    %v558 = vld [vmem:[#allocation5 + $0xc08] sm:$0xff]
    %v559 = vld [vmem:[#allocation5 + $0xc10] sm:$0xff]
    %v560 = vld [vmem:[#allocation5 + $0xc18] sm:$0xff]
    %v561 = vld [vmem:[#allocation5 + $0xc20] sm:$0xff]
    %v562 = vld [vmem:[#allocation5 + $0xc28] sm:$0xff]
    %v563 = vld [vmem:[#allocation5 + $0xc30] sm:$0xff]
    %v564 = vld [vmem:[#allocation5 + $0xc38] sm:$0xff]
    %v565 = vld [vmem:[#allocation5 + $0xc40] sm:$0xff]
    %v566 = vld [vmem:[#allocation5 + $0xc48] sm:$0xff]
    %v567 = vld [vmem:[#allocation5 + $0xc50] sm:$0xff]
    %v568 = vld [vmem:[#allocation5 + $0xc58] sm:$0xff]
    %v569 = vld [vmem:[#allocation5 + $0xc60] sm:$0xff]
    %v570 = vld [vmem:[#allocation5 + $0xc68] sm:$0xff]
    %v571 = vld [vmem:[#allocation5 + $0xc70] sm:$0xff]
    %v572 = vld [vmem:[#allocation5 + $0xc78] sm:$0xff]
    %v573 = vld [vmem:[#allocation5 + $0xc80] sm:$0xff]
    %v574 = vld [vmem:[#allocation5 + $0xc88] sm:$0xff]
    %v575 = vld [vmem:[#allocation5 + $0xc90] sm:$0xff]
    %v576 = vld [vmem:[#allocation5 + $0xc98] sm:$0xff]
    %v577 = vld [vmem:[#allocation5 + $0xca0] sm:$0xff]
    %v578 = vld [vmem:[#allocation5 + $0xca8] sm:$0xff]
    %v579 = vld [vmem:[#allocation5 + $0xcb0] sm:$0xff]
    %v580 = vld [vmem:[#allocation5 + $0xcb8] sm:$0xff]
    %v581 = vld [vmem:[#allocation5 + $0xcc0] sm:$0xff]
    %v582 = vld [vmem:[#allocation5 + $0xcc8] sm:$0xff]
    %v583 = vld [vmem:[#allocation5 + $0xcd0] sm:$0xff]
    %v584 = vld [vmem:[#allocation5 + $0xcd8] sm:$0xff]
    %v585 = vld [vmem:[#allocation5 + $0xce0] sm:$0xff]
    %v586 = vld [vmem:[#allocation5 + $0xce8] sm:$0xff]
    %v587 = vld [vmem:[#allocation5 + $0xcf0] sm:$0xff]
    %v588 = vld [vmem:[#allocation5 + $0xcf8] sm:$0xff]
    %v589 = vld [vmem:[#allocation5 + $0xd00] sm:$0xff]
    %v590 = vld [vmem:[#allocation5 + $0xd08] sm:$0xff]
    %v591 = vld [vmem:[#allocation5 + $0xd10] sm:$0xff]
    %v592 = vld [vmem:[#allocation5 + $0xd18] sm:$0xff]
    %v593 = vld [vmem:[#allocation5 + $0xd20] sm:$0xff]
    %v594 = vld [vmem:[#allocation5 + $0xd28] sm:$0xff]
    %v595 = vld [vmem:[#allocation5 + $0xd30] sm:$0xff]
    %v596 = vld [vmem:[#allocation5 + $0xd38] sm:$0xff]
    %v597 = vld [vmem:[#allocation5 + $0xd40] sm:$0xff]
    %v598 = vld [vmem:[#allocation5 + $0xd48] sm:$0xff]
    %v599 = vld [vmem:[#allocation5 + $0xd50] sm:$0xff]
    %v600 = vld [vmem:[#allocation5 + $0xd58] sm:$0xff]
    %v601 = vld [vmem:[#allocation5 + $0xd60] sm:$0xff]
    %v602 = vld [vmem:[#allocation5 + $0xd68] sm:$0xff]
    %v603 = vld [vmem:[#allocation5 + $0xd70] sm:$0xff]
    %v604 = vld [vmem:[#allocation5 + $0xd78] sm:$0xff]
    %v605 = vld [vmem:[#allocation5 + $0xd80] sm:$0xff]
    %v606 = vld [vmem:[#allocation5 + $0xd88] sm:$0xff]
    %v607 = vld [vmem:[#allocation5 + $0xd90] sm:$0xff]
    %v608 = vld [vmem:[#allocation5 + $0xd98] sm:$0xff]
    %v609 = vld [vmem:[#allocation5 + $0xda0] sm:$0xff]
    %v610 = vld [vmem:[#allocation5 + $0xda8] sm:$0xff]
    %v611 = vld [vmem:[#allocation5 + $0xdb0] sm:$0xff]
    %v612 = vld [vmem:[#allocation5 + $0xdb8] sm:$0xff]
    %v613 = vld [vmem:[#allocation5 + $0xdc0] sm:$0xff]
    %v614 = vld [vmem:[#allocation5 + $0xdc8] sm:$0xff]
    %v615 = vld [vmem:[#allocation5 + $0xdd0] sm:$0xff]
    %v616 = vld [vmem:[#allocation5 + $0xdd8] sm:$0xff]
    %v617 = vld [vmem:[#allocation5 + $0xde0] sm:$0xff]
    %v618 = vld [vmem:[#allocation5 + $0xde8] sm:$0xff]
    %v619 = vld [vmem:[#allocation5 + $0xdf0] sm:$0xff]
    %v620 = vld [vmem:[#allocation5 + $0xdf8] sm:$0xff]
    %v621 = vld [vmem:[#allocation5 + $0xe00] sm:$0xff]
    %v622 = vld [vmem:[#allocation5 + $0xe08] sm:$0xff]
    %v623 = vld [vmem:[#allocation5 + $0xe10] sm:$0xff]
    %v624 = vld [vmem:[#allocation5 + $0xe18] sm:$0xff]
    %v625 = vld [vmem:[#allocation5 + $0xe20] sm:$0xff]
    %v626 = vld [vmem:[#allocation5 + $0xe28] sm:$0xff]
    %v627 = vld [vmem:[#allocation5 + $0xe30] sm:$0xff]
    %v628 = vld [vmem:[#allocation5 + $0xe38] sm:$0xff]
    %v629 = vld [vmem:[#allocation5 + $0xe40] sm:$0xff]
    %v630 = vld [vmem:[#allocation5 + $0xe48] sm:$0xff]
    %v631 = vld [vmem:[#allocation5 + $0xe50] sm:$0xff]
    %v632 = vld [vmem:[#allocation5 + $0xe58] sm:$0xff]
    %v633 = vld [vmem:[#allocation5 + $0xe60] sm:$0xff]
    %v634 = vld [vmem:[#allocation5 + $0xe68] sm:$0xff]
    %v635 = vld [vmem:[#allocation5 + $0xe70] sm:$0xff]
    %v636 = vld [vmem:[#allocation5 + $0xe78] sm:$0xff]
    %v637 = vld [vmem:[#allocation5 + $0xe80] sm:$0xff]
    %v638 = vld [vmem:[#allocation5 + $0xe88] sm:$0xff]
    %v639 = vld [vmem:[#allocation5 + $0xe90] sm:$0xff]
    %v640 = vld [vmem:[#allocation5 + $0xe98] sm:$0xff]
    %v641 = vld [vmem:[#allocation5 + $0xea0] sm:$0xff]
    %v642 = vld [vmem:[#allocation5 + $0xea8] sm:$0xff]
    %v643 = vld [vmem:[#allocation5 + $0xeb0] sm:$0xff]
    %v644 = vld [vmem:[#allocation5 + $0xeb8] sm:$0xff]
    %v645 = vld [vmem:[#allocation5 + $0xec0] sm:$0xff]
    %v646 = vld [vmem:[#allocation5 + $0xec8] sm:$0xff]
    %v647 = vld [vmem:[#allocation5 + $0xed0] sm:$0xff]
    %v648 = vld [vmem:[#allocation5 + $0xed8] sm:$0xff]
    %v649 = vld [vmem:[#allocation5 + $0xee0] sm:$0xff]
    %v650 = vld [vmem:[#allocation5 + $0xee8] sm:$0xff]
    %v651 = vld [vmem:[#allocation5 + $0xef0] sm:$0xff]
    %v652 = vld [vmem:[#allocation5 + $0xef8] sm:$0xff]
    %v653 = vld [vmem:[#allocation5 + $0xf00] sm:$0xff]
    %v654 = vld [vmem:[#allocation5 + $0xf08] sm:$0xff]
    %v655 = vld [vmem:[#allocation5 + $0xf10] sm:$0xff]
    %v656 = vld [vmem:[#allocation5 + $0xf18] sm:$0xff]
    %v657 = vld [vmem:[#allocation5 + $0xf20] sm:$0xff]
    %v658 = vld [vmem:[#allocation5 + $0xf28] sm:$0xff]
    %v659 = vld [vmem:[#allocation5 + $0xf30] sm:$0xff]
    %v660 = vld [vmem:[#allocation5 + $0xf38] sm:$0xff]
    %v661 = vld [vmem:[#allocation5 + $0xf40] sm:$0xff]
    %v662 = vld [vmem:[#allocation5 + $0xf48] sm:$0xff]
    %v663 = vld [vmem:[#allocation5 + $0xf50] sm:$0xff]
    %v664 = vld [vmem:[#allocation5 + $0xf58] sm:$0xff]
    %v665 = vld [vmem:[#allocation5 + $0xf60] sm:$0xff]
    %v666 = vld [vmem:[#allocation5 + $0xf68] sm:$0xff]
    %v667 = vld [vmem:[#allocation5 + $0xf70] sm:$0xff]
    %v668 = vld [vmem:[#allocation5 + $0xf78] sm:$0xff]
    %v669 = vld [vmem:[#allocation5 + $0xf80] sm:$0xff]
    %v670 = vld [vmem:[#allocation5 + $0xf88] sm:$0xff]
    %v671 = vld [vmem:[#allocation5 + $0xf90] sm:$0xff]
    %v672 = vld [vmem:[#allocation5 + $0xf98] sm:$0xff]
    %v673 = vld [vmem:[#allocation5 + $0xfa0] sm:$0xff]
    %v674 = vld [vmem:[#allocation5 + $0xfa8] sm:$0xff]
    %v675 = vld [vmem:[#allocation5 + $0xfb0] sm:$0xff]
    %v676 = vld [vmem:[#allocation5 + $0xfb8] sm:$0xff]
    %v677 = vld [vmem:[#allocation5 + $0xfc0] sm:$0xff]
    %v678 = vld [vmem:[#allocation5 + $0xfc8] sm:$0xff]
    %v679 = vld [vmem:[#allocation5 + $0xfd0] sm:$0xff]
    %v680 = vld [vmem:[#allocation5 + $0xfd8] sm:$0xff]
    %v681 = vld [vmem:[#allocation5 + $0xfe0] sm:$0xff]
    %v682 = vld [vmem:[#allocation5 + $0xfe8] sm:$0xff]
    %v683 = vld [vmem:[#allocation5 + $0xff0] sm:$0xff]
    %v684 = vld [vmem:[#allocation5 + $0xff8] sm:$0xff]
    %v685 = vld [vmem:[#allocation7] sm:$0xf]
    %v687 = vperm.slane %v685, 0
    %v688 = vperm.slane %v685, 1
    %v689 = vperm.slane %v685, 2
    %v690 = vperm.slane %v685, 3
    %v1207 = vunpack.c.l.b16 %v173
    %v1208 = vunpack.c.h.b16 %v173
    %v1209 = vunpack.c.l.b16 %v174
    %v1210 = vunpack.c.h.b16 %v174
    %v1211 = vunpack.c.l.b16 %v175
    %v1212 = vunpack.c.h.b16 %v175
    %v1213 = vunpack.c.l.b16 %v176
    %v1214 = vunpack.c.h.b16 %v176
    %v1215 = vunpack.c.l.b16 %v177
    %v1216 = vunpack.c.h.b16 %v177
    %v1217 = vunpack.c.l.b16 %v178
    %v1218 = vunpack.c.h.b16 %v178
    %v1219 = vunpack.c.l.b16 %v179
    %v1220 = vunpack.c.h.b16 %v179
    %v1221 = vunpack.c.l.b16 %v180
    %v1222 = vunpack.c.h.b16 %v180
    %v1223 = vunpack.c.l.b16 %v181
    %v1224 = vunpack.c.h.b16 %v181
    %v1225 = vunpack.c.l.b16 %v182
    %v1226 = vunpack.c.h.b16 %v182
    %v1227 = vunpack.c.l.b16 %v183
    %v1228 = vunpack.c.h.b16 %v183
    %v1229 = vunpack.c.l.b16 %v184
    %v1230 = vunpack.c.h.b16 %v184
    %v1231 = vunpack.c.l.b16 %v185
    %v1232 = vunpack.c.h.b16 %v185
    %v1233 = vunpack.c.l.b16 %v186
    %v1234 = vunpack.c.h.b16 %v186
    %v1235 = vunpack.c.l.b16 %v187
    %v1236 = vunpack.c.h.b16 %v187
    %v1237 = vunpack.c.l.b16 %v188
    %v1238 = vunpack.c.h.b16 %v188
    %v1239 = vunpack.c.l.b16 %v189
    %v1240 = vunpack.c.h.b16 %v189
    %v1241 = vunpack.c.l.b16 %v190
    %v1242 = vunpack.c.h.b16 %v190
    %v1243 = vunpack.c.l.b16 %v191
    %v1244 = vunpack.c.h.b16 %v191
    %v1245 = vunpack.c.l.b16 %v192
    %v1246 = vunpack.c.h.b16 %v192
    %v1247 = vunpack.c.l.b16 %v193
    %v1248 = vunpack.c.h.b16 %v193
    %v1249 = vunpack.c.l.b16 %v194
    %v1250 = vunpack.c.h.b16 %v194
    %v1251 = vunpack.c.l.b16 %v195
    %v1252 = vunpack.c.h.b16 %v195
    %v1253 = vunpack.c.l.b16 %v196
    %v1254 = vunpack.c.h.b16 %v196
    %v1255 = vunpack.c.l.b16 %v197
    %v1256 = vunpack.c.h.b16 %v197
    %v1257 = vunpack.c.l.b16 %v198
    %v1258 = vunpack.c.h.b16 %v198
    %v1259 = vunpack.c.l.b16 %v199
    %v1260 = vunpack.c.h.b16 %v199
    %v1261 = vunpack.c.l.b16 %v200
    %v1262 = vunpack.c.h.b16 %v200
    %v1263 = vunpack.c.l.b16 %v201
    %v1264 = vunpack.c.h.b16 %v201
    %v1265 = vunpack.c.l.b16 %v202
    %v1266 = vunpack.c.h.b16 %v202
    %v1267 = vunpack.c.l.b16 %v203
    %v1268 = vunpack.c.h.b16 %v203
    %v1269 = vunpack.c.l.b16 %v204
    %v1270 = vunpack.c.h.b16 %v204
    %v1271 = vunpack.c.l.b16 %v205
    %v1272 = vunpack.c.h.b16 %v205
    %v1273 = vunpack.c.l.b16 %v206
    %v1274 = vunpack.c.h.b16 %v206
    %v1275 = vunpack.c.l.b16 %v207
    %v1276 = vunpack.c.h.b16 %v207
    %v1277 = vunpack.c.l.b16 %v208
    %v1278 = vunpack.c.h.b16 %v208
    %v1279 = vunpack.c.l.b16 %v209
    %v1280 = vunpack.c.h.b16 %v209
    %v1281 = vunpack.c.l.b16 %v210
    %v1282 = vunpack.c.h.b16 %v210
    %v1283 = vunpack.c.l.b16 %v211
    %v1284 = vunpack.c.h.b16 %v211
    %v1285 = vunpack.c.l.b16 %v212
    %v1286 = vunpack.c.h.b16 %v212
    %v1287 = vunpack.c.l.b16 %v213
    %v1288 = vunpack.c.h.b16 %v213
    %v1289 = vunpack.c.l.b16 %v214
    %v1290 = vunpack.c.h.b16 %v214
    %v1291 = vunpack.c.l.b16 %v215
    %v1292 = vunpack.c.h.b16 %v215
    %v1293 = vunpack.c.l.b16 %v216
    %v1294 = vunpack.c.h.b16 %v216
    %v1295 = vunpack.c.l.b16 %v217
    %v1296 = vunpack.c.h.b16 %v217
    %v1297 = vunpack.c.l.b16 %v218
    %v1298 = vunpack.c.h.b16 %v218
    %v1299 = vunpack.c.l.b16 %v219
    %v1300 = vunpack.c.h.b16 %v219
    %v1301 = vunpack.c.l.b16 %v220
    %v1302 = vunpack.c.h.b16 %v220
    %v1303 = vunpack.c.l.b16 %v221
    %v1304 = vunpack.c.h.b16 %v221
    %v1305 = vunpack.c.l.b16 %v222
    %v1306 = vunpack.c.h.b16 %v222
    %v1307 = vunpack.c.l.b16 %v223
    %v1308 = vunpack.c.h.b16 %v223
    %v1309 = vunpack.c.l.b16 %v224
    %v1310 = vunpack.c.h.b16 %v224
    %v1311 = vunpack.c.l.b16 %v225
    %v1312 = vunpack.c.h.b16 %v225
    %v1313 = vunpack.c.l.b16 %v226
    %v1314 = vunpack.c.h.b16 %v226
    %v1315 = vunpack.c.l.b16 %v227
    %v1316 = vunpack.c.h.b16 %v227
    %v1317 = vunpack.c.l.b16 %v228
    %v1318 = vunpack.c.h.b16 %v228
    %v1319 = vunpack.c.l.b16 %v229
    %v1320 = vunpack.c.h.b16 %v229
    %v1321 = vunpack.c.l.b16 %v230
    %v1322 = vunpack.c.h.b16 %v230
    %v1323 = vunpack.c.l.b16 %v231
    %v1324 = vunpack.c.h.b16 %v231
    %v1325 = vunpack.c.l.b16 %v232
    %v1326 = vunpack.c.h.b16 %v232
    %v1327 = vunpack.c.l.b16 %v233
    %v1328 = vunpack.c.h.b16 %v233
    %v1329 = vunpack.c.l.b16 %v234
    %v1330 = vunpack.c.h.b16 %v234
    %v1331 = vunpack.c.l.b16 %v235
    %v1332 = vunpack.c.h.b16 %v235
    %v1333 = vunpack.c.l.b16 %v236
    %v1334 = vunpack.c.h.b16 %v236
    %v1335 = vunpack.c.l.b16 %v237
    %v1336 = vunpack.c.h.b16 %v237
    %v1337 = vunpack.c.l.b16 %v238
    %v1338 = vunpack.c.h.b16 %v238
    %v1339 = vunpack.c.l.b16 %v239
    %v1340 = vunpack.c.h.b16 %v239
    %v1341 = vunpack.c.l.b16 %v240
    %v1342 = vunpack.c.h.b16 %v240
    %v1343 = vunpack.c.l.b16 %v241
    %v1344 = vunpack.c.h.b16 %v241
    %v1345 = vunpack.c.l.b16 %v242
    %v1346 = vunpack.c.h.b16 %v242
    %v1347 = vunpack.c.l.b16 %v243
    %v1348 = vunpack.c.h.b16 %v243
    %v1349 = vunpack.c.l.b16 %v244
    %v1350 = vunpack.c.h.b16 %v244
    %v1351 = vunpack.c.l.b16 %v245
    %v1352 = vunpack.c.h.b16 %v245
    %v1353 = vunpack.c.l.b16 %v246
    %v1354 = vunpack.c.h.b16 %v246
    %v1355 = vunpack.c.l.b16 %v247
    %v1356 = vunpack.c.h.b16 %v247
    %v1357 = vunpack.c.l.b16 %v248
    %v1358 = vunpack.c.h.b16 %v248
    %v1359 = vunpack.c.l.b16 %v249
    %v1360 = vunpack.c.h.b16 %v249
    %v1361 = vunpack.c.l.b16 %v250
    %v1362 = vunpack.c.h.b16 %v250
    %v1363 = vunpack.c.l.b16 %v251
    %v1364 = vunpack.c.h.b16 %v251
    %v1365 = vunpack.c.l.b16 %v252
    %v1366 = vunpack.c.h.b16 %v252
    %v1367 = vunpack.c.l.b16 %v253
    %v1368 = vunpack.c.h.b16 %v253
    %v1369 = vunpack.c.l.b16 %v254
    %v1370 = vunpack.c.h.b16 %v254
    %v1371 = vunpack.c.l.b16 %v255
    %v1372 = vunpack.c.h.b16 %v255
    %v1373 = vunpack.c.l.b16 %v256
    %v1374 = vunpack.c.h.b16 %v256
    %v1375 = vunpack.c.l.b16 %v257
    %v1376 = vunpack.c.h.b16 %v257
    %v1377 = vunpack.c.l.b16 %v258
    %v1378 = vunpack.c.h.b16 %v258
    %v1379 = vunpack.c.l.b16 %v259
    %v1380 = vunpack.c.h.b16 %v259
    %v1381 = vunpack.c.l.b16 %v260
    %v1382 = vunpack.c.h.b16 %v260
    %v1383 = vunpack.c.l.b16 %v261
    %v1384 = vunpack.c.h.b16 %v261
    %v1385 = vunpack.c.l.b16 %v262
    %v1386 = vunpack.c.h.b16 %v262
    %v1387 = vunpack.c.l.b16 %v263
    %v1388 = vunpack.c.h.b16 %v263
    %v1389 = vunpack.c.l.b16 %v264
    %v1390 = vunpack.c.h.b16 %v264
    %v1391 = vunpack.c.l.b16 %v265
    %v1392 = vunpack.c.h.b16 %v265
    %v1393 = vunpack.c.l.b16 %v266
    %v1394 = vunpack.c.h.b16 %v266
    %v1395 = vunpack.c.l.b16 %v267
    %v1396 = vunpack.c.h.b16 %v267
    %v1397 = vunpack.c.l.b16 %v268
    %v1398 = vunpack.c.h.b16 %v268
    %v1399 = vunpack.c.l.b16 %v269
    %v1400 = vunpack.c.h.b16 %v269
    %v1401 = vunpack.c.l.b16 %v270
    %v1402 = vunpack.c.h.b16 %v270
    %v1403 = vunpack.c.l.b16 %v271
    %v1404 = vunpack.c.h.b16 %v271
    %v1405 = vunpack.c.l.b16 %v272
    %v1406 = vunpack.c.h.b16 %v272
    %v1407 = vunpack.c.l.b16 %v273
    %v1408 = vunpack.c.h.b16 %v273
    %v1409 = vunpack.c.l.b16 %v274
    %v1410 = vunpack.c.h.b16 %v274
    %v1411 = vunpack.c.l.b16 %v275
    %v1412 = vunpack.c.h.b16 %v275
    %v1413 = vunpack.c.l.b16 %v276
    %v1414 = vunpack.c.h.b16 %v276
    %v1415 = vunpack.c.l.b16 %v277
    %v1416 = vunpack.c.h.b16 %v277
    %v1417 = vunpack.c.l.b16 %v278
    %v1418 = vunpack.c.h.b16 %v278
    %v1419 = vunpack.c.l.b16 %v279
    %v1420 = vunpack.c.h.b16 %v279
    %v1421 = vunpack.c.l.b16 %v280
    %v1422 = vunpack.c.h.b16 %v280
    %v1423 = vunpack.c.l.b16 %v281
    %v1424 = vunpack.c.h.b16 %v281
    %v1425 = vunpack.c.l.b16 %v282
    %v1426 = vunpack.c.h.b16 %v282
    %v1427 = vunpack.c.l.b16 %v283
    %v1428 = vunpack.c.h.b16 %v283
    %v1429 = vunpack.c.l.b16 %v284
    %v1430 = vunpack.c.h.b16 %v284
    %v1431 = vunpack.c.l.b16 %v285
    %v1432 = vunpack.c.h.b16 %v285
    %v1433 = vunpack.c.l.b16 %v286
    %v1434 = vunpack.c.h.b16 %v286
    %v1435 = vunpack.c.l.b16 %v287
    %v1436 = vunpack.c.h.b16 %v287
    %v1437 = vunpack.c.l.b16 %v288
    %v1438 = vunpack.c.h.b16 %v288
    %v1439 = vunpack.c.l.b16 %v289
    %v1440 = vunpack.c.h.b16 %v289
    %v1441 = vunpack.c.l.b16 %v290
    %v1442 = vunpack.c.h.b16 %v290
    %v1443 = vunpack.c.l.b16 %v291
    %v1444 = vunpack.c.h.b16 %v291
    %v1445 = vunpack.c.l.b16 %v292
    %v1446 = vunpack.c.h.b16 %v292
    %v1447 = vunpack.c.l.b16 %v293
    %v1448 = vunpack.c.h.b16 %v293
    %v1449 = vunpack.c.l.b16 %v294
    %v1450 = vunpack.c.h.b16 %v294
    %v1451 = vunpack.c.l.b16 %v295
    %v1452 = vunpack.c.h.b16 %v295
    %v1453 = vunpack.c.l.b16 %v296
    %v1454 = vunpack.c.h.b16 %v296
    %v1455 = vunpack.c.l.b16 %v297
    %v1456 = vunpack.c.h.b16 %v297
    %v1457 = vunpack.c.l.b16 %v298
    %v1458 = vunpack.c.h.b16 %v298
    %v1459 = vunpack.c.l.b16 %v299
    %v1460 = vunpack.c.h.b16 %v299
    %v1461 = vunpack.c.l.b16 %v300
    %v1462 = vunpack.c.h.b16 %v300
    %v1463 = vunpack.c.l.b16 %v301
    %v1464 = vunpack.c.h.b16 %v301
    %v1465 = vunpack.c.l.b16 %v302
    %v1466 = vunpack.c.h.b16 %v302
    %v1467 = vunpack.c.l.b16 %v303
    %v1468 = vunpack.c.h.b16 %v303
    %v1469 = vunpack.c.l.b16 %v304
    %v1470 = vunpack.c.h.b16 %v304
    %v1471 = vunpack.c.l.b16 %v305
    %v1472 = vunpack.c.h.b16 %v305
    %v1473 = vunpack.c.l.b16 %v306
    %v1474 = vunpack.c.h.b16 %v306
    %v1475 = vunpack.c.l.b16 %v307
    %v1476 = vunpack.c.h.b16 %v307
    %v1477 = vunpack.c.l.b16 %v308
    %v1478 = vunpack.c.h.b16 %v308
    %v1479 = vunpack.c.l.b16 %v309
    %v1480 = vunpack.c.h.b16 %v309
    %v1481 = vunpack.c.l.b16 %v310
    %v1482 = vunpack.c.h.b16 %v310
    %v1483 = vunpack.c.l.b16 %v311
    %v1484 = vunpack.c.h.b16 %v311
    %v1485 = vunpack.c.l.b16 %v312
    %v1486 = vunpack.c.h.b16 %v312
    %v1487 = vunpack.c.l.b16 %v313
    %v1488 = vunpack.c.h.b16 %v313
    %v1489 = vunpack.c.l.b16 %v314
    %v1490 = vunpack.c.h.b16 %v314
    %v1491 = vunpack.c.l.b16 %v315
    %v1492 = vunpack.c.h.b16 %v315
    %v1493 = vunpack.c.l.b16 %v316
    %v1494 = vunpack.c.h.b16 %v316
    %v1495 = vunpack.c.l.b16 %v317
    %v1496 = vunpack.c.h.b16 %v317
    %v1497 = vunpack.c.l.b16 %v318
    %v1498 = vunpack.c.h.b16 %v318
    %v1499 = vunpack.c.l.b16 %v319
    %v1500 = vunpack.c.h.b16 %v319
    %v1501 = vunpack.c.l.b16 %v320
    %v1502 = vunpack.c.h.b16 %v320
    %v1503 = vunpack.c.l.b16 %v321
    %v1504 = vunpack.c.h.b16 %v321
    %v1505 = vunpack.c.l.b16 %v322
    %v1506 = vunpack.c.h.b16 %v322
    %v1507 = vunpack.c.l.b16 %v323
    %v1508 = vunpack.c.h.b16 %v323
    %v1509 = vunpack.c.l.b16 %v324
    %v1510 = vunpack.c.h.b16 %v324
    %v1511 = vunpack.c.l.b16 %v325
    %v1512 = vunpack.c.h.b16 %v325
    %v1513 = vunpack.c.l.b16 %v326
    %v1514 = vunpack.c.h.b16 %v326
    %v1515 = vunpack.c.l.b16 %v327
    %v1516 = vunpack.c.h.b16 %v327
    %v1517 = vunpack.c.l.b16 %v328
    %v1518 = vunpack.c.h.b16 %v328
    %v1519 = vunpack.c.l.b16 %v329
    %v1520 = vunpack.c.h.b16 %v329
    %v1521 = vunpack.c.l.b16 %v330
    %v1522 = vunpack.c.h.b16 %v330
    %v1523 = vunpack.c.l.b16 %v331
    %v1524 = vunpack.c.h.b16 %v331
    %v1525 = vunpack.c.l.b16 %v332
    %v1526 = vunpack.c.h.b16 %v332
    %v1527 = vunpack.c.l.b16 %v333
    %v1528 = vunpack.c.h.b16 %v333
    %v1529 = vunpack.c.l.b16 %v334
    %v1530 = vunpack.c.h.b16 %v334
    %v1531 = vunpack.c.l.b16 %v335
    %v1532 = vunpack.c.h.b16 %v335
    %v1533 = vunpack.c.l.b16 %v336
    %v1534 = vunpack.c.h.b16 %v336
    %v1535 = vunpack.c.l.b16 %v337
    %v1536 = vunpack.c.h.b16 %v337
    %v1537 = vunpack.c.l.b16 %v338
    %v1538 = vunpack.c.h.b16 %v338
    %v1539 = vunpack.c.l.b16 %v339
    %v1540 = vunpack.c.h.b16 %v339
    %v1541 = vunpack.c.l.b16 %v340
    %v1542 = vunpack.c.h.b16 %v340
    %v1543 = vunpack.c.l.b16 %v341
    %v1544 = vunpack.c.h.b16 %v341
    %v1545 = vunpack.c.l.b16 %v342
    %v1546 = vunpack.c.h.b16 %v342
    %v1547 = vunpack.c.l.b16 %v343
    %v1548 = vunpack.c.h.b16 %v343
    %v1549 = vunpack.c.l.b16 %v344
    %v1550 = vunpack.c.h.b16 %v344
    %v1551 = vunpack.c.l.b16 %v345
    %v1552 = vunpack.c.h.b16 %v345
    %v1553 = vunpack.c.l.b16 %v346
    %v1554 = vunpack.c.h.b16 %v346
    %v1555 = vunpack.c.l.b16 %v347
    %v1556 = vunpack.c.h.b16 %v347
    %v1557 = vunpack.c.l.b16 %v348
    %v1558 = vunpack.c.h.b16 %v348
    %v1559 = vunpack.c.l.b16 %v349
    %v1560 = vunpack.c.h.b16 %v349
    %v1561 = vunpack.c.l.b16 %v350
    %v1562 = vunpack.c.h.b16 %v350
    %v1563 = vunpack.c.l.b16 %v351
    %v1564 = vunpack.c.h.b16 %v351
    %v1565 = vunpack.c.l.b16 %v352
    %v1566 = vunpack.c.h.b16 %v352
    %v1567 = vunpack.c.l.b16 %v353
    %v1568 = vunpack.c.h.b16 %v353
    %v1569 = vunpack.c.l.b16 %v354
    %v1570 = vunpack.c.h.b16 %v354
    %v1571 = vunpack.c.l.b16 %v355
    %v1572 = vunpack.c.h.b16 %v355
    %v1573 = vunpack.c.l.b16 %v356
    %v1574 = vunpack.c.h.b16 %v356
    %v1575 = vunpack.c.l.b16 %v357
    %v1576 = vunpack.c.h.b16 %v357
    %v1577 = vunpack.c.l.b16 %v358
    %v1578 = vunpack.c.h.b16 %v358
    %v1579 = vunpack.c.l.b16 %v359
    %v1580 = vunpack.c.h.b16 %v359
    %v1581 = vunpack.c.l.b16 %v360
    %v1582 = vunpack.c.h.b16 %v360
    %v1583 = vunpack.c.l.b16 %v361
    %v1584 = vunpack.c.h.b16 %v361
    %v1585 = vunpack.c.l.b16 %v362
    %v1586 = vunpack.c.h.b16 %v362
    %v1587 = vunpack.c.l.b16 %v363
    %v1588 = vunpack.c.h.b16 %v363
    %v1589 = vunpack.c.l.b16 %v364
    %v1590 = vunpack.c.h.b16 %v364
    %v1591 = vunpack.c.l.b16 %v365
    %v1592 = vunpack.c.h.b16 %v365
    %v1593 = vunpack.c.l.b16 %v366
    %v1594 = vunpack.c.h.b16 %v366
    %v1595 = vunpack.c.l.b16 %v367
    %v1596 = vunpack.c.h.b16 %v367
    %v1597 = vunpack.c.l.b16 %v368
    %v1598 = vunpack.c.h.b16 %v368
    %v1599 = vunpack.c.l.b16 %v369
    %v1600 = vunpack.c.h.b16 %v369
    %v1601 = vunpack.c.l.b16 %v370
    %v1602 = vunpack.c.h.b16 %v370
    %v1603 = vunpack.c.l.b16 %v371
    %v1604 = vunpack.c.h.b16 %v371
    %v1605 = vunpack.c.l.b16 %v372
    %v1606 = vunpack.c.h.b16 %v372
    %v1607 = vunpack.c.l.b16 %v373
    %v1608 = vunpack.c.h.b16 %v373
    %v1609 = vunpack.c.l.b16 %v374
    %v1610 = vunpack.c.h.b16 %v374
    %v1611 = vunpack.c.l.b16 %v375
    %v1612 = vunpack.c.h.b16 %v375
    %v1613 = vunpack.c.l.b16 %v376
    %v1614 = vunpack.c.h.b16 %v376
    %v1615 = vunpack.c.l.b16 %v377
    %v1616 = vunpack.c.h.b16 %v377
    %v1617 = vunpack.c.l.b16 %v378
    %v1618 = vunpack.c.h.b16 %v378
    %v1619 = vunpack.c.l.b16 %v379
    %v1620 = vunpack.c.h.b16 %v379
    %v1621 = vunpack.c.l.b16 %v380
    %v1622 = vunpack.c.h.b16 %v380
    %v1623 = vunpack.c.l.b16 %v381
    %v1624 = vunpack.c.h.b16 %v381
    %v1625 = vunpack.c.l.b16 %v382
    %v1626 = vunpack.c.h.b16 %v382
    %v1627 = vunpack.c.l.b16 %v383
    %v1628 = vunpack.c.h.b16 %v383
    %v1629 = vunpack.c.l.b16 %v384
    %v1630 = vunpack.c.h.b16 %v384
    %v1631 = vunpack.c.l.b16 %v385
    %v1632 = vunpack.c.h.b16 %v385
    %v1633 = vunpack.c.l.b16 %v386
    %v1634 = vunpack.c.h.b16 %v386
    %v1635 = vunpack.c.l.b16 %v387
    %v1636 = vunpack.c.h.b16 %v387
    %v1637 = vunpack.c.l.b16 %v388
    %v1638 = vunpack.c.h.b16 %v388
    %v1639 = vunpack.c.l.b16 %v389
    %v1640 = vunpack.c.h.b16 %v389
    %v1641 = vunpack.c.l.b16 %v390
    %v1642 = vunpack.c.h.b16 %v390
    %v1643 = vunpack.c.l.b16 %v391
    %v1644 = vunpack.c.h.b16 %v391
    %v1645 = vunpack.c.l.b16 %v392
    %v1646 = vunpack.c.h.b16 %v392
    %v1647 = vunpack.c.l.b16 %v393
    %v1648 = vunpack.c.h.b16 %v393
    %v1649 = vunpack.c.l.b16 %v394
    %v1650 = vunpack.c.h.b16 %v394
    %v1651 = vunpack.c.l.b16 %v395
    %v1652 = vunpack.c.h.b16 %v395
    %v1653 = vunpack.c.l.b16 %v396
    %v1654 = vunpack.c.h.b16 %v396
    %v1655 = vunpack.c.l.b16 %v397
    %v1656 = vunpack.c.h.b16 %v397
    %v1657 = vunpack.c.l.b16 %v398
    %v1658 = vunpack.c.h.b16 %v398
    %v1659 = vunpack.c.l.b16 %v399
    %v1660 = vunpack.c.h.b16 %v399
    %v1661 = vunpack.c.l.b16 %v400
    %v1662 = vunpack.c.h.b16 %v400
    %v1663 = vunpack.c.l.b16 %v401
    %v1664 = vunpack.c.h.b16 %v401
    %v1665 = vunpack.c.l.b16 %v402
    %v1666 = vunpack.c.h.b16 %v402
    %v1667 = vunpack.c.l.b16 %v403
    %v1668 = vunpack.c.h.b16 %v403
    %v1669 = vunpack.c.l.b16 %v404
    %v1670 = vunpack.c.h.b16 %v404
    %v1671 = vunpack.c.l.b16 %v405
    %v1672 = vunpack.c.h.b16 %v405
    %v1673 = vunpack.c.l.b16 %v406
    %v1674 = vunpack.c.h.b16 %v406
    %v1675 = vunpack.c.l.b16 %v407
    %v1676 = vunpack.c.h.b16 %v407
    %v1677 = vunpack.c.l.b16 %v408
    %v1678 = vunpack.c.h.b16 %v408
    %v1679 = vunpack.c.l.b16 %v409
    %v1680 = vunpack.c.h.b16 %v409
    %v1681 = vunpack.c.l.b16 %v410
    %v1682 = vunpack.c.h.b16 %v410
    %v1683 = vunpack.c.l.b16 %v411
    %v1684 = vunpack.c.h.b16 %v411
    %v1685 = vunpack.c.l.b16 %v412
    %v1686 = vunpack.c.h.b16 %v412
    %v1687 = vunpack.c.l.b16 %v413
    %v1688 = vunpack.c.h.b16 %v413
    %v1689 = vunpack.c.l.b16 %v414
    %v1690 = vunpack.c.h.b16 %v414
    %v1691 = vunpack.c.l.b16 %v415
    %v1692 = vunpack.c.h.b16 %v415
    %v1693 = vunpack.c.l.b16 %v416
    %v1694 = vunpack.c.h.b16 %v416
    %v1695 = vunpack.c.l.b16 %v417
    %v1696 = vunpack.c.h.b16 %v417
    %v1697 = vunpack.c.l.b16 %v418
    %v1698 = vunpack.c.h.b16 %v418
    %v1699 = vunpack.c.l.b16 %v419
    %v1700 = vunpack.c.h.b16 %v419
    %v1701 = vunpack.c.l.b16 %v420
    %v1702 = vunpack.c.h.b16 %v420
    %v1703 = vunpack.c.l.b16 %v421
    %v1704 = vunpack.c.h.b16 %v421
    %v1705 = vunpack.c.l.b16 %v422
    %v1706 = vunpack.c.h.b16 %v422
    %v1707 = vunpack.c.l.b16 %v423
    %v1708 = vunpack.c.h.b16 %v423
    %v1709 = vunpack.c.l.b16 %v424
    %v1710 = vunpack.c.h.b16 %v424
    %v1711 = vunpack.c.l.b16 %v425
    %v1712 = vunpack.c.h.b16 %v425
    %v1713 = vunpack.c.l.b16 %v426
    %v1714 = vunpack.c.h.b16 %v426
    %v1715 = vunpack.c.l.b16 %v427
    %v1716 = vunpack.c.h.b16 %v427
    %v1717 = vunpack.c.l.b16 %v428
    %v1718 = vunpack.c.h.b16 %v428
    %v1719 = vunpack.c.l.b16 %v429
    %v1720 = vunpack.c.h.b16 %v429
    %v1721 = vunpack.c.l.b16 %v430
    %v1722 = vunpack.c.h.b16 %v430
    %v1723 = vunpack.c.l.b16 %v431
    %v1724 = vunpack.c.h.b16 %v431
    %v1725 = vunpack.c.l.b16 %v432
    %v1726 = vunpack.c.h.b16 %v432
    %v1727 = vunpack.c.l.b16 %v433
    %v1728 = vunpack.c.h.b16 %v433
    %v1729 = vunpack.c.l.b16 %v434
    %v1730 = vunpack.c.h.b16 %v434
    %v1731 = vunpack.c.l.b16 %v435
    %v1732 = vunpack.c.h.b16 %v435
    %v1733 = vunpack.c.l.b16 %v436
    %v1734 = vunpack.c.h.b16 %v436
    %v1735 = vunpack.c.l.b16 %v437
    %v1736 = vunpack.c.h.b16 %v437
    %v1737 = vunpack.c.l.b16 %v438
    %v1738 = vunpack.c.h.b16 %v438
    %v1739 = vunpack.c.l.b16 %v439
    %v1740 = vunpack.c.h.b16 %v439
    %v1741 = vunpack.c.l.b16 %v440
    %v1742 = vunpack.c.h.b16 %v440
    %v1743 = vunpack.c.l.b16 %v441
    %v1744 = vunpack.c.h.b16 %v441
    %v1745 = vunpack.c.l.b16 %v442
    %v1746 = vunpack.c.h.b16 %v442
    %v1747 = vunpack.c.l.b16 %v443
    %v1748 = vunpack.c.h.b16 %v443
    %v1749 = vunpack.c.l.b16 %v444
    %v1750 = vunpack.c.h.b16 %v444
    %v1751 = vunpack.c.l.b16 %v445
    %v1752 = vunpack.c.h.b16 %v445
    %v1753 = vunpack.c.l.b16 %v446
    %v1754 = vunpack.c.h.b16 %v446
    %v1755 = vunpack.c.l.b16 %v447
    %v1756 = vunpack.c.h.b16 %v447
    %v1757 = vunpack.c.l.b16 %v448
    %v1758 = vunpack.c.h.b16 %v448
    %v1759 = vunpack.c.l.b16 %v449
    %v1760 = vunpack.c.h.b16 %v449
    %v1761 = vunpack.c.l.b16 %v450
    %v1762 = vunpack.c.h.b16 %v450
    %v1763 = vunpack.c.l.b16 %v451
    %v1764 = vunpack.c.h.b16 %v451
    %v1765 = vunpack.c.l.b16 %v452
    %v1766 = vunpack.c.h.b16 %v452
    %v1767 = vunpack.c.l.b16 %v453
    %v1768 = vunpack.c.h.b16 %v453
    %v1769 = vunpack.c.l.b16 %v454
    %v1770 = vunpack.c.h.b16 %v454
    %v1771 = vunpack.c.l.b16 %v455
    %v1772 = vunpack.c.h.b16 %v455
    %v1773 = vunpack.c.l.b16 %v456
    %v1774 = vunpack.c.h.b16 %v456
    %v1775 = vunpack.c.l.b16 %v457
    %v1776 = vunpack.c.h.b16 %v457
    %v1777 = vunpack.c.l.b16 %v458
    %v1778 = vunpack.c.h.b16 %v458
    %v1779 = vunpack.c.l.b16 %v459
    %v1780 = vunpack.c.h.b16 %v459
    %v1781 = vunpack.c.l.b16 %v460
    %v1782 = vunpack.c.h.b16 %v460
    %v1783 = vunpack.c.l.b16 %v461
    %v1784 = vunpack.c.h.b16 %v461
    %v1785 = vunpack.c.l.b16 %v462
    %v1786 = vunpack.c.h.b16 %v462
    %v1787 = vunpack.c.l.b16 %v463
    %v1788 = vunpack.c.h.b16 %v463
    %v1789 = vunpack.c.l.b16 %v464
    %v1790 = vunpack.c.h.b16 %v464
    %v1791 = vunpack.c.l.b16 %v465
    %v1792 = vunpack.c.h.b16 %v465
    %v1793 = vunpack.c.l.b16 %v466
    %v1794 = vunpack.c.h.b16 %v466
    %v1795 = vunpack.c.l.b16 %v467
    %v1796 = vunpack.c.h.b16 %v467
    %v1797 = vunpack.c.l.b16 %v468
    %v1798 = vunpack.c.h.b16 %v468
    %v1799 = vunpack.c.l.b16 %v469
    %v1800 = vunpack.c.h.b16 %v469
    %v1801 = vunpack.c.l.b16 %v470
    %v1802 = vunpack.c.h.b16 %v470
    %v1803 = vunpack.c.l.b16 %v471
    %v1804 = vunpack.c.h.b16 %v471
    %v1805 = vunpack.c.l.b16 %v472
    %v1806 = vunpack.c.h.b16 %v472
    %v1807 = vunpack.c.l.b16 %v473
    %v1808 = vunpack.c.h.b16 %v473
    %v1809 = vunpack.c.l.b16 %v474
    %v1810 = vunpack.c.h.b16 %v474
    %v1811 = vunpack.c.l.b16 %v475
    %v1812 = vunpack.c.h.b16 %v475
    %v1813 = vunpack.c.l.b16 %v476
    %v1814 = vunpack.c.h.b16 %v476
    %v1815 = vunpack.c.l.b16 %v477
    %v1816 = vunpack.c.h.b16 %v477
    %v1817 = vunpack.c.l.b16 %v478
    %v1818 = vunpack.c.h.b16 %v478
    %v1819 = vunpack.c.l.b16 %v479
    %v1820 = vunpack.c.h.b16 %v479
    %v1821 = vunpack.c.l.b16 %v480
    %v1822 = vunpack.c.h.b16 %v480
    %v1823 = vunpack.c.l.b16 %v481
    %v1824 = vunpack.c.h.b16 %v481
    %v1825 = vunpack.c.l.b16 %v482
    %v1826 = vunpack.c.h.b16 %v482
    %v1827 = vunpack.c.l.b16 %v483
    %v1828 = vunpack.c.h.b16 %v483
    %v1829 = vunpack.c.l.b16 %v484
    %v1830 = vunpack.c.h.b16 %v484
    %v1831 = vunpack.c.l.b16 %v485
    %v1832 = vunpack.c.h.b16 %v485
    %v1833 = vunpack.c.l.b16 %v486
    %v1834 = vunpack.c.h.b16 %v486
    %v1835 = vunpack.c.l.b16 %v487
    %v1836 = vunpack.c.h.b16 %v487
    %v1837 = vunpack.c.l.b16 %v488
    %v1838 = vunpack.c.h.b16 %v488
    %v1839 = vunpack.c.l.b16 %v489
    %v1840 = vunpack.c.h.b16 %v489
    %v1841 = vunpack.c.l.b16 %v490
    %v1842 = vunpack.c.h.b16 %v490
    %v1843 = vunpack.c.l.b16 %v491
    %v1844 = vunpack.c.h.b16 %v491
    %v1845 = vunpack.c.l.b16 %v492
    %v1846 = vunpack.c.h.b16 %v492
    %v1847 = vunpack.c.l.b16 %v493
    %v1848 = vunpack.c.h.b16 %v493
    %v1849 = vunpack.c.l.b16 %v494
    %v1850 = vunpack.c.h.b16 %v494
    %v1851 = vunpack.c.l.b16 %v495
    %v1852 = vunpack.c.h.b16 %v495
    %v1853 = vunpack.c.l.b16 %v496
    %v1854 = vunpack.c.h.b16 %v496
    %v1855 = vunpack.c.l.b16 %v497
    %v1856 = vunpack.c.h.b16 %v497
    %v1857 = vunpack.c.l.b16 %v498
    %v1858 = vunpack.c.h.b16 %v498
    %v1859 = vunpack.c.l.b16 %v499
    %v1860 = vunpack.c.h.b16 %v499
    %v1861 = vunpack.c.l.b16 %v500
    %v1862 = vunpack.c.h.b16 %v500
    %v1863 = vunpack.c.l.b16 %v501
    %v1864 = vunpack.c.h.b16 %v501
    %v1865 = vunpack.c.l.b16 %v502
    %v1866 = vunpack.c.h.b16 %v502
    %v1867 = vunpack.c.l.b16 %v503
    %v1868 = vunpack.c.h.b16 %v503
    %v1869 = vunpack.c.l.b16 %v504
    %v1870 = vunpack.c.h.b16 %v504
    %v1871 = vunpack.c.l.b16 %v505
    %v1872 = vunpack.c.h.b16 %v505
    %v1873 = vunpack.c.l.b16 %v506
    %v1874 = vunpack.c.h.b16 %v506
    %v1875 = vunpack.c.l.b16 %v507
    %v1876 = vunpack.c.h.b16 %v507
    %v1877 = vunpack.c.l.b16 %v508
    %v1878 = vunpack.c.h.b16 %v508
    %v1879 = vunpack.c.l.b16 %v509
    %v1880 = vunpack.c.h.b16 %v509
    %v1881 = vunpack.c.l.b16 %v510
    %v1882 = vunpack.c.h.b16 %v510
    %v1883 = vunpack.c.l.b16 %v511
    %v1884 = vunpack.c.h.b16 %v511
    %v1885 = vunpack.c.l.b16 %v512
    %v1886 = vunpack.c.h.b16 %v512
    %v1887 = vunpack.c.l.b16 %v513
    %v1888 = vunpack.c.h.b16 %v513
    %v1889 = vunpack.c.l.b16 %v514
    %v1890 = vunpack.c.h.b16 %v514
    %v1891 = vunpack.c.l.b16 %v515
    %v1892 = vunpack.c.h.b16 %v515
    %v1893 = vunpack.c.l.b16 %v516
    %v1894 = vunpack.c.h.b16 %v516
    %v1895 = vunpack.c.l.b16 %v517
    %v1896 = vunpack.c.h.b16 %v517
    %v1897 = vunpack.c.l.b16 %v518
    %v1898 = vunpack.c.h.b16 %v518
    %v1899 = vunpack.c.l.b16 %v519
    %v1900 = vunpack.c.h.b16 %v519
    %v1901 = vunpack.c.l.b16 %v520
    %v1902 = vunpack.c.h.b16 %v520
    %v1903 = vunpack.c.l.b16 %v521
    %v1904 = vunpack.c.h.b16 %v521
    %v1905 = vunpack.c.l.b16 %v522
    %v1906 = vunpack.c.h.b16 %v522
    %v1907 = vunpack.c.l.b16 %v523
    %v1908 = vunpack.c.h.b16 %v523
    %v1909 = vunpack.c.l.b16 %v524
    %v1910 = vunpack.c.h.b16 %v524
    %v1911 = vunpack.c.l.b16 %v525
    %v1912 = vunpack.c.h.b16 %v525
    %v1913 = vunpack.c.l.b16 %v526
    %v1914 = vunpack.c.h.b16 %v526
    %v1915 = vunpack.c.l.b16 %v527
    %v1916 = vunpack.c.h.b16 %v527
    %v1917 = vunpack.c.l.b16 %v528
    %v1918 = vunpack.c.h.b16 %v528
    %v1919 = vunpack.c.l.b16 %v529
    %v1920 = vunpack.c.h.b16 %v529
    %v1921 = vunpack.c.l.b16 %v530
    %v1922 = vunpack.c.h.b16 %v530
    %v1923 = vunpack.c.l.b16 %v531
    %v1924 = vunpack.c.h.b16 %v531
    %v1925 = vunpack.c.l.b16 %v532
    %v1926 = vunpack.c.h.b16 %v532
    %v1927 = vunpack.c.l.b16 %v533
    %v1928 = vunpack.c.h.b16 %v533
    %v1929 = vunpack.c.l.b16 %v534
    %v1930 = vunpack.c.h.b16 %v534
    %v1931 = vunpack.c.l.b16 %v535
    %v1932 = vunpack.c.h.b16 %v535
    %v1933 = vunpack.c.l.b16 %v536
    %v1934 = vunpack.c.h.b16 %v536
    %v1935 = vunpack.c.l.b16 %v537
    %v1936 = vunpack.c.h.b16 %v537
    %v1937 = vunpack.c.l.b16 %v538
    %v1938 = vunpack.c.h.b16 %v538
    %v1939 = vunpack.c.l.b16 %v539
    %v1940 = vunpack.c.h.b16 %v539
    %v1941 = vunpack.c.l.b16 %v540
    %v1942 = vunpack.c.h.b16 %v540
    %v1943 = vunpack.c.l.b16 %v541
    %v1944 = vunpack.c.h.b16 %v541
    %v1945 = vunpack.c.l.b16 %v542
    %v1946 = vunpack.c.h.b16 %v542
    %v1947 = vunpack.c.l.b16 %v543
    %v1948 = vunpack.c.h.b16 %v543
    %v1949 = vunpack.c.l.b16 %v544
    %v1950 = vunpack.c.h.b16 %v544
    %v1951 = vunpack.c.l.b16 %v545
    %v1952 = vunpack.c.h.b16 %v545
    %v1953 = vunpack.c.l.b16 %v546
    %v1954 = vunpack.c.h.b16 %v546
    %v1955 = vunpack.c.l.b16 %v547
    %v1956 = vunpack.c.h.b16 %v547
    %v1957 = vunpack.c.l.b16 %v548
    %v1958 = vunpack.c.h.b16 %v548
    %v1959 = vunpack.c.l.b16 %v549
    %v1960 = vunpack.c.h.b16 %v549
    %v1961 = vunpack.c.l.b16 %v550
    %v1962 = vunpack.c.h.b16 %v550
    %v1963 = vunpack.c.l.b16 %v551
    %v1964 = vunpack.c.h.b16 %v551
    %v1965 = vunpack.c.l.b16 %v552
    %v1966 = vunpack.c.h.b16 %v552
    %v1967 = vunpack.c.l.b16 %v553
    %v1968 = vunpack.c.h.b16 %v553
    %v1969 = vunpack.c.l.b16 %v554
    %v1970 = vunpack.c.h.b16 %v554
    %v1971 = vunpack.c.l.b16 %v555
    %v1972 = vunpack.c.h.b16 %v555
    %v1973 = vunpack.c.l.b16 %v556
    %v1974 = vunpack.c.h.b16 %v556
    %v1975 = vunpack.c.l.b16 %v557
    %v1976 = vunpack.c.h.b16 %v557
    %v1977 = vunpack.c.l.b16 %v558
    %v1978 = vunpack.c.h.b16 %v558
    %v1979 = vunpack.c.l.b16 %v559
    %v1980 = vunpack.c.h.b16 %v559
    %v1981 = vunpack.c.l.b16 %v560
    %v1982 = vunpack.c.h.b16 %v560
    %v1983 = vunpack.c.l.b16 %v561
    %v1984 = vunpack.c.h.b16 %v561
    %v1985 = vunpack.c.l.b16 %v562
    %v1986 = vunpack.c.h.b16 %v562
    %v1987 = vunpack.c.l.b16 %v563
    %v1988 = vunpack.c.h.b16 %v563
    %v1989 = vunpack.c.l.b16 %v564
    %v1990 = vunpack.c.h.b16 %v564
    %v1991 = vunpack.c.l.b16 %v565
    %v1992 = vunpack.c.h.b16 %v565
    %v1993 = vunpack.c.l.b16 %v566
    %v1994 = vunpack.c.h.b16 %v566
    %v1995 = vunpack.c.l.b16 %v567
    %v1996 = vunpack.c.h.b16 %v567
    %v1997 = vunpack.c.l.b16 %v568
    %v1998 = vunpack.c.h.b16 %v568
    %v1999 = vunpack.c.l.b16 %v569
    %v2000 = vunpack.c.h.b16 %v569
    %v2001 = vunpack.c.l.b16 %v570
    %v2002 = vunpack.c.h.b16 %v570
    %v2003 = vunpack.c.l.b16 %v571
    %v2004 = vunpack.c.h.b16 %v571
    %v2005 = vunpack.c.l.b16 %v572
    %v2006 = vunpack.c.h.b16 %v572
    %v2007 = vunpack.c.l.b16 %v573
    %v2008 = vunpack.c.h.b16 %v573
    %v2009 = vunpack.c.l.b16 %v574
    %v2010 = vunpack.c.h.b16 %v574
    %v2011 = vunpack.c.l.b16 %v575
    %v2012 = vunpack.c.h.b16 %v575
    %v2013 = vunpack.c.l.b16 %v576
    %v2014 = vunpack.c.h.b16 %v576
    %v2015 = vunpack.c.l.b16 %v577
    %v2016 = vunpack.c.h.b16 %v577
    %v2017 = vunpack.c.l.b16 %v578
    %v2018 = vunpack.c.h.b16 %v578
    %v2019 = vunpack.c.l.b16 %v579
    %v2020 = vunpack.c.h.b16 %v579
    %v2021 = vunpack.c.l.b16 %v580
    %v2022 = vunpack.c.h.b16 %v580
    %v2023 = vunpack.c.l.b16 %v581
    %v2024 = vunpack.c.h.b16 %v581
    %v2025 = vunpack.c.l.b16 %v582
    %v2026 = vunpack.c.h.b16 %v582
    %v2027 = vunpack.c.l.b16 %v583
    %v2028 = vunpack.c.h.b16 %v583
    %v2029 = vunpack.c.l.b16 %v584
    %v2030 = vunpack.c.h.b16 %v584
    %v2031 = vunpack.c.l.b16 %v585
    %v2032 = vunpack.c.h.b16 %v585
    %v2033 = vunpack.c.l.b16 %v586
    %v2034 = vunpack.c.h.b16 %v586
    %v2035 = vunpack.c.l.b16 %v587
    %v2036 = vunpack.c.h.b16 %v587
    %v2037 = vunpack.c.l.b16 %v588
    %v2038 = vunpack.c.h.b16 %v588
    %v2039 = vunpack.c.l.b16 %v589
    %v2040 = vunpack.c.h.b16 %v589
    %v2041 = vunpack.c.l.b16 %v590
    %v2042 = vunpack.c.h.b16 %v590
    %v2043 = vunpack.c.l.b16 %v591
    %v2044 = vunpack.c.h.b16 %v591
    %v2045 = vunpack.c.l.b16 %v592
    %v2046 = vunpack.c.h.b16 %v592
    %v2047 = vunpack.c.l.b16 %v593
    %v2048 = vunpack.c.h.b16 %v593
    %v2049 = vunpack.c.l.b16 %v594
    %v2050 = vunpack.c.h.b16 %v594
    %v2051 = vunpack.c.l.b16 %v595
    %v2052 = vunpack.c.h.b16 %v595
    %v2053 = vunpack.c.l.b16 %v596
    %v2054 = vunpack.c.h.b16 %v596
    %v2055 = vunpack.c.l.b16 %v597
    %v2056 = vunpack.c.h.b16 %v597
    %v2057 = vunpack.c.l.b16 %v598
    %v2058 = vunpack.c.h.b16 %v598
    %v2059 = vunpack.c.l.b16 %v599
    %v2060 = vunpack.c.h.b16 %v599
    %v2061 = vunpack.c.l.b16 %v600
    %v2062 = vunpack.c.h.b16 %v600
    %v2063 = vunpack.c.l.b16 %v601
    %v2064 = vunpack.c.h.b16 %v601
    %v2065 = vunpack.c.l.b16 %v602
    %v2066 = vunpack.c.h.b16 %v602
    %v2067 = vunpack.c.l.b16 %v603
    %v2068 = vunpack.c.h.b16 %v603
    %v2069 = vunpack.c.l.b16 %v604
    %v2070 = vunpack.c.h.b16 %v604
    %v2071 = vunpack.c.l.b16 %v605
    %v2072 = vunpack.c.h.b16 %v605
    %v2073 = vunpack.c.l.b16 %v606
    %v2074 = vunpack.c.h.b16 %v606
    %v2075 = vunpack.c.l.b16 %v607
    %v2076 = vunpack.c.h.b16 %v607
    %v2077 = vunpack.c.l.b16 %v608
    %v2078 = vunpack.c.h.b16 %v608
    %v2079 = vunpack.c.l.b16 %v609
    %v2080 = vunpack.c.h.b16 %v609
    %v2081 = vunpack.c.l.b16 %v610
    %v2082 = vunpack.c.h.b16 %v610
    %v2083 = vunpack.c.l.b16 %v611
    %v2084 = vunpack.c.h.b16 %v611
    %v2085 = vunpack.c.l.b16 %v612
    %v2086 = vunpack.c.h.b16 %v612
    %v2087 = vunpack.c.l.b16 %v613
    %v2088 = vunpack.c.h.b16 %v613
    %v2089 = vunpack.c.l.b16 %v614
    %v2090 = vunpack.c.h.b16 %v614
    %v2091 = vunpack.c.l.b16 %v615
    %v2092 = vunpack.c.h.b16 %v615
    %v2093 = vunpack.c.l.b16 %v616
    %v2094 = vunpack.c.h.b16 %v616
    %v2095 = vunpack.c.l.b16 %v617
    %v2096 = vunpack.c.h.b16 %v617
    %v2097 = vunpack.c.l.b16 %v618
    %v2098 = vunpack.c.h.b16 %v618
    %v2099 = vunpack.c.l.b16 %v619
    %v2100 = vunpack.c.h.b16 %v619
    %v2101 = vunpack.c.l.b16 %v620
    %v2102 = vunpack.c.h.b16 %v620
    %v2103 = vunpack.c.l.b16 %v621
    %v2104 = vunpack.c.h.b16 %v621
    %v2105 = vunpack.c.l.b16 %v622
    %v2106 = vunpack.c.h.b16 %v622
    %v2107 = vunpack.c.l.b16 %v623
    %v2108 = vunpack.c.h.b16 %v623
    %v2109 = vunpack.c.l.b16 %v624
    %v2110 = vunpack.c.h.b16 %v624
    %v2111 = vunpack.c.l.b16 %v625
    %v2112 = vunpack.c.h.b16 %v625
    %v2113 = vunpack.c.l.b16 %v626
    %v2114 = vunpack.c.h.b16 %v626
    %v2115 = vunpack.c.l.b16 %v627
    %v2116 = vunpack.c.h.b16 %v627
    %v2117 = vunpack.c.l.b16 %v628
    %v2118 = vunpack.c.h.b16 %v628
    %v2119 = vunpack.c.l.b16 %v629
    %v2120 = vunpack.c.h.b16 %v629
    %v2121 = vunpack.c.l.b16 %v630
    %v2122 = vunpack.c.h.b16 %v630
    %v2123 = vunpack.c.l.b16 %v631
    %v2124 = vunpack.c.h.b16 %v631
    %v2125 = vunpack.c.l.b16 %v632
    %v2126 = vunpack.c.h.b16 %v632
    %v2127 = vunpack.c.l.b16 %v633
    %v2128 = vunpack.c.h.b16 %v633
    %v2129 = vunpack.c.l.b16 %v634
    %v2130 = vunpack.c.h.b16 %v634
    %v2131 = vunpack.c.l.b16 %v635
    %v2132 = vunpack.c.h.b16 %v635
    %v2133 = vunpack.c.l.b16 %v636
    %v2134 = vunpack.c.h.b16 %v636
    %v2135 = vunpack.c.l.b16 %v637
    %v2136 = vunpack.c.h.b16 %v637
    %v2137 = vunpack.c.l.b16 %v638
    %v2138 = vunpack.c.h.b16 %v638
    %v2139 = vunpack.c.l.b16 %v639
    %v2140 = vunpack.c.h.b16 %v639
    %v2141 = vunpack.c.l.b16 %v640
    %v2142 = vunpack.c.h.b16 %v640
    %v2143 = vunpack.c.l.b16 %v641
    %v2144 = vunpack.c.h.b16 %v641
    %v2145 = vunpack.c.l.b16 %v642
    %v2146 = vunpack.c.h.b16 %v642
    %v2147 = vunpack.c.l.b16 %v643
    %v2148 = vunpack.c.h.b16 %v643
    %v2149 = vunpack.c.l.b16 %v644
    %v2150 = vunpack.c.h.b16 %v644
    %v2151 = vunpack.c.l.b16 %v645
    %v2152 = vunpack.c.h.b16 %v645
    %v2153 = vunpack.c.l.b16 %v646
    %v2154 = vunpack.c.h.b16 %v646
    %v2155 = vunpack.c.l.b16 %v647
    %v2156 = vunpack.c.h.b16 %v647
    %v2157 = vunpack.c.l.b16 %v648
    %v2158 = vunpack.c.h.b16 %v648
    %v2159 = vunpack.c.l.b16 %v649
    %v2160 = vunpack.c.h.b16 %v649
    %v2161 = vunpack.c.l.b16 %v650
    %v2162 = vunpack.c.h.b16 %v650
    %v2163 = vunpack.c.l.b16 %v651
    %v2164 = vunpack.c.h.b16 %v651
    %v2165 = vunpack.c.l.b16 %v652
    %v2166 = vunpack.c.h.b16 %v652
    %v2167 = vunpack.c.l.b16 %v653
    %v2168 = vunpack.c.h.b16 %v653
    %v2169 = vunpack.c.l.b16 %v654
    %v2170 = vunpack.c.h.b16 %v654
    %v2171 = vunpack.c.l.b16 %v655
    %v2172 = vunpack.c.h.b16 %v655
    %v2173 = vunpack.c.l.b16 %v656
    %v2174 = vunpack.c.h.b16 %v656
    %v2175 = vunpack.c.l.b16 %v657
    %v2176 = vunpack.c.h.b16 %v657
    %v2177 = vunpack.c.l.b16 %v658
    %v2178 = vunpack.c.h.b16 %v658
    %v2179 = vunpack.c.l.b16 %v659
    %v2180 = vunpack.c.h.b16 %v659
    %v2181 = vunpack.c.l.b16 %v660
    %v2182 = vunpack.c.h.b16 %v660
    %v2183 = vunpack.c.l.b16 %v661
    %v2184 = vunpack.c.h.b16 %v661
    %v2185 = vunpack.c.l.b16 %v662
    %v2186 = vunpack.c.h.b16 %v662
    %v2187 = vunpack.c.l.b16 %v663
    %v2188 = vunpack.c.h.b16 %v663
    %v2189 = vunpack.c.l.b16 %v664
    %v2190 = vunpack.c.h.b16 %v664
    %v2191 = vunpack.c.l.b16 %v665
    %v2192 = vunpack.c.h.b16 %v665
    %v2193 = vunpack.c.l.b16 %v666
    %v2194 = vunpack.c.h.b16 %v666
    %v2195 = vunpack.c.l.b16 %v667
    %v2196 = vunpack.c.h.b16 %v667
    %v2197 = vunpack.c.l.b16 %v668
    %v2198 = vunpack.c.h.b16 %v668
    %v2199 = vunpack.c.l.b16 %v669
    %v2200 = vunpack.c.h.b16 %v669
    %v2201 = vunpack.c.l.b16 %v670
    %v2202 = vunpack.c.h.b16 %v670
    %v2203 = vunpack.c.l.b16 %v671
    %v2204 = vunpack.c.h.b16 %v671
    %v2205 = vunpack.c.l.b16 %v672
    %v2206 = vunpack.c.h.b16 %v672
    %v2207 = vunpack.c.l.b16 %v673
    %v2208 = vunpack.c.h.b16 %v673
    %v2209 = vunpack.c.l.b16 %v674
    %v2210 = vunpack.c.h.b16 %v674
    %v2211 = vunpack.c.l.b16 %v675
    %v2212 = vunpack.c.h.b16 %v675
    %v2213 = vunpack.c.l.b16 %v676
    %v2214 = vunpack.c.h.b16 %v676
    %v2215 = vunpack.c.l.b16 %v677
    %v2216 = vunpack.c.h.b16 %v677
    %v2217 = vunpack.c.l.b16 %v678
    %v2218 = vunpack.c.h.b16 %v678
    %v2219 = vunpack.c.l.b16 %v679
    %v2220 = vunpack.c.h.b16 %v679
    %v2221 = vunpack.c.l.b16 %v680
    %v2222 = vunpack.c.h.b16 %v680
    %v2223 = vunpack.c.l.b16 %v681
    %v2224 = vunpack.c.h.b16 %v681
    %v2225 = vunpack.c.l.b16 %v682
    %v2226 = vunpack.c.h.b16 %v682
    %v2227 = vunpack.c.l.b16 %v683
    %v2228 = vunpack.c.h.b16 %v683
    %v2229 = vunpack.c.l.b16 %v684
    %v2230 = vunpack.c.h.b16 %v684
    %v2231 = vpack.c.b16 %v1211, %v1207
    %v2232 = vpack.c.b16 %v1212, %v1208
    %v2233 = vpack.c.b16 %v1213, %v1209
    %v2234 = vpack.c.b16 %v1214, %v1210
    %v2235 = vpack.c.b16 %v1219, %v1215
    %v2236 = vpack.c.b16 %v1220, %v1216
    %v2237 = vpack.c.b16 %v1221, %v1217
    %v2238 = vpack.c.b16 %v1222, %v1218
    %v2239 = vpack.c.b16 %v1227, %v1223
    %v2240 = vpack.c.b16 %v1228, %v1224
    %v2241 = vpack.c.b16 %v1229, %v1225
    %v2242 = vpack.c.b16 %v1230, %v1226
    %v2243 = vpack.c.b16 %v1235, %v1231
    %v2244 = vpack.c.b16 %v1236, %v1232
    %v2245 = vpack.c.b16 %v1237, %v1233
    %v2246 = vpack.c.b16 %v1238, %v1234
    %v2247 = vpack.c.b16 %v1243, %v1239
    %v2248 = vpack.c.b16 %v1244, %v1240
    %v2249 = vpack.c.b16 %v1245, %v1241
    %v2250 = vpack.c.b16 %v1246, %v1242
    %v2251 = vpack.c.b16 %v1251, %v1247
    %v2252 = vpack.c.b16 %v1252, %v1248
    %v2253 = vpack.c.b16 %v1253, %v1249
    %v2254 = vpack.c.b16 %v1254, %v1250
    %v2255 = vpack.c.b16 %v1259, %v1255
    %v2256 = vpack.c.b16 %v1260, %v1256
    %v2257 = vpack.c.b16 %v1261, %v1257
    %v2258 = vpack.c.b16 %v1262, %v1258
    %v2259 = vpack.c.b16 %v1267, %v1263
    %v2260 = vpack.c.b16 %v1268, %v1264
    %v2261 = vpack.c.b16 %v1269, %v1265
    %v2262 = vpack.c.b16 %v1270, %v1266
    %v2263 = vpack.c.b16 %v1275, %v1271
    %v2264 = vpack.c.b16 %v1276, %v1272
    %v2265 = vpack.c.b16 %v1277, %v1273
    %v2266 = vpack.c.b16 %v1278, %v1274
    %v2267 = vpack.c.b16 %v1283, %v1279
    %v2268 = vpack.c.b16 %v1284, %v1280
    %v2269 = vpack.c.b16 %v1285, %v1281
    %v2270 = vpack.c.b16 %v1286, %v1282
    %v2271 = vpack.c.b16 %v1291, %v1287
    %v2272 = vpack.c.b16 %v1292, %v1288
    %v2273 = vpack.c.b16 %v1293, %v1289
    %v2274 = vpack.c.b16 %v1294, %v1290
    %v2275 = vpack.c.b16 %v1299, %v1295
    %v2276 = vpack.c.b16 %v1300, %v1296
    %v2277 = vpack.c.b16 %v1301, %v1297
    %v2278 = vpack.c.b16 %v1302, %v1298
    %v2279 = vpack.c.b16 %v1307, %v1303
    %v2280 = vpack.c.b16 %v1308, %v1304
    %v2281 = vpack.c.b16 %v1309, %v1305
    %v2282 = vpack.c.b16 %v1310, %v1306
    %v2283 = vpack.c.b16 %v1315, %v1311
    %v2284 = vpack.c.b16 %v1316, %v1312
    %v2285 = vpack.c.b16 %v1317, %v1313
    %v2286 = vpack.c.b16 %v1318, %v1314
    %v2287 = vpack.c.b16 %v1323, %v1319
    %v2288 = vpack.c.b16 %v1324, %v1320
    %v2289 = vpack.c.b16 %v1325, %v1321
    %v2290 = vpack.c.b16 %v1326, %v1322
    %v2291 = vpack.c.b16 %v1331, %v1327
    %v2292 = vpack.c.b16 %v1332, %v1328
    %v2293 = vpack.c.b16 %v1333, %v1329
    %v2294 = vpack.c.b16 %v1334, %v1330
    %v2295 = vpack.c.b16 %v1339, %v1335
    %v2296 = vpack.c.b16 %v1340, %v1336
    %v2297 = vpack.c.b16 %v1341, %v1337
    %v2298 = vpack.c.b16 %v1342, %v1338
    %v2299 = vpack.c.b16 %v1347, %v1343
    %v2300 = vpack.c.b16 %v1348, %v1344
    %v2301 = vpack.c.b16 %v1349, %v1345
    %v2302 = vpack.c.b16 %v1350, %v1346
    %v2303 = vpack.c.b16 %v1355, %v1351
    %v2304 = vpack.c.b16 %v1356, %v1352
    %v2305 = vpack.c.b16 %v1357, %v1353
    %v2306 = vpack.c.b16 %v1358, %v1354
    %v2307 = vpack.c.b16 %v1363, %v1359
    %v2308 = vpack.c.b16 %v1364, %v1360
    %v2309 = vpack.c.b16 %v1365, %v1361
    %v2310 = vpack.c.b16 %v1366, %v1362
    %v2311 = vpack.c.b16 %v1371, %v1367
    %v2312 = vpack.c.b16 %v1372, %v1368
    %v2313 = vpack.c.b16 %v1373, %v1369
    %v2314 = vpack.c.b16 %v1374, %v1370
    %v2315 = vpack.c.b16 %v1379, %v1375
    %v2316 = vpack.c.b16 %v1380, %v1376
    %v2317 = vpack.c.b16 %v1381, %v1377
    %v2318 = vpack.c.b16 %v1382, %v1378
    %v2319 = vpack.c.b16 %v1387, %v1383
    %v2320 = vpack.c.b16 %v1388, %v1384
    %v2321 = vpack.c.b16 %v1389, %v1385
    %v2322 = vpack.c.b16 %v1390, %v1386
    %v2323 = vpack.c.b16 %v1395, %v1391
    %v2324 = vpack.c.b16 %v1396, %v1392
    %v2325 = vpack.c.b16 %v1397, %v1393
    %v2326 = vpack.c.b16 %v1398, %v1394
    %v2327 = vpack.c.b16 %v1403, %v1399
    %v2328 = vpack.c.b16 %v1404, %v1400
    %v2329 = vpack.c.b16 %v1405, %v1401
    %v2330 = vpack.c.b16 %v1406, %v1402
    %v2331 = vpack.c.b16 %v1411, %v1407
    %v2332 = vpack.c.b16 %v1412, %v1408
    %v2333 = vpack.c.b16 %v1413, %v1409
    %v2334 = vpack.c.b16 %v1414, %v1410
    %v2335 = vpack.c.b16 %v1419, %v1415
    %v2336 = vpack.c.b16 %v1420, %v1416
    %v2337 = vpack.c.b16 %v1421, %v1417
    %v2338 = vpack.c.b16 %v1422, %v1418
    %v2339 = vpack.c.b16 %v1427, %v1423
    %v2340 = vpack.c.b16 %v1428, %v1424
    %v2341 = vpack.c.b16 %v1429, %v1425
    %v2342 = vpack.c.b16 %v1430, %v1426
    %v2343 = vpack.c.b16 %v1435, %v1431
    %v2344 = vpack.c.b16 %v1436, %v1432
    %v2345 = vpack.c.b16 %v1437, %v1433
    %v2346 = vpack.c.b16 %v1438, %v1434
    %v2347 = vpack.c.b16 %v1443, %v1439
    %v2348 = vpack.c.b16 %v1444, %v1440
    %v2349 = vpack.c.b16 %v1445, %v1441
    %v2350 = vpack.c.b16 %v1446, %v1442
    %v2351 = vpack.c.b16 %v1451, %v1447
    %v2352 = vpack.c.b16 %v1452, %v1448
    %v2353 = vpack.c.b16 %v1453, %v1449
    %v2354 = vpack.c.b16 %v1454, %v1450
    %v2355 = vpack.c.b16 %v1459, %v1455
    %v2356 = vpack.c.b16 %v1460, %v1456
    %v2357 = vpack.c.b16 %v1461, %v1457
    %v2358 = vpack.c.b16 %v1462, %v1458
    %v2359 = vpack.c.b16 %v1467, %v1463
    %v2360 = vpack.c.b16 %v1468, %v1464
    %v2361 = vpack.c.b16 %v1469, %v1465
    %v2362 = vpack.c.b16 %v1470, %v1466
    %v2363 = vpack.c.b16 %v1475, %v1471
    %v2364 = vpack.c.b16 %v1476, %v1472
    %v2365 = vpack.c.b16 %v1477, %v1473
    %v2366 = vpack.c.b16 %v1478, %v1474
    %v2367 = vpack.c.b16 %v1483, %v1479
    %v2368 = vpack.c.b16 %v1484, %v1480
    %v2369 = vpack.c.b16 %v1485, %v1481
    %v2370 = vpack.c.b16 %v1486, %v1482
    %v2371 = vpack.c.b16 %v1491, %v1487
    %v2372 = vpack.c.b16 %v1492, %v1488
    %v2373 = vpack.c.b16 %v1493, %v1489
    %v2374 = vpack.c.b16 %v1494, %v1490
    %v2375 = vpack.c.b16 %v1499, %v1495
    %v2376 = vpack.c.b16 %v1500, %v1496
    %v2377 = vpack.c.b16 %v1501, %v1497
    %v2378 = vpack.c.b16 %v1502, %v1498
    %v2379 = vpack.c.b16 %v1507, %v1503
    %v2380 = vpack.c.b16 %v1508, %v1504
    %v2381 = vpack.c.b16 %v1509, %v1505
    %v2382 = vpack.c.b16 %v1510, %v1506
    %v2383 = vpack.c.b16 %v1515, %v1511
    %v2384 = vpack.c.b16 %v1516, %v1512
    %v2385 = vpack.c.b16 %v1517, %v1513
    %v2386 = vpack.c.b16 %v1518, %v1514
    %v2387 = vpack.c.b16 %v1523, %v1519
    %v2388 = vpack.c.b16 %v1524, %v1520
    %v2389 = vpack.c.b16 %v1525, %v1521
    %v2390 = vpack.c.b16 %v1526, %v1522
    %v2391 = vpack.c.b16 %v1531, %v1527
    %v2392 = vpack.c.b16 %v1532, %v1528
    %v2393 = vpack.c.b16 %v1533, %v1529
    %v2394 = vpack.c.b16 %v1534, %v1530
    %v2395 = vpack.c.b16 %v1539, %v1535
    %v2396 = vpack.c.b16 %v1540, %v1536
    %v2397 = vpack.c.b16 %v1541, %v1537
    %v2398 = vpack.c.b16 %v1542, %v1538
    %v2399 = vpack.c.b16 %v1547, %v1543
    %v2400 = vpack.c.b16 %v1548, %v1544
    %v2401 = vpack.c.b16 %v1549, %v1545
    %v2402 = vpack.c.b16 %v1550, %v1546
    %v2403 = vpack.c.b16 %v1555, %v1551
    %v2404 = vpack.c.b16 %v1556, %v1552
    %v2405 = vpack.c.b16 %v1557, %v1553
    %v2406 = vpack.c.b16 %v1558, %v1554
    %v2407 = vpack.c.b16 %v1563, %v1559
    %v2408 = vpack.c.b16 %v1564, %v1560
    %v2409 = vpack.c.b16 %v1565, %v1561
    %v2410 = vpack.c.b16 %v1566, %v1562
    %v2411 = vpack.c.b16 %v1571, %v1567
    %v2412 = vpack.c.b16 %v1572, %v1568
    %v2413 = vpack.c.b16 %v1573, %v1569
    %v2414 = vpack.c.b16 %v1574, %v1570
    %v2415 = vpack.c.b16 %v1579, %v1575
    %v2416 = vpack.c.b16 %v1580, %v1576
    %v2417 = vpack.c.b16 %v1581, %v1577
    %v2418 = vpack.c.b16 %v1582, %v1578
    %v2419 = vpack.c.b16 %v1587, %v1583
    %v2420 = vpack.c.b16 %v1588, %v1584
    %v2421 = vpack.c.b16 %v1589, %v1585
    %v2422 = vpack.c.b16 %v1590, %v1586
    %v2423 = vpack.c.b16 %v1595, %v1591
    %v2424 = vpack.c.b16 %v1596, %v1592
    %v2425 = vpack.c.b16 %v1597, %v1593
    %v2426 = vpack.c.b16 %v1598, %v1594
    %v2427 = vpack.c.b16 %v1603, %v1599
    %v2428 = vpack.c.b16 %v1604, %v1600
    %v2429 = vpack.c.b16 %v1605, %v1601
    %v2430 = vpack.c.b16 %v1606, %v1602
    %v2431 = vpack.c.b16 %v1611, %v1607
    %v2432 = vpack.c.b16 %v1612, %v1608
    %v2433 = vpack.c.b16 %v1613, %v1609
    %v2434 = vpack.c.b16 %v1614, %v1610
    %v2435 = vpack.c.b16 %v1619, %v1615
    %v2436 = vpack.c.b16 %v1620, %v1616
    %v2437 = vpack.c.b16 %v1621, %v1617
    %v2438 = vpack.c.b16 %v1622, %v1618
    %v2439 = vpack.c.b16 %v1627, %v1623
    %v2440 = vpack.c.b16 %v1628, %v1624
    %v2441 = vpack.c.b16 %v1629, %v1625
    %v2442 = vpack.c.b16 %v1630, %v1626
    %v2443 = vpack.c.b16 %v1635, %v1631
    %v2444 = vpack.c.b16 %v1636, %v1632
    %v2445 = vpack.c.b16 %v1637, %v1633
    %v2446 = vpack.c.b16 %v1638, %v1634
    %v2447 = vpack.c.b16 %v1643, %v1639
    %v2448 = vpack.c.b16 %v1644, %v1640
    %v2449 = vpack.c.b16 %v1645, %v1641
    %v2450 = vpack.c.b16 %v1646, %v1642
    %v2451 = vpack.c.b16 %v1651, %v1647
    %v2452 = vpack.c.b16 %v1652, %v1648
    %v2453 = vpack.c.b16 %v1653, %v1649
    %v2454 = vpack.c.b16 %v1654, %v1650
    %v2455 = vpack.c.b16 %v1659, %v1655
    %v2456 = vpack.c.b16 %v1660, %v1656
    %v2457 = vpack.c.b16 %v1661, %v1657
    %v2458 = vpack.c.b16 %v1662, %v1658
    %v2459 = vpack.c.b16 %v1667, %v1663
    %v2460 = vpack.c.b16 %v1668, %v1664
    %v2461 = vpack.c.b16 %v1669, %v1665
    %v2462 = vpack.c.b16 %v1670, %v1666
    %v2463 = vpack.c.b16 %v1675, %v1671
    %v2464 = vpack.c.b16 %v1676, %v1672
    %v2465 = vpack.c.b16 %v1677, %v1673
    %v2466 = vpack.c.b16 %v1678, %v1674
    %v2467 = vpack.c.b16 %v1683, %v1679
    %v2468 = vpack.c.b16 %v1684, %v1680
    %v2469 = vpack.c.b16 %v1685, %v1681
    %v2470 = vpack.c.b16 %v1686, %v1682
    %v2471 = vpack.c.b16 %v1691, %v1687
    %v2472 = vpack.c.b16 %v1692, %v1688
    %v2473 = vpack.c.b16 %v1693, %v1689
    %v2474 = vpack.c.b16 %v1694, %v1690
    %v2475 = vpack.c.b16 %v1699, %v1695
    %v2476 = vpack.c.b16 %v1700, %v1696
    %v2477 = vpack.c.b16 %v1701, %v1697
    %v2478 = vpack.c.b16 %v1702, %v1698
    %v2479 = vpack.c.b16 %v1707, %v1703
    %v2480 = vpack.c.b16 %v1708, %v1704
    %v2481 = vpack.c.b16 %v1709, %v1705
    %v2482 = vpack.c.b16 %v1710, %v1706
    %v2483 = vpack.c.b16 %v1715, %v1711
    %v2484 = vpack.c.b16 %v1716, %v1712
    %v2485 = vpack.c.b16 %v1717, %v1713
    %v2486 = vpack.c.b16 %v1718, %v1714
    %v2487 = vpack.c.b16 %v1723, %v1719
    %v2488 = vpack.c.b16 %v1724, %v1720
    %v2489 = vpack.c.b16 %v1725, %v1721
    %v2490 = vpack.c.b16 %v1726, %v1722
    %v2491 = vpack.c.b16 %v1731, %v1727
    %v2492 = vpack.c.b16 %v1732, %v1728
    %v2493 = vpack.c.b16 %v1733, %v1729
    %v2494 = vpack.c.b16 %v1734, %v1730
    %v2495 = vpack.c.b16 %v1739, %v1735
    %v2496 = vpack.c.b16 %v1740, %v1736
    %v2497 = vpack.c.b16 %v1741, %v1737
    %v2498 = vpack.c.b16 %v1742, %v1738
    %v2499 = vpack.c.b16 %v1747, %v1743
    %v2500 = vpack.c.b16 %v1748, %v1744
    %v2501 = vpack.c.b16 %v1749, %v1745
    %v2502 = vpack.c.b16 %v1750, %v1746
    %v2503 = vpack.c.b16 %v1755, %v1751
    %v2504 = vpack.c.b16 %v1756, %v1752
    %v2505 = vpack.c.b16 %v1757, %v1753
    %v2506 = vpack.c.b16 %v1758, %v1754
    %v2507 = vpack.c.b16 %v1763, %v1759
    %v2508 = vpack.c.b16 %v1764, %v1760
    %v2509 = vpack.c.b16 %v1765, %v1761
    %v2510 = vpack.c.b16 %v1766, %v1762
    %v2511 = vpack.c.b16 %v1771, %v1767
    %v2512 = vpack.c.b16 %v1772, %v1768
    %v2513 = vpack.c.b16 %v1773, %v1769
    %v2514 = vpack.c.b16 %v1774, %v1770
    %v2515 = vpack.c.b16 %v1779, %v1775
    %v2516 = vpack.c.b16 %v1780, %v1776
    %v2517 = vpack.c.b16 %v1781, %v1777
    %v2518 = vpack.c.b16 %v1782, %v1778
    %v2519 = vpack.c.b16 %v1787, %v1783
    %v2520 = vpack.c.b16 %v1788, %v1784
    %v2521 = vpack.c.b16 %v1789, %v1785
    %v2522 = vpack.c.b16 %v1790, %v1786
    %v2523 = vpack.c.b16 %v1795, %v1791
    %v2524 = vpack.c.b16 %v1796, %v1792
    %v2525 = vpack.c.b16 %v1797, %v1793
    %v2526 = vpack.c.b16 %v1798, %v1794
    %v2527 = vpack.c.b16 %v1803, %v1799
    %v2528 = vpack.c.b16 %v1804, %v1800
    %v2529 = vpack.c.b16 %v1805, %v1801
    %v2530 = vpack.c.b16 %v1806, %v1802
    %v2531 = vpack.c.b16 %v1811, %v1807
    %v2532 = vpack.c.b16 %v1812, %v1808
    %v2533 = vpack.c.b16 %v1813, %v1809
    %v2534 = vpack.c.b16 %v1814, %v1810
    %v2535 = vpack.c.b16 %v1819, %v1815
    %v2536 = vpack.c.b16 %v1820, %v1816
    %v2537 = vpack.c.b16 %v1821, %v1817
    %v2538 = vpack.c.b16 %v1822, %v1818
    %v2539 = vpack.c.b16 %v1827, %v1823
    %v2540 = vpack.c.b16 %v1828, %v1824
    %v2541 = vpack.c.b16 %v1829, %v1825
    %v2542 = vpack.c.b16 %v1830, %v1826
    %v2543 = vpack.c.b16 %v1835, %v1831
    %v2544 = vpack.c.b16 %v1836, %v1832
    %v2545 = vpack.c.b16 %v1837, %v1833
    %v2546 = vpack.c.b16 %v1838, %v1834
    %v2547 = vpack.c.b16 %v1843, %v1839
    %v2548 = vpack.c.b16 %v1844, %v1840
    %v2549 = vpack.c.b16 %v1845, %v1841
    %v2550 = vpack.c.b16 %v1846, %v1842
    %v2551 = vpack.c.b16 %v1851, %v1847
    %v2552 = vpack.c.b16 %v1852, %v1848
    %v2553 = vpack.c.b16 %v1853, %v1849
    %v2554 = vpack.c.b16 %v1854, %v1850
    %v2555 = vpack.c.b16 %v1859, %v1855
    %v2556 = vpack.c.b16 %v1860, %v1856
    %v2557 = vpack.c.b16 %v1861, %v1857
    %v2558 = vpack.c.b16 %v1862, %v1858
    %v2559 = vpack.c.b16 %v1867, %v1863
    %v2560 = vpack.c.b16 %v1868, %v1864
    %v2561 = vpack.c.b16 %v1869, %v1865
    %v2562 = vpack.c.b16 %v1870, %v1866
    %v2563 = vpack.c.b16 %v1875, %v1871
    %v2564 = vpack.c.b16 %v1876, %v1872
    %v2565 = vpack.c.b16 %v1877, %v1873
    %v2566 = vpack.c.b16 %v1878, %v1874
    %v2567 = vpack.c.b16 %v1883, %v1879
    %v2568 = vpack.c.b16 %v1884, %v1880
    %v2569 = vpack.c.b16 %v1885, %v1881
    %v2570 = vpack.c.b16 %v1886, %v1882
    %v2571 = vpack.c.b16 %v1891, %v1887
    %v2572 = vpack.c.b16 %v1892, %v1888
    %v2573 = vpack.c.b16 %v1893, %v1889
    %v2574 = vpack.c.b16 %v1894, %v1890
    %v2575 = vpack.c.b16 %v1899, %v1895
    %v2576 = vpack.c.b16 %v1900, %v1896
    %v2577 = vpack.c.b16 %v1901, %v1897
    %v2578 = vpack.c.b16 %v1902, %v1898
    %v2579 = vpack.c.b16 %v1907, %v1903
    %v2580 = vpack.c.b16 %v1908, %v1904
    %v2581 = vpack.c.b16 %v1909, %v1905
    %v2582 = vpack.c.b16 %v1910, %v1906
    %v2583 = vpack.c.b16 %v1915, %v1911
    %v2584 = vpack.c.b16 %v1916, %v1912
    %v2585 = vpack.c.b16 %v1917, %v1913
    %v2586 = vpack.c.b16 %v1918, %v1914
    %v2587 = vpack.c.b16 %v1923, %v1919
    %v2588 = vpack.c.b16 %v1924, %v1920
    %v2589 = vpack.c.b16 %v1925, %v1921
    %v2590 = vpack.c.b16 %v1926, %v1922
    %v2591 = vpack.c.b16 %v1931, %v1927
    %v2592 = vpack.c.b16 %v1932, %v1928
    %v2593 = vpack.c.b16 %v1933, %v1929
    %v2594 = vpack.c.b16 %v1934, %v1930
    %v2595 = vpack.c.b16 %v1939, %v1935
    %v2596 = vpack.c.b16 %v1940, %v1936
    %v2597 = vpack.c.b16 %v1941, %v1937
    %v2598 = vpack.c.b16 %v1942, %v1938
    %v2599 = vpack.c.b16 %v1947, %v1943
    %v2600 = vpack.c.b16 %v1948, %v1944
    %v2601 = vpack.c.b16 %v1949, %v1945
    %v2602 = vpack.c.b16 %v1950, %v1946
    %v2603 = vpack.c.b16 %v1955, %v1951
    %v2604 = vpack.c.b16 %v1956, %v1952
    %v2605 = vpack.c.b16 %v1957, %v1953
    %v2606 = vpack.c.b16 %v1958, %v1954
    %v2607 = vpack.c.b16 %v1963, %v1959
    %v2608 = vpack.c.b16 %v1964, %v1960
    %v2609 = vpack.c.b16 %v1965, %v1961
    %v2610 = vpack.c.b16 %v1966, %v1962
    %v2611 = vpack.c.b16 %v1971, %v1967
    %v2612 = vpack.c.b16 %v1972, %v1968
    %v2613 = vpack.c.b16 %v1973, %v1969
    %v2614 = vpack.c.b16 %v1974, %v1970
    %v2615 = vpack.c.b16 %v1979, %v1975
    %v2616 = vpack.c.b16 %v1980, %v1976
    %v2617 = vpack.c.b16 %v1981, %v1977
    %v2618 = vpack.c.b16 %v1982, %v1978
    %v2619 = vpack.c.b16 %v1987, %v1983
    %v2620 = vpack.c.b16 %v1988, %v1984
    %v2621 = vpack.c.b16 %v1989, %v1985
    %v2622 = vpack.c.b16 %v1990, %v1986
    %v2623 = vpack.c.b16 %v1995, %v1991
    %v2624 = vpack.c.b16 %v1996, %v1992
    %v2625 = vpack.c.b16 %v1997, %v1993
    %v2626 = vpack.c.b16 %v1998, %v1994
    %v2627 = vpack.c.b16 %v2003, %v1999
    %v2628 = vpack.c.b16 %v2004, %v2000
    %v2629 = vpack.c.b16 %v2005, %v2001
    %v2630 = vpack.c.b16 %v2006, %v2002
    %v2631 = vpack.c.b16 %v2011, %v2007
    %v2632 = vpack.c.b16 %v2012, %v2008
    %v2633 = vpack.c.b16 %v2013, %v2009
    %v2634 = vpack.c.b16 %v2014, %v2010
    %v2635 = vpack.c.b16 %v2019, %v2015
    %v2636 = vpack.c.b16 %v2020, %v2016
    %v2637 = vpack.c.b16 %v2021, %v2017
    %v2638 = vpack.c.b16 %v2022, %v2018
    %v2639 = vpack.c.b16 %v2027, %v2023
    %v2640 = vpack.c.b16 %v2028, %v2024
    %v2641 = vpack.c.b16 %v2029, %v2025
    %v2642 = vpack.c.b16 %v2030, %v2026
    %v2643 = vpack.c.b16 %v2035, %v2031
    %v2644 = vpack.c.b16 %v2036, %v2032
    %v2645 = vpack.c.b16 %v2037, %v2033
    %v2646 = vpack.c.b16 %v2038, %v2034
    %v2647 = vpack.c.b16 %v2043, %v2039
    %v2648 = vpack.c.b16 %v2044, %v2040
    %v2649 = vpack.c.b16 %v2045, %v2041
    %v2650 = vpack.c.b16 %v2046, %v2042
    %v2651 = vpack.c.b16 %v2051, %v2047
    %v2652 = vpack.c.b16 %v2052, %v2048
    %v2653 = vpack.c.b16 %v2053, %v2049
    %v2654 = vpack.c.b16 %v2054, %v2050
    %v2655 = vpack.c.b16 %v2059, %v2055
    %v2656 = vpack.c.b16 %v2060, %v2056
    %v2657 = vpack.c.b16 %v2061, %v2057
    %v2658 = vpack.c.b16 %v2062, %v2058
    %v2659 = vpack.c.b16 %v2067, %v2063
    %v2660 = vpack.c.b16 %v2068, %v2064
    %v2661 = vpack.c.b16 %v2069, %v2065
    %v2662 = vpack.c.b16 %v2070, %v2066
    %v2663 = vpack.c.b16 %v2075, %v2071
    %v2664 = vpack.c.b16 %v2076, %v2072
    %v2665 = vpack.c.b16 %v2077, %v2073
    %v2666 = vpack.c.b16 %v2078, %v2074
    %v2667 = vpack.c.b16 %v2083, %v2079
    %v2668 = vpack.c.b16 %v2084, %v2080
    %v2669 = vpack.c.b16 %v2085, %v2081
    %v2670 = vpack.c.b16 %v2086, %v2082
    %v2671 = vpack.c.b16 %v2091, %v2087
    %v2672 = vpack.c.b16 %v2092, %v2088
    %v2673 = vpack.c.b16 %v2093, %v2089
    %v2674 = vpack.c.b16 %v2094, %v2090
    %v2675 = vpack.c.b16 %v2099, %v2095
    %v2676 = vpack.c.b16 %v2100, %v2096
    %v2677 = vpack.c.b16 %v2101, %v2097
    %v2678 = vpack.c.b16 %v2102, %v2098
    %v2679 = vpack.c.b16 %v2107, %v2103
    %v2680 = vpack.c.b16 %v2108, %v2104
    %v2681 = vpack.c.b16 %v2109, %v2105
    %v2682 = vpack.c.b16 %v2110, %v2106
    %v2683 = vpack.c.b16 %v2115, %v2111
    %v2684 = vpack.c.b16 %v2116, %v2112
    %v2685 = vpack.c.b16 %v2117, %v2113
    %v2686 = vpack.c.b16 %v2118, %v2114
    %v2687 = vpack.c.b16 %v2123, %v2119
    %v2688 = vpack.c.b16 %v2124, %v2120
    %v2689 = vpack.c.b16 %v2125, %v2121
    %v2690 = vpack.c.b16 %v2126, %v2122
    %v2691 = vpack.c.b16 %v2131, %v2127
    %v2692 = vpack.c.b16 %v2132, %v2128
    %v2693 = vpack.c.b16 %v2133, %v2129
    %v2694 = vpack.c.b16 %v2134, %v2130
    %v2695 = vpack.c.b16 %v2139, %v2135
    %v2696 = vpack.c.b16 %v2140, %v2136
    %v2697 = vpack.c.b16 %v2141, %v2137
    %v2698 = vpack.c.b16 %v2142, %v2138
    %v2699 = vpack.c.b16 %v2147, %v2143
    %v2700 = vpack.c.b16 %v2148, %v2144
    %v2701 = vpack.c.b16 %v2149, %v2145
    %v2702 = vpack.c.b16 %v2150, %v2146
    %v2703 = vpack.c.b16 %v2155, %v2151
    %v2704 = vpack.c.b16 %v2156, %v2152
    %v2705 = vpack.c.b16 %v2157, %v2153
    %v2706 = vpack.c.b16 %v2158, %v2154
    %v2707 = vpack.c.b16 %v2163, %v2159
    %v2708 = vpack.c.b16 %v2164, %v2160
    %v2709 = vpack.c.b16 %v2165, %v2161
    %v2710 = vpack.c.b16 %v2166, %v2162
    %v2711 = vpack.c.b16 %v2171, %v2167
    %v2712 = vpack.c.b16 %v2172, %v2168
    %v2713 = vpack.c.b16 %v2173, %v2169
    %v2714 = vpack.c.b16 %v2174, %v2170
    %v2715 = vpack.c.b16 %v2179, %v2175
    %v2716 = vpack.c.b16 %v2180, %v2176
    %v2717 = vpack.c.b16 %v2181, %v2177
    %v2718 = vpack.c.b16 %v2182, %v2178
    %v2719 = vpack.c.b16 %v2187, %v2183
    %v2720 = vpack.c.b16 %v2188, %v2184
    %v2721 = vpack.c.b16 %v2189, %v2185
    %v2722 = vpack.c.b16 %v2190, %v2186
    %v2723 = vpack.c.b16 %v2195, %v2191
    %v2724 = vpack.c.b16 %v2196, %v2192
    %v2725 = vpack.c.b16 %v2197, %v2193
    %v2726 = vpack.c.b16 %v2198, %v2194
    %v2727 = vpack.c.b16 %v2203, %v2199
    %v2728 = vpack.c.b16 %v2204, %v2200
    %v2729 = vpack.c.b16 %v2205, %v2201
    %v2730 = vpack.c.b16 %v2206, %v2202
    %v2731 = vpack.c.b16 %v2211, %v2207
    %v2732 = vpack.c.b16 %v2212, %v2208
    %v2733 = vpack.c.b16 %v2213, %v2209
    %v2734 = vpack.c.b16 %v2214, %v2210
    %v2735 = vpack.c.b16 %v2219, %v2215
    %v2736 = vpack.c.b16 %v2220, %v2216
    %v2737 = vpack.c.b16 %v2221, %v2217
    %v2738 = vpack.c.b16 %v2222, %v2218
    %v2739 = vpack.c.b16 %v2227, %v2223
    %v2740 = vpack.c.b16 %v2228, %v2224
    %v2741 = vpack.c.b16 %v2229, %v2225
    %v2742 = vpack.c.b16 %v2230, %v2226
    %3255 = vmatpush.bf16.msra.mxu0 %v2259
    %3256 = vmatpush.bf16.msra.mxu0 %v2255
    %3257 = vmatpush.bf16.msra.mxu0 %v2251
    %3258 = vmatpush.bf16.msra.mxu0 %v2247
    %3259 = vmatpush.bf16.msra.mxu0 %v2243
    %3260 = vmatpush.bf16.msra.mxu0 %v2239
    %3261 = vmatpush.bf16.msra.mxu0 %v2235
    %3262 = vmatpush.bf16.msra.mxu0 %v2231
    %3263 = vmatmul.bf16.gmra.mxu0 %v141
    %v3264 = vpop.f32.mrf.mxu0
    %v3265 = vadd.f32 %v687, %v3264
    %v3266 = vpop.f32.mrf.mxu0
    %v3267 = vadd.f32 %v687, %v3266
    %3268 = vmatmul.bf16.gmra.mxu0 %v157
    %v3269 = vpop.f32.mrf.mxu0
    %v3270 = vadd.f32 %v687, %v3269
    %v3271 = vpop.f32.mrf.mxu0
    %v3272 = vadd.f32 %v687, %v3271
    %3273 = vdwg.mxu0
    %3274 = vmatpush.bf16.msra.mxu0 %v2291
    %3275 = vmatpush.bf16.msra.mxu0 %v2287
    %3276 = vmatpush.bf16.msra.mxu0 %v2283
    %3277 = vmatpush.bf16.msra.mxu0 %v2279
    %3278 = vmatpush.bf16.msra.mxu0 %v2275
    %3279 = vmatpush.bf16.msra.mxu0 %v2271
    %3280 = vmatpush.bf16.msra.mxu0 %v2267
    %3281 = vmatpush.bf16.msra.mxu0 %v2263
    %3282 = vmatmul.bf16.gmra.mxu0 %v142
    %v3283 = vpop.f32.mrf.mxu0
    %v3284 = vadd.f32 %v3265, %v3283
    %v3285 = vpop.f32.mrf.mxu0
    %v3286 = vadd.f32 %v3267, %v3285
    %3287 = vmatmul.bf16.gmra.mxu0 %v158
    %v3288 = vpop.f32.mrf.mxu0
    %v3289 = vadd.f32 %v3270, %v3288
    %v3290 = vpop.f32.mrf.mxu0
    %v3291 = vadd.f32 %v3272, %v3290
    %3292 = vdwg.mxu0
    %3293 = vmatpush.bf16.msra.mxu0 %v2323
    %3294 = vmatpush.bf16.msra.mxu0 %v2319
    %3295 = vmatpush.bf16.msra.mxu0 %v2315
    %3296 = vmatpush.bf16.msra.mxu0 %v2311
    %3297 = vmatpush.bf16.msra.mxu0 %v2307
    %3298 = vmatpush.bf16.msra.mxu0 %v2303
    %3299 = vmatpush.bf16.msra.mxu0 %v2299
    %3300 = vmatpush.bf16.msra.mxu0 %v2295
    %3301 = vmatmul.bf16.gmra.mxu0 %v143
    %v3302 = vpop.f32.mrf.mxu0
    %v3303 = vadd.f32 %v3284, %v3302
    %v3304 = vpop.f32.mrf.mxu0
    %v3305 = vadd.f32 %v3286, %v3304
    %3306 = vmatmul.bf16.gmra.mxu0 %v159
    %v3307 = vpop.f32.mrf.mxu0
    %v3308 = vadd.f32 %v3289, %v3307
    %v3309 = vpop.f32.mrf.mxu0
    %v3310 = vadd.f32 %v3291, %v3309
    %3311 = vdwg.mxu0
    %3312 = vmatpush.bf16.msra.mxu0 %v2355
    %3313 = vmatpush.bf16.msra.mxu0 %v2351
    %3314 = vmatpush.bf16.msra.mxu0 %v2347
    %3315 = vmatpush.bf16.msra.mxu0 %v2343
    %3316 = vmatpush.bf16.msra.mxu0 %v2339
    %3317 = vmatpush.bf16.msra.mxu0 %v2335
    %3318 = vmatpush.bf16.msra.mxu0 %v2331
    %3319 = vmatpush.bf16.msra.mxu0 %v2327
    %3320 = vmatmul.bf16.gmra.mxu0 %v144
    %v3321 = vpop.f32.mrf.mxu0
    %v3322 = vadd.f32 %v3303, %v3321
    %v3323 = vpop.f32.mrf.mxu0
    %v3324 = vadd.f32 %v3305, %v3323
    %3325 = vmatmul.bf16.gmra.mxu0 %v160
    %v3326 = vpop.f32.mrf.mxu0
    %v3327 = vadd.f32 %v3308, %v3326
    %v3328 = vpop.f32.mrf.mxu0
    %v3329 = vadd.f32 %v3310, %v3328
    %3330 = vdwg.mxu0
    %3331 = vmatpush.bf16.msra.mxu0 %v2387
    %3332 = vmatpush.bf16.msra.mxu0 %v2383
    %3333 = vmatpush.bf16.msra.mxu0 %v2379
    %3334 = vmatpush.bf16.msra.mxu0 %v2375
    %3335 = vmatpush.bf16.msra.mxu0 %v2371
    %3336 = vmatpush.bf16.msra.mxu0 %v2367
    %3337 = vmatpush.bf16.msra.mxu0 %v2363
    %3338 = vmatpush.bf16.msra.mxu0 %v2359
    %3339 = vmatmul.bf16.gmra.mxu0 %v145
    %v3340 = vpop.f32.mrf.mxu0
    %v3341 = vadd.f32 %v3322, %v3340
    %v3342 = vpop.f32.mrf.mxu0
    %v3343 = vadd.f32 %v3324, %v3342
    %3344 = vmatmul.bf16.gmra.mxu0 %v161
    %v3345 = vpop.f32.mrf.mxu0
    %v3346 = vadd.f32 %v3327, %v3345
    %v3347 = vpop.f32.mrf.mxu0
    %v3348 = vadd.f32 %v3329, %v3347
    %3349 = vdwg.mxu0
    %3350 = vmatpush.bf16.msra.mxu0 %v2419
    %3351 = vmatpush.bf16.msra.mxu0 %v2415
    %3352 = vmatpush.bf16.msra.mxu0 %v2411
    %3353 = vmatpush.bf16.msra.mxu0 %v2407
    %3354 = vmatpush.bf16.msra.mxu0 %v2403
    %3355 = vmatpush.bf16.msra.mxu0 %v2399
    %3356 = vmatpush.bf16.msra.mxu0 %v2395
    %3357 = vmatpush.bf16.msra.mxu0 %v2391
    %3358 = vmatmul.bf16.gmra.mxu0 %v146
    %v3359 = vpop.f32.mrf.mxu0
    %v3360 = vadd.f32 %v3341, %v3359
    %v3361 = vpop.f32.mrf.mxu0
    %v3362 = vadd.f32 %v3343, %v3361
    %3363 = vmatmul.bf16.gmra.mxu0 %v162
    %v3364 = vpop.f32.mrf.mxu0
    %v3365 = vadd.f32 %v3346, %v3364
    %v3366 = vpop.f32.mrf.mxu0
    %v3367 = vadd.f32 %v3348, %v3366
    %3368 = vdwg.mxu0
    %3369 = vmatpush.bf16.msra.mxu0 %v2451
    %3370 = vmatpush.bf16.msra.mxu0 %v2447
    %3371 = vmatpush.bf16.msra.mxu0 %v2443
    %3372 = vmatpush.bf16.msra.mxu0 %v2439
    %3373 = vmatpush.bf16.msra.mxu0 %v2435
    %3374 = vmatpush.bf16.msra.mxu0 %v2431
    %3375 = vmatpush.bf16.msra.mxu0 %v2427
    %3376 = vmatpush.bf16.msra.mxu0 %v2423
    %3377 = vmatmul.bf16.gmra.mxu0 %v147
    %v3378 = vpop.f32.mrf.mxu0
    %v3379 = vadd.f32 %v3360, %v3378
    %v3380 = vpop.f32.mrf.mxu0
    %v3381 = vadd.f32 %v3362, %v3380
    %3382 = vmatmul.bf16.gmra.mxu0 %v163
    %v3383 = vpop.f32.mrf.mxu0
    %v3384 = vadd.f32 %v3365, %v3383
    %v3385 = vpop.f32.mrf.mxu0
    %v3386 = vadd.f32 %v3367, %v3385
    %3387 = vdwg.mxu0
    %3388 = vmatpush.bf16.msra.mxu0 %v2483
    %3389 = vmatpush.bf16.msra.mxu0 %v2479
    %3390 = vmatpush.bf16.msra.mxu0 %v2475
    %3391 = vmatpush.bf16.msra.mxu0 %v2471
    %3392 = vmatpush.bf16.msra.mxu0 %v2467
    %3393 = vmatpush.bf16.msra.mxu0 %v2463
    %3394 = vmatpush.bf16.msra.mxu0 %v2459
    %3395 = vmatpush.bf16.msra.mxu0 %v2455
    %3396 = vmatmul.bf16.gmra.mxu0 %v148
    %v3397 = vpop.f32.mrf.mxu0
    %v3398 = vadd.f32 %v3379, %v3397
    %v3399 = vpop.f32.mrf.mxu0
    %v3400 = vadd.f32 %v3381, %v3399
    %3401 = vmatmul.bf16.gmra.mxu0 %v164
    %v3402 = vpop.f32.mrf.mxu0
    %v3403 = vadd.f32 %v3384, %v3402
    %v3404 = vpop.f32.mrf.mxu0
    %v3405 = vadd.f32 %v3386, %v3404
    %3406 = vdwg.mxu0
    %3407 = vmatpush.bf16.msra.mxu0 %v2515
    %3408 = vmatpush.bf16.msra.mxu0 %v2511
    %3409 = vmatpush.bf16.msra.mxu0 %v2507
    %3410 = vmatpush.bf16.msra.mxu0 %v2503
    %3411 = vmatpush.bf16.msra.mxu0 %v2499
    %3412 = vmatpush.bf16.msra.mxu0 %v2495
    %3413 = vmatpush.bf16.msra.mxu0 %v2491
    %3414 = vmatpush.bf16.msra.mxu0 %v2487
    %3415 = vmatmul.bf16.gmra.mxu0 %v149
    %v3416 = vpop.f32.mrf.mxu0
    %v3417 = vadd.f32 %v3398, %v3416
    %v3418 = vpop.f32.mrf.mxu0
    %v3419 = vadd.f32 %v3400, %v3418
    %3420 = vmatmul.bf16.gmra.mxu0 %v165
    %v3421 = vpop.f32.mrf.mxu0
    %v3422 = vadd.f32 %v3403, %v3421
    %v3423 = vpop.f32.mrf.mxu0
    %v3424 = vadd.f32 %v3405, %v3423
    %3425 = vdwg.mxu0
    %3426 = vmatpush.bf16.msra.mxu0 %v2547
    %3427 = vmatpush.bf16.msra.mxu0 %v2543
    %3428 = vmatpush.bf16.msra.mxu0 %v2539
    %3429 = vmatpush.bf16.msra.mxu0 %v2535
    %3430 = vmatpush.bf16.msra.mxu0 %v2531
    %3431 = vmatpush.bf16.msra.mxu0 %v2527
    %3432 = vmatpush.bf16.msra.mxu0 %v2523
    %3433 = vmatpush.bf16.msra.mxu0 %v2519
    %3434 = vmatmul.bf16.gmra.mxu0 %v150
    %v3435 = vpop.f32.mrf.mxu0
    %v3436 = vadd.f32 %v3417, %v3435
    %v3437 = vpop.f32.mrf.mxu0
    %v3438 = vadd.f32 %v3419, %v3437
    %3439 = vmatmul.bf16.gmra.mxu0 %v166
    %v3440 = vpop.f32.mrf.mxu0
    %v3441 = vadd.f32 %v3422, %v3440
    %v3442 = vpop.f32.mrf.mxu0
    %v3443 = vadd.f32 %v3424, %v3442
    %3444 = vdwg.mxu0
    %3445 = vmatpush.bf16.msra.mxu0 %v2579
    %3446 = vmatpush.bf16.msra.mxu0 %v2575
    %3447 = vmatpush.bf16.msra.mxu0 %v2571
    %3448 = vmatpush.bf16.msra.mxu0 %v2567
    %3449 = vmatpush.bf16.msra.mxu0 %v2563
    %3450 = vmatpush.bf16.msra.mxu0 %v2559
    %3451 = vmatpush.bf16.msra.mxu0 %v2555
    %3452 = vmatpush.bf16.msra.mxu0 %v2551
    %3453 = vmatmul.bf16.gmra.mxu0 %v151
    %v3454 = vpop.f32.mrf.mxu0
    %v3455 = vadd.f32 %v3436, %v3454
    %v3456 = vpop.f32.mrf.mxu0
    %v3457 = vadd.f32 %v3438, %v3456
    %3458 = vmatmul.bf16.gmra.mxu0 %v167
    %v3459 = vpop.f32.mrf.mxu0
    %v3460 = vadd.f32 %v3441, %v3459
    %v3461 = vpop.f32.mrf.mxu0
    %v3462 = vadd.f32 %v3443, %v3461
    %3463 = vdwg.mxu0
    %3464 = vmatpush.bf16.msra.mxu0 %v2611
    %3465 = vmatpush.bf16.msra.mxu0 %v2607
    %3466 = vmatpush.bf16.msra.mxu0 %v2603
    %3467 = vmatpush.bf16.msra.mxu0 %v2599
    %3468 = vmatpush.bf16.msra.mxu0 %v2595
    %3469 = vmatpush.bf16.msra.mxu0 %v2591
    %3470 = vmatpush.bf16.msra.mxu0 %v2587
    %3471 = vmatpush.bf16.msra.mxu0 %v2583
    %3472 = vmatmul.bf16.gmra.mxu0 %v152
    %v3473 = vpop.f32.mrf.mxu0
    %v3474 = vadd.f32 %v3455, %v3473
    %v3475 = vpop.f32.mrf.mxu0
    %v3476 = vadd.f32 %v3457, %v3475
    %3477 = vmatmul.bf16.gmra.mxu0 %v168
    %v3478 = vpop.f32.mrf.mxu0
    %v3479 = vadd.f32 %v3460, %v3478
    %v3480 = vpop.f32.mrf.mxu0
    %v3481 = vadd.f32 %v3462, %v3480
    %3482 = vdwg.mxu0
    %3483 = vmatpush.bf16.msra.mxu0 %v2643
    %3484 = vmatpush.bf16.msra.mxu0 %v2639
    %3485 = vmatpush.bf16.msra.mxu0 %v2635
    %3486 = vmatpush.bf16.msra.mxu0 %v2631
    %3487 = vmatpush.bf16.msra.mxu0 %v2627
    %3488 = vmatpush.bf16.msra.mxu0 %v2623
    %3489 = vmatpush.bf16.msra.mxu0 %v2619
    %3490 = vmatpush.bf16.msra.mxu0 %v2615
    %3491 = vmatmul.bf16.gmra.mxu0 %v153
    %v3492 = vpop.f32.mrf.mxu0
    %v3493 = vadd.f32 %v3474, %v3492
    %v3494 = vpop.f32.mrf.mxu0
    %v3495 = vadd.f32 %v3476, %v3494
    %3496 = vmatmul.bf16.gmra.mxu0 %v169
    %v3497 = vpop.f32.mrf.mxu0
    %v3498 = vadd.f32 %v3479, %v3497
    %v3499 = vpop.f32.mrf.mxu0
    %v3500 = vadd.f32 %v3481, %v3499
    %3501 = vdwg.mxu0
    %3502 = vmatpush.bf16.msra.mxu0 %v2675
    %3503 = vmatpush.bf16.msra.mxu0 %v2671
    %3504 = vmatpush.bf16.msra.mxu0 %v2667
    %3505 = vmatpush.bf16.msra.mxu0 %v2663
    %3506 = vmatpush.bf16.msra.mxu0 %v2659
    %3507 = vmatpush.bf16.msra.mxu0 %v2655
    %3508 = vmatpush.bf16.msra.mxu0 %v2651
    %3509 = vmatpush.bf16.msra.mxu0 %v2647
    %3510 = vmatmul.bf16.gmra.mxu0 %v154
    %v3511 = vpop.f32.mrf.mxu0
    %v3512 = vadd.f32 %v3493, %v3511
    %v3513 = vpop.f32.mrf.mxu0
    %v3514 = vadd.f32 %v3495, %v3513
    %3515 = vmatmul.bf16.gmra.mxu0 %v170
    %v3516 = vpop.f32.mrf.mxu0
    %v3517 = vadd.f32 %v3498, %v3516
    %v3518 = vpop.f32.mrf.mxu0
    %v3519 = vadd.f32 %v3500, %v3518
    %3520 = vdwg.mxu0
    %3521 = vmatpush.bf16.msra.mxu0 %v2707
    %3522 = vmatpush.bf16.msra.mxu0 %v2703
    %3523 = vmatpush.bf16.msra.mxu0 %v2699
    %3524 = vmatpush.bf16.msra.mxu0 %v2695
    %3525 = vmatpush.bf16.msra.mxu0 %v2691
    %3526 = vmatpush.bf16.msra.mxu0 %v2687
    %3527 = vmatpush.bf16.msra.mxu0 %v2683
    %3528 = vmatpush.bf16.msra.mxu0 %v2679
    %3529 = vmatmul.bf16.gmra.mxu0 %v155
    %v3530 = vpop.f32.mrf.mxu0
    %v3531 = vadd.f32 %v3512, %v3530
    %v3532 = vpop.f32.mrf.mxu0
    %v3533 = vadd.f32 %v3514, %v3532
    %3534 = vmatmul.bf16.gmra.mxu0 %v171
    %v3535 = vpop.f32.mrf.mxu0
    %v3536 = vadd.f32 %v3517, %v3535
    %v3537 = vpop.f32.mrf.mxu0
    %v3538 = vadd.f32 %v3519, %v3537
    %3539 = vdwg.mxu0
    %3540 = vmatpush.bf16.msra.mxu0 %v2739
    %3541 = vmatpush.bf16.msra.mxu0 %v2735
    %3542 = vmatpush.bf16.msra.mxu0 %v2731
    %3543 = vmatpush.bf16.msra.mxu0 %v2727
    %3544 = vmatpush.bf16.msra.mxu0 %v2723
    %3545 = vmatpush.bf16.msra.mxu0 %v2719
    %3546 = vmatpush.bf16.msra.mxu0 %v2715
    %3547 = vmatpush.bf16.msra.mxu0 %v2711
    %3548 = vmatmul.bf16.gmra.mxu0 %v156
    %v3549 = vpop.f32.mrf.mxu0
    %v3550 = vadd.f32 %v3531, %v3549
    %v3551 = vpop.f32.mrf.mxu0
    %v3552 = vadd.f32 %v3533, %v3551
    %3553 = vmatmul.bf16.gmra.mxu0 %v172
    %v3554 = vpop.f32.mrf.mxu0
    %v3555 = vadd.f32 %v3536, %v3554
    %v3556 = vpop.f32.mrf.mxu0
    %v3557 = vadd.f32 %v3538, %v3556
    %3558 = vdwg.mxu0
    %3559 = vmatpush.bf16.msra.mxu0 %v2260
    %3560 = vmatpush.bf16.msra.mxu0 %v2256
    %3561 = vmatpush.bf16.msra.mxu0 %v2252
    %3562 = vmatpush.bf16.msra.mxu0 %v2248
    %3563 = vmatpush.bf16.msra.mxu0 %v2244
    %3564 = vmatpush.bf16.msra.mxu0 %v2240
    %3565 = vmatpush.bf16.msra.mxu0 %v2236
    %3566 = vmatpush.bf16.msra.mxu0 %v2232
    %3567 = vmatmul.bf16.gmra.mxu0 %v141
    %v3568 = vpop.f32.mrf.mxu0
    %v3569 = vadd.f32 %v688, %v3568
    %v3570 = vpop.f32.mrf.mxu0
    %v3571 = vadd.f32 %v688, %v3570
    %3572 = vmatmul.bf16.gmra.mxu0 %v157
    %v3573 = vpop.f32.mrf.mxu0
    %v3574 = vadd.f32 %v688, %v3573
    %v3575 = vpop.f32.mrf.mxu0
    %v3576 = vadd.f32 %v688, %v3575
    %3577 = vdwg.mxu0
    %3578 = vmatpush.bf16.msra.mxu0 %v2292
    %3579 = vmatpush.bf16.msra.mxu0 %v2288
    %3580 = vmatpush.bf16.msra.mxu0 %v2284
    %3581 = vmatpush.bf16.msra.mxu0 %v2280
    %3582 = vmatpush.bf16.msra.mxu0 %v2276
    %3583 = vmatpush.bf16.msra.mxu0 %v2272
    %3584 = vmatpush.bf16.msra.mxu0 %v2268
    %3585 = vmatpush.bf16.msra.mxu0 %v2264
    %3586 = vmatmul.bf16.gmra.mxu0 %v142
    %v3587 = vpop.f32.mrf.mxu0
    %v3588 = vadd.f32 %v3569, %v3587
    %v3589 = vpop.f32.mrf.mxu0
    %v3590 = vadd.f32 %v3571, %v3589
    %3591 = vmatmul.bf16.gmra.mxu0 %v158
    %v3592 = vpop.f32.mrf.mxu0
    %v3593 = vadd.f32 %v3574, %v3592
    %v3594 = vpop.f32.mrf.mxu0
    %v3595 = vadd.f32 %v3576, %v3594
    %3596 = vdwg.mxu0
    %3597 = vmatpush.bf16.msra.mxu0 %v2324
    %3598 = vmatpush.bf16.msra.mxu0 %v2320
    %3599 = vmatpush.bf16.msra.mxu0 %v2316
    %3600 = vmatpush.bf16.msra.mxu0 %v2312
    %3601 = vmatpush.bf16.msra.mxu0 %v2308
    %3602 = vmatpush.bf16.msra.mxu0 %v2304
    %3603 = vmatpush.bf16.msra.mxu0 %v2300
    %3604 = vmatpush.bf16.msra.mxu0 %v2296
    %3605 = vmatmul.bf16.gmra.mxu0 %v143
    %v3606 = vpop.f32.mrf.mxu0
    %v3607 = vadd.f32 %v3588, %v3606
    %v3608 = vpop.f32.mrf.mxu0
    %v3609 = vadd.f32 %v3590, %v3608
    %3610 = vmatmul.bf16.gmra.mxu0 %v159
    %v3611 = vpop.f32.mrf.mxu0
    %v3612 = vadd.f32 %v3593, %v3611
    %v3613 = vpop.f32.mrf.mxu0
    %v3614 = vadd.f32 %v3595, %v3613
    %3615 = vdwg.mxu0
    %3616 = vmatpush.bf16.msra.mxu0 %v2356
    %3617 = vmatpush.bf16.msra.mxu0 %v2352
    %3618 = vmatpush.bf16.msra.mxu0 %v2348
    %3619 = vmatpush.bf16.msra.mxu0 %v2344
    %3620 = vmatpush.bf16.msra.mxu0 %v2340
    %3621 = vmatpush.bf16.msra.mxu0 %v2336
    %3622 = vmatpush.bf16.msra.mxu0 %v2332
    %3623 = vmatpush.bf16.msra.mxu0 %v2328
    %3624 = vmatmul.bf16.gmra.mxu0 %v144
    %v3625 = vpop.f32.mrf.mxu0
    %v3626 = vadd.f32 %v3607, %v3625
    %v3627 = vpop.f32.mrf.mxu0
    %v3628 = vadd.f32 %v3609, %v3627
    %3629 = vmatmul.bf16.gmra.mxu0 %v160
    %v3630 = vpop.f32.mrf.mxu0
    %v3631 = vadd.f32 %v3612, %v3630
    %v3632 = vpop.f32.mrf.mxu0
    %v3633 = vadd.f32 %v3614, %v3632
    %3634 = vdwg.mxu0
    %3635 = vmatpush.bf16.msra.mxu0 %v2388
    %3636 = vmatpush.bf16.msra.mxu0 %v2384
    %3637 = vmatpush.bf16.msra.mxu0 %v2380
    %3638 = vmatpush.bf16.msra.mxu0 %v2376
    %3639 = vmatpush.bf16.msra.mxu0 %v2372
    %3640 = vmatpush.bf16.msra.mxu0 %v2368
    %3641 = vmatpush.bf16.msra.mxu0 %v2364
    %3642 = vmatpush.bf16.msra.mxu0 %v2360
    %3643 = vmatmul.bf16.gmra.mxu0 %v145
    %v3644 = vpop.f32.mrf.mxu0
    %v3645 = vadd.f32 %v3626, %v3644
    %v3646 = vpop.f32.mrf.mxu0
    %v3647 = vadd.f32 %v3628, %v3646
    %3648 = vmatmul.bf16.gmra.mxu0 %v161
    %v3649 = vpop.f32.mrf.mxu0
    %v3650 = vadd.f32 %v3631, %v3649
    %v3651 = vpop.f32.mrf.mxu0
    %v3652 = vadd.f32 %v3633, %v3651
    %3653 = vdwg.mxu0
    %3654 = vmatpush.bf16.msra.mxu0 %v2420
    %3655 = vmatpush.bf16.msra.mxu0 %v2416
    %3656 = vmatpush.bf16.msra.mxu0 %v2412
    %3657 = vmatpush.bf16.msra.mxu0 %v2408
    %3658 = vmatpush.bf16.msra.mxu0 %v2404
    %3659 = vmatpush.bf16.msra.mxu0 %v2400
    %3660 = vmatpush.bf16.msra.mxu0 %v2396
    %3661 = vmatpush.bf16.msra.mxu0 %v2392
    %3662 = vmatmul.bf16.gmra.mxu0 %v146
    %v3663 = vpop.f32.mrf.mxu0
    %v3664 = vadd.f32 %v3645, %v3663
    %v3665 = vpop.f32.mrf.mxu0
    %v3666 = vadd.f32 %v3647, %v3665
    %3667 = vmatmul.bf16.gmra.mxu0 %v162
    %v3668 = vpop.f32.mrf.mxu0
    %v3669 = vadd.f32 %v3650, %v3668
    %v3670 = vpop.f32.mrf.mxu0
    %v3671 = vadd.f32 %v3652, %v3670
    %3672 = vdwg.mxu0
    %3673 = vmatpush.bf16.msra.mxu0 %v2452
    %3674 = vmatpush.bf16.msra.mxu0 %v2448
    %3675 = vmatpush.bf16.msra.mxu0 %v2444
    %3676 = vmatpush.bf16.msra.mxu0 %v2440
    %3677 = vmatpush.bf16.msra.mxu0 %v2436
    %3678 = vmatpush.bf16.msra.mxu0 %v2432
    %3679 = vmatpush.bf16.msra.mxu0 %v2428
    %3680 = vmatpush.bf16.msra.mxu0 %v2424
    %3681 = vmatmul.bf16.gmra.mxu0 %v147
    %v3682 = vpop.f32.mrf.mxu0
    %v3683 = vadd.f32 %v3664, %v3682
    %v3684 = vpop.f32.mrf.mxu0
    %v3685 = vadd.f32 %v3666, %v3684
    %3686 = vmatmul.bf16.gmra.mxu0 %v163
    %v3687 = vpop.f32.mrf.mxu0
    %v3688 = vadd.f32 %v3669, %v3687
    %v3689 = vpop.f32.mrf.mxu0
    %v3690 = vadd.f32 %v3671, %v3689
    %3691 = vdwg.mxu0
    %3692 = vmatpush.bf16.msra.mxu0 %v2484
    %3693 = vmatpush.bf16.msra.mxu0 %v2480
    %3694 = vmatpush.bf16.msra.mxu0 %v2476
    %3695 = vmatpush.bf16.msra.mxu0 %v2472
    %3696 = vmatpush.bf16.msra.mxu0 %v2468
    %3697 = vmatpush.bf16.msra.mxu0 %v2464
    %3698 = vmatpush.bf16.msra.mxu0 %v2460
    %3699 = vmatpush.bf16.msra.mxu0 %v2456
    %3700 = vmatmul.bf16.gmra.mxu0 %v148
    %v3701 = vpop.f32.mrf.mxu0
    %v3702 = vadd.f32 %v3683, %v3701
    %v3703 = vpop.f32.mrf.mxu0
    %v3704 = vadd.f32 %v3685, %v3703
    %3705 = vmatmul.bf16.gmra.mxu0 %v164
    %v3706 = vpop.f32.mrf.mxu0
    %v3707 = vadd.f32 %v3688, %v3706
    %v3708 = vpop.f32.mrf.mxu0
    %v3709 = vadd.f32 %v3690, %v3708
    %3710 = vdwg.mxu0
    %3711 = vmatpush.bf16.msra.mxu0 %v2516
    %3712 = vmatpush.bf16.msra.mxu0 %v2512
    %3713 = vmatpush.bf16.msra.mxu0 %v2508
    %3714 = vmatpush.bf16.msra.mxu0 %v2504
    %3715 = vmatpush.bf16.msra.mxu0 %v2500
    %3716 = vmatpush.bf16.msra.mxu0 %v2496
    %3717 = vmatpush.bf16.msra.mxu0 %v2492
    %3718 = vmatpush.bf16.msra.mxu0 %v2488
    %3719 = vmatmul.bf16.gmra.mxu0 %v149
    %v3720 = vpop.f32.mrf.mxu0
    %v3721 = vadd.f32 %v3702, %v3720
    %v3722 = vpop.f32.mrf.mxu0
    %v3723 = vadd.f32 %v3704, %v3722
    %3724 = vmatmul.bf16.gmra.mxu0 %v165
    %v3725 = vpop.f32.mrf.mxu0
    %v3726 = vadd.f32 %v3707, %v3725
    %v3727 = vpop.f32.mrf.mxu0
    %v3728 = vadd.f32 %v3709, %v3727
    %3729 = vdwg.mxu0
    %3730 = vmatpush.bf16.msra.mxu0 %v2548
    %3731 = vmatpush.bf16.msra.mxu0 %v2544
    %3732 = vmatpush.bf16.msra.mxu0 %v2540
    %3733 = vmatpush.bf16.msra.mxu0 %v2536
    %3734 = vmatpush.bf16.msra.mxu0 %v2532
    %3735 = vmatpush.bf16.msra.mxu0 %v2528
    %3736 = vmatpush.bf16.msra.mxu0 %v2524
    %3737 = vmatpush.bf16.msra.mxu0 %v2520
    %3738 = vmatmul.bf16.gmra.mxu0 %v150
    %v3739 = vpop.f32.mrf.mxu0
    %v3740 = vadd.f32 %v3721, %v3739
    %v3741 = vpop.f32.mrf.mxu0
    %v3742 = vadd.f32 %v3723, %v3741
    %3743 = vmatmul.bf16.gmra.mxu0 %v166
    %v3744 = vpop.f32.mrf.mxu0
    %v3745 = vadd.f32 %v3726, %v3744
    %v3746 = vpop.f32.mrf.mxu0
    %v3747 = vadd.f32 %v3728, %v3746
    %3748 = vdwg.mxu0
    %3749 = vmatpush.bf16.msra.mxu0 %v2580
    %3750 = vmatpush.bf16.msra.mxu0 %v2576
    %3751 = vmatpush.bf16.msra.mxu0 %v2572
    %3752 = vmatpush.bf16.msra.mxu0 %v2568
    %3753 = vmatpush.bf16.msra.mxu0 %v2564
    %3754 = vmatpush.bf16.msra.mxu0 %v2560
    %3755 = vmatpush.bf16.msra.mxu0 %v2556
    %3756 = vmatpush.bf16.msra.mxu0 %v2552
    %3757 = vmatmul.bf16.gmra.mxu0 %v151
    %v3758 = vpop.f32.mrf.mxu0
    %v3759 = vadd.f32 %v3740, %v3758
    %v3760 = vpop.f32.mrf.mxu0
    %v3761 = vadd.f32 %v3742, %v3760
    %3762 = vmatmul.bf16.gmra.mxu0 %v167
    %v3763 = vpop.f32.mrf.mxu0
    %v3764 = vadd.f32 %v3745, %v3763
    %v3765 = vpop.f32.mrf.mxu0
    %v3766 = vadd.f32 %v3747, %v3765
    %3767 = vdwg.mxu0
    %3768 = vmatpush.bf16.msra.mxu0 %v2612
    %3769 = vmatpush.bf16.msra.mxu0 %v2608
    %3770 = vmatpush.bf16.msra.mxu0 %v2604
    %3771 = vmatpush.bf16.msra.mxu0 %v2600
    %3772 = vmatpush.bf16.msra.mxu0 %v2596
    %3773 = vmatpush.bf16.msra.mxu0 %v2592
    %3774 = vmatpush.bf16.msra.mxu0 %v2588
    %3775 = vmatpush.bf16.msra.mxu0 %v2584
    %3776 = vmatmul.bf16.gmra.mxu0 %v152
    %v3777 = vpop.f32.mrf.mxu0
    %v3778 = vadd.f32 %v3759, %v3777
    %v3779 = vpop.f32.mrf.mxu0
    %v3780 = vadd.f32 %v3761, %v3779
    %3781 = vmatmul.bf16.gmra.mxu0 %v168
    %v3782 = vpop.f32.mrf.mxu0
    %v3783 = vadd.f32 %v3764, %v3782
    %v3784 = vpop.f32.mrf.mxu0
    %v3785 = vadd.f32 %v3766, %v3784
    %3786 = vdwg.mxu0
    %3787 = vmatpush.bf16.msra.mxu0 %v2644
    %3788 = vmatpush.bf16.msra.mxu0 %v2640
    %3789 = vmatpush.bf16.msra.mxu0 %v2636
    %3790 = vmatpush.bf16.msra.mxu0 %v2632
    %3791 = vmatpush.bf16.msra.mxu0 %v2628
    %3792 = vmatpush.bf16.msra.mxu0 %v2624
    %3793 = vmatpush.bf16.msra.mxu0 %v2620
    %3794 = vmatpush.bf16.msra.mxu0 %v2616
    %3795 = vmatmul.bf16.gmra.mxu0 %v153
    %v3796 = vpop.f32.mrf.mxu0
    %v3797 = vadd.f32 %v3778, %v3796
    %v3798 = vpop.f32.mrf.mxu0
    %v3799 = vadd.f32 %v3780, %v3798
    %3800 = vmatmul.bf16.gmra.mxu0 %v169
    %v3801 = vpop.f32.mrf.mxu0
    %v3802 = vadd.f32 %v3783, %v3801
    %v3803 = vpop.f32.mrf.mxu0
    %v3804 = vadd.f32 %v3785, %v3803
    %3805 = vdwg.mxu0
    %3806 = vmatpush.bf16.msra.mxu0 %v2676
    %3807 = vmatpush.bf16.msra.mxu0 %v2672
    %3808 = vmatpush.bf16.msra.mxu0 %v2668
    %3809 = vmatpush.bf16.msra.mxu0 %v2664
    %3810 = vmatpush.bf16.msra.mxu0 %v2660
    %3811 = vmatpush.bf16.msra.mxu0 %v2656
    %3812 = vmatpush.bf16.msra.mxu0 %v2652
    %3813 = vmatpush.bf16.msra.mxu0 %v2648
    %3814 = vmatmul.bf16.gmra.mxu0 %v154
    %v3815 = vpop.f32.mrf.mxu0
    %v3816 = vadd.f32 %v3797, %v3815
    %v3817 = vpop.f32.mrf.mxu0
    %v3818 = vadd.f32 %v3799, %v3817
    %3819 = vmatmul.bf16.gmra.mxu0 %v170
    %v3820 = vpop.f32.mrf.mxu0
    %v3821 = vadd.f32 %v3802, %v3820
    %v3822 = vpop.f32.mrf.mxu0
    %v3823 = vadd.f32 %v3804, %v3822
    %3824 = vdwg.mxu0
    %3825 = vmatpush.bf16.msra.mxu0 %v2708
    %3826 = vmatpush.bf16.msra.mxu0 %v2704
    %3827 = vmatpush.bf16.msra.mxu0 %v2700
    %3828 = vmatpush.bf16.msra.mxu0 %v2696
    %3829 = vmatpush.bf16.msra.mxu0 %v2692
    %3830 = vmatpush.bf16.msra.mxu0 %v2688
    %3831 = vmatpush.bf16.msra.mxu0 %v2684
    %3832 = vmatpush.bf16.msra.mxu0 %v2680
    %3833 = vmatmul.bf16.gmra.mxu0 %v155
    %v3834 = vpop.f32.mrf.mxu0
    %v3835 = vadd.f32 %v3816, %v3834
    %v3836 = vpop.f32.mrf.mxu0
    %v3837 = vadd.f32 %v3818, %v3836
    %3838 = vmatmul.bf16.gmra.mxu0 %v171
    %v3839 = vpop.f32.mrf.mxu0
    %v3840 = vadd.f32 %v3821, %v3839
    %v3841 = vpop.f32.mrf.mxu0
    %v3842 = vadd.f32 %v3823, %v3841
    %3843 = vdwg.mxu0
    %3844 = vmatpush.bf16.msra.mxu0 %v2740
    %3845 = vmatpush.bf16.msra.mxu0 %v2736
    %3846 = vmatpush.bf16.msra.mxu0 %v2732
    %3847 = vmatpush.bf16.msra.mxu0 %v2728
    %3848 = vmatpush.bf16.msra.mxu0 %v2724
    %3849 = vmatpush.bf16.msra.mxu0 %v2720
    %3850 = vmatpush.bf16.msra.mxu0 %v2716
    %3851 = vmatpush.bf16.msra.mxu0 %v2712
    %3852 = vmatmul.bf16.gmra.mxu0 %v156
    %v3853 = vpop.f32.mrf.mxu0
    %v3854 = vadd.f32 %v3835, %v3853
    %v3855 = vpop.f32.mrf.mxu0
    %v3856 = vadd.f32 %v3837, %v3855
    %3857 = vmatmul.bf16.gmra.mxu0 %v172
    %v3858 = vpop.f32.mrf.mxu0
    %v3859 = vadd.f32 %v3840, %v3858
    %v3860 = vpop.f32.mrf.mxu0
    %v3861 = vadd.f32 %v3842, %v3860
    %3862 = vdwg.mxu0
    %3863 = vmatpush.bf16.msra.mxu0 %v2261
    %3864 = vmatpush.bf16.msra.mxu0 %v2257
    %3865 = vmatpush.bf16.msra.mxu0 %v2253
    %3866 = vmatpush.bf16.msra.mxu0 %v2249
    %3867 = vmatpush.bf16.msra.mxu0 %v2245
    %3868 = vmatpush.bf16.msra.mxu0 %v2241
    %3869 = vmatpush.bf16.msra.mxu0 %v2237
    %3870 = vmatpush.bf16.msra.mxu0 %v2233
    %3871 = vmatmul.bf16.gmra.mxu0 %v141
    %v3872 = vpop.f32.mrf.mxu0
    %v3873 = vadd.f32 %v689, %v3872
    %v3874 = vpop.f32.mrf.mxu0
    %v3875 = vadd.f32 %v689, %v3874
    %3876 = vmatmul.bf16.gmra.mxu0 %v157
    %v3877 = vpop.f32.mrf.mxu0
    %v3878 = vadd.f32 %v689, %v3877
    %v3879 = vpop.f32.mrf.mxu0
    %v3880 = vadd.f32 %v689, %v3879
    %3881 = vdwg.mxu0
    %3882 = vmatpush.bf16.msra.mxu0 %v2293
    %3883 = vmatpush.bf16.msra.mxu0 %v2289
    %3884 = vmatpush.bf16.msra.mxu0 %v2285
    %3885 = vmatpush.bf16.msra.mxu0 %v2281
    %3886 = vmatpush.bf16.msra.mxu0 %v2277
    %3887 = vmatpush.bf16.msra.mxu0 %v2273
    %3888 = vmatpush.bf16.msra.mxu0 %v2269
    %3889 = vmatpush.bf16.msra.mxu0 %v2265
    %3890 = vmatmul.bf16.gmra.mxu0 %v142
    %v3891 = vpop.f32.mrf.mxu0
    %v3892 = vadd.f32 %v3873, %v3891
    %v3893 = vpop.f32.mrf.mxu0
    %v3894 = vadd.f32 %v3875, %v3893
    %3895 = vmatmul.bf16.gmra.mxu0 %v158
    %v3896 = vpop.f32.mrf.mxu0
    %v3897 = vadd.f32 %v3878, %v3896
    %v3898 = vpop.f32.mrf.mxu0
    %v3899 = vadd.f32 %v3880, %v3898
    %3900 = vdwg.mxu0
    %3901 = vmatpush.bf16.msra.mxu0 %v2325
    %3902 = vmatpush.bf16.msra.mxu0 %v2321
    %3903 = vmatpush.bf16.msra.mxu0 %v2317
    %3904 = vmatpush.bf16.msra.mxu0 %v2313
    %3905 = vmatpush.bf16.msra.mxu0 %v2309
    %3906 = vmatpush.bf16.msra.mxu0 %v2305
    %3907 = vmatpush.bf16.msra.mxu0 %v2301
    %3908 = vmatpush.bf16.msra.mxu0 %v2297
    %3909 = vmatmul.bf16.gmra.mxu0 %v143
    %v3910 = vpop.f32.mrf.mxu0
    %v3911 = vadd.f32 %v3892, %v3910
    %v3912 = vpop.f32.mrf.mxu0
    %v3913 = vadd.f32 %v3894, %v3912
    %3914 = vmatmul.bf16.gmra.mxu0 %v159
    %v3915 = vpop.f32.mrf.mxu0
    %v3916 = vadd.f32 %v3897, %v3915
    %v3917 = vpop.f32.mrf.mxu0
    %v3918 = vadd.f32 %v3899, %v3917
    %3919 = vdwg.mxu0
    %3920 = vmatpush.bf16.msra.mxu0 %v2357
    %3921 = vmatpush.bf16.msra.mxu0 %v2353
    %3922 = vmatpush.bf16.msra.mxu0 %v2349
    %3923 = vmatpush.bf16.msra.mxu0 %v2345
    %3924 = vmatpush.bf16.msra.mxu0 %v2341
    %3925 = vmatpush.bf16.msra.mxu0 %v2337
    %3926 = vmatpush.bf16.msra.mxu0 %v2333
    %3927 = vmatpush.bf16.msra.mxu0 %v2329
    %3928 = vmatmul.bf16.gmra.mxu0 %v144
    %v3929 = vpop.f32.mrf.mxu0
    %v3930 = vadd.f32 %v3911, %v3929
    %v3931 = vpop.f32.mrf.mxu0
    %v3932 = vadd.f32 %v3913, %v3931
    %3933 = vmatmul.bf16.gmra.mxu0 %v160
    %v3934 = vpop.f32.mrf.mxu0
    %v3935 = vadd.f32 %v3916, %v3934
    %v3936 = vpop.f32.mrf.mxu0
    %v3937 = vadd.f32 %v3918, %v3936
    %3938 = vdwg.mxu0
    %3939 = vmatpush.bf16.msra.mxu0 %v2389
    %3940 = vmatpush.bf16.msra.mxu0 %v2385
    %3941 = vmatpush.bf16.msra.mxu0 %v2381
    %3942 = vmatpush.bf16.msra.mxu0 %v2377
    %3943 = vmatpush.bf16.msra.mxu0 %v2373
    %3944 = vmatpush.bf16.msra.mxu0 %v2369
    %3945 = vmatpush.bf16.msra.mxu0 %v2365
    %3946 = vmatpush.bf16.msra.mxu0 %v2361
    %3947 = vmatmul.bf16.gmra.mxu0 %v145
    %v3948 = vpop.f32.mrf.mxu0
    %v3949 = vadd.f32 %v3930, %v3948
    %v3950 = vpop.f32.mrf.mxu0
    %v3951 = vadd.f32 %v3932, %v3950
    %3952 = vmatmul.bf16.gmra.mxu0 %v161
    %v3953 = vpop.f32.mrf.mxu0
    %v3954 = vadd.f32 %v3935, %v3953
    %v3955 = vpop.f32.mrf.mxu0
    %v3956 = vadd.f32 %v3937, %v3955
    %3957 = vdwg.mxu0
    %3958 = vmatpush.bf16.msra.mxu0 %v2421
    %3959 = vmatpush.bf16.msra.mxu0 %v2417
    %3960 = vmatpush.bf16.msra.mxu0 %v2413
    %3961 = vmatpush.bf16.msra.mxu0 %v2409
    %3962 = vmatpush.bf16.msra.mxu0 %v2405
    %3963 = vmatpush.bf16.msra.mxu0 %v2401
    %3964 = vmatpush.bf16.msra.mxu0 %v2397
    %3965 = vmatpush.bf16.msra.mxu0 %v2393
    %3966 = vmatmul.bf16.gmra.mxu0 %v146
    %v3967 = vpop.f32.mrf.mxu0
    %v3968 = vadd.f32 %v3949, %v3967
    %v3969 = vpop.f32.mrf.mxu0
    %v3970 = vadd.f32 %v3951, %v3969
    %3971 = vmatmul.bf16.gmra.mxu0 %v162
    %v3972 = vpop.f32.mrf.mxu0
    %v3973 = vadd.f32 %v3954, %v3972
    %v3974 = vpop.f32.mrf.mxu0
    %v3975 = vadd.f32 %v3956, %v3974
    %3976 = vdwg.mxu0
    %3977 = vmatpush.bf16.msra.mxu0 %v2453
    %3978 = vmatpush.bf16.msra.mxu0 %v2449
    %3979 = vmatpush.bf16.msra.mxu0 %v2445
    %3980 = vmatpush.bf16.msra.mxu0 %v2441
    %3981 = vmatpush.bf16.msra.mxu0 %v2437
    %3982 = vmatpush.bf16.msra.mxu0 %v2433
    %3983 = vmatpush.bf16.msra.mxu0 %v2429
    %3984 = vmatpush.bf16.msra.mxu0 %v2425
    %3985 = vmatmul.bf16.gmra.mxu0 %v147
    %v3986 = vpop.f32.mrf.mxu0
    %v3987 = vadd.f32 %v3968, %v3986
    %v3988 = vpop.f32.mrf.mxu0
    %v3989 = vadd.f32 %v3970, %v3988
    %3990 = vmatmul.bf16.gmra.mxu0 %v163
    %v3991 = vpop.f32.mrf.mxu0
    %v3992 = vadd.f32 %v3973, %v3991
    %v3993 = vpop.f32.mrf.mxu0
    %v3994 = vadd.f32 %v3975, %v3993
    %3995 = vdwg.mxu0
    %3996 = vmatpush.bf16.msra.mxu0 %v2485
    %3997 = vmatpush.bf16.msra.mxu0 %v2481
    %3998 = vmatpush.bf16.msra.mxu0 %v2477
    %3999 = vmatpush.bf16.msra.mxu0 %v2473
    %4000 = vmatpush.bf16.msra.mxu0 %v2469
    %4001 = vmatpush.bf16.msra.mxu0 %v2465
    %4002 = vmatpush.bf16.msra.mxu0 %v2461
    %4003 = vmatpush.bf16.msra.mxu0 %v2457
    %4004 = vmatmul.bf16.gmra.mxu0 %v148
    %v4005 = vpop.f32.mrf.mxu0
    %v4006 = vadd.f32 %v3987, %v4005
    %v4007 = vpop.f32.mrf.mxu0
    %v4008 = vadd.f32 %v3989, %v4007
    %4009 = vmatmul.bf16.gmra.mxu0 %v164
    %v4010 = vpop.f32.mrf.mxu0
    %v4011 = vadd.f32 %v3992, %v4010
    %v4012 = vpop.f32.mrf.mxu0
    %v4013 = vadd.f32 %v3994, %v4012
    %4014 = vdwg.mxu0
    %4015 = vmatpush.bf16.msra.mxu0 %v2517
    %4016 = vmatpush.bf16.msra.mxu0 %v2513
    %4017 = vmatpush.bf16.msra.mxu0 %v2509
    %4018 = vmatpush.bf16.msra.mxu0 %v2505
    %4019 = vmatpush.bf16.msra.mxu0 %v2501
    %4020 = vmatpush.bf16.msra.mxu0 %v2497
    %4021 = vmatpush.bf16.msra.mxu0 %v2493
    %4022 = vmatpush.bf16.msra.mxu0 %v2489
    %4023 = vmatmul.bf16.gmra.mxu0 %v149
    %v4024 = vpop.f32.mrf.mxu0
    %v4025 = vadd.f32 %v4006, %v4024
    %v4026 = vpop.f32.mrf.mxu0
    %v4027 = vadd.f32 %v4008, %v4026
    %4028 = vmatmul.bf16.gmra.mxu0 %v165
    %v4029 = vpop.f32.mrf.mxu0
    %v4030 = vadd.f32 %v4011, %v4029
    %v4031 = vpop.f32.mrf.mxu0
    %v4032 = vadd.f32 %v4013, %v4031
    %4033 = vdwg.mxu0
    %4034 = vmatpush.bf16.msra.mxu0 %v2549
    %4035 = vmatpush.bf16.msra.mxu0 %v2545
    %4036 = vmatpush.bf16.msra.mxu0 %v2541
    %4037 = vmatpush.bf16.msra.mxu0 %v2537
    %4038 = vmatpush.bf16.msra.mxu0 %v2533
    %4039 = vmatpush.bf16.msra.mxu0 %v2529
    %4040 = vmatpush.bf16.msra.mxu0 %v2525
    %4041 = vmatpush.bf16.msra.mxu0 %v2521
    %4042 = vmatmul.bf16.gmra.mxu0 %v150
    %v4043 = vpop.f32.mrf.mxu0
    %v4044 = vadd.f32 %v4025, %v4043
    %v4045 = vpop.f32.mrf.mxu0
    %v4046 = vadd.f32 %v4027, %v4045
    %4047 = vmatmul.bf16.gmra.mxu0 %v166
    %v4048 = vpop.f32.mrf.mxu0
    %v4049 = vadd.f32 %v4030, %v4048
    %v4050 = vpop.f32.mrf.mxu0
    %v4051 = vadd.f32 %v4032, %v4050
    %4052 = vdwg.mxu0
    %4053 = vmatpush.bf16.msra.mxu0 %v2581
    %4054 = vmatpush.bf16.msra.mxu0 %v2577
    %4055 = vmatpush.bf16.msra.mxu0 %v2573
    %4056 = vmatpush.bf16.msra.mxu0 %v2569
    %4057 = vmatpush.bf16.msra.mxu0 %v2565
    %4058 = vmatpush.bf16.msra.mxu0 %v2561
    %4059 = vmatpush.bf16.msra.mxu0 %v2557
    %4060 = vmatpush.bf16.msra.mxu0 %v2553
    %4061 = vmatmul.bf16.gmra.mxu0 %v151
    %v4062 = vpop.f32.mrf.mxu0
    %v4063 = vadd.f32 %v4044, %v4062
    %v4064 = vpop.f32.mrf.mxu0
    %v4065 = vadd.f32 %v4046, %v4064
    %4066 = vmatmul.bf16.gmra.mxu0 %v167
    %v4067 = vpop.f32.mrf.mxu0
    %v4068 = vadd.f32 %v4049, %v4067
    %v4069 = vpop.f32.mrf.mxu0
    %v4070 = vadd.f32 %v4051, %v4069
    %4071 = vdwg.mxu0
    %4072 = vmatpush.bf16.msra.mxu0 %v2613
    %4073 = vmatpush.bf16.msra.mxu0 %v2609
    %4074 = vmatpush.bf16.msra.mxu0 %v2605
    %4075 = vmatpush.bf16.msra.mxu0 %v2601
    %4076 = vmatpush.bf16.msra.mxu0 %v2597
    %4077 = vmatpush.bf16.msra.mxu0 %v2593
    %4078 = vmatpush.bf16.msra.mxu0 %v2589
    %4079 = vmatpush.bf16.msra.mxu0 %v2585
    %4080 = vmatmul.bf16.gmra.mxu0 %v152
    %v4081 = vpop.f32.mrf.mxu0
    %v4082 = vadd.f32 %v4063, %v4081
    %v4083 = vpop.f32.mrf.mxu0
    %v4084 = vadd.f32 %v4065, %v4083
    %4085 = vmatmul.bf16.gmra.mxu0 %v168
    %v4086 = vpop.f32.mrf.mxu0
    %v4087 = vadd.f32 %v4068, %v4086
    %v4088 = vpop.f32.mrf.mxu0
    %v4089 = vadd.f32 %v4070, %v4088
    %4090 = vdwg.mxu0
    %4091 = vmatpush.bf16.msra.mxu0 %v2645
    %4092 = vmatpush.bf16.msra.mxu0 %v2641
    %4093 = vmatpush.bf16.msra.mxu0 %v2637
    %4094 = vmatpush.bf16.msra.mxu0 %v2633
    %4095 = vmatpush.bf16.msra.mxu0 %v2629
    %4096 = vmatpush.bf16.msra.mxu0 %v2625
    %4097 = vmatpush.bf16.msra.mxu0 %v2621
    %4098 = vmatpush.bf16.msra.mxu0 %v2617
    %4099 = vmatmul.bf16.gmra.mxu0 %v153
    %v4100 = vpop.f32.mrf.mxu0
    %v4101 = vadd.f32 %v4082, %v4100
    %v4102 = vpop.f32.mrf.mxu0
    %v4103 = vadd.f32 %v4084, %v4102
    %4104 = vmatmul.bf16.gmra.mxu0 %v169
    %v4105 = vpop.f32.mrf.mxu0
    %v4106 = vadd.f32 %v4087, %v4105
    %v4107 = vpop.f32.mrf.mxu0
    %v4108 = vadd.f32 %v4089, %v4107
    %4109 = vdwg.mxu0
    %4110 = vmatpush.bf16.msra.mxu0 %v2677
    %4111 = vmatpush.bf16.msra.mxu0 %v2673
    %4112 = vmatpush.bf16.msra.mxu0 %v2669
    %4113 = vmatpush.bf16.msra.mxu0 %v2665
    %4114 = vmatpush.bf16.msra.mxu0 %v2661
    %4115 = vmatpush.bf16.msra.mxu0 %v2657
    %4116 = vmatpush.bf16.msra.mxu0 %v2653
    %4117 = vmatpush.bf16.msra.mxu0 %v2649
    %4118 = vmatmul.bf16.gmra.mxu0 %v154
    %v4119 = vpop.f32.mrf.mxu0
    %v4120 = vadd.f32 %v4101, %v4119
    %v4121 = vpop.f32.mrf.mxu0
    %v4122 = vadd.f32 %v4103, %v4121
    %4123 = vmatmul.bf16.gmra.mxu0 %v170
    %v4124 = vpop.f32.mrf.mxu0
    %v4125 = vadd.f32 %v4106, %v4124
    %v4126 = vpop.f32.mrf.mxu0
    %v4127 = vadd.f32 %v4108, %v4126
    %4128 = vdwg.mxu0
    %4129 = vmatpush.bf16.msra.mxu0 %v2709
    %4130 = vmatpush.bf16.msra.mxu0 %v2705
    %4131 = vmatpush.bf16.msra.mxu0 %v2701
    %4132 = vmatpush.bf16.msra.mxu0 %v2697
    %4133 = vmatpush.bf16.msra.mxu0 %v2693
    %4134 = vmatpush.bf16.msra.mxu0 %v2689
    %4135 = vmatpush.bf16.msra.mxu0 %v2685
    %4136 = vmatpush.bf16.msra.mxu0 %v2681
    %4137 = vmatmul.bf16.gmra.mxu0 %v155
    %v4138 = vpop.f32.mrf.mxu0
    %v4139 = vadd.f32 %v4120, %v4138
    %v4140 = vpop.f32.mrf.mxu0
    %v4141 = vadd.f32 %v4122, %v4140
    %4142 = vmatmul.bf16.gmra.mxu0 %v171
    %v4143 = vpop.f32.mrf.mxu0
    %v4144 = vadd.f32 %v4125, %v4143
    %v4145 = vpop.f32.mrf.mxu0
    %v4146 = vadd.f32 %v4127, %v4145
    %4147 = vdwg.mxu0
    %4148 = vmatpush.bf16.msra.mxu0 %v2741
    %4149 = vmatpush.bf16.msra.mxu0 %v2737
    %4150 = vmatpush.bf16.msra.mxu0 %v2733
    %4151 = vmatpush.bf16.msra.mxu0 %v2729
    %4152 = vmatpush.bf16.msra.mxu0 %v2725
    %4153 = vmatpush.bf16.msra.mxu0 %v2721
    %4154 = vmatpush.bf16.msra.mxu0 %v2717
    %4155 = vmatpush.bf16.msra.mxu0 %v2713
    %4156 = vmatmul.bf16.gmra.mxu0 %v156
    %v4157 = vpop.f32.mrf.mxu0
    %v4158 = vadd.f32 %v4139, %v4157
    %v4159 = vpop.f32.mrf.mxu0
    %v4160 = vadd.f32 %v4141, %v4159
    %4161 = vmatmul.bf16.gmra.mxu0 %v172
    %v4162 = vpop.f32.mrf.mxu0
    %v4163 = vadd.f32 %v4144, %v4162
    %v4164 = vpop.f32.mrf.mxu0
    %v4165 = vadd.f32 %v4146, %v4164
    %4166 = vdwg.mxu0
    %4167 = vmatpush.bf16.msra.mxu0 %v2262
    %4168 = vmatpush.bf16.msra.mxu0 %v2258
    %4169 = vmatpush.bf16.msra.mxu0 %v2254
    %4170 = vmatpush.bf16.msra.mxu0 %v2250
    %4171 = vmatpush.bf16.msra.mxu0 %v2246
    %4172 = vmatpush.bf16.msra.mxu0 %v2242
    %4173 = vmatpush.bf16.msra.mxu0 %v2238
    %4174 = vmatpush.bf16.msra.mxu0 %v2234
    %4175 = vmatmul.bf16.gmra.mxu0 %v141
    %v4176 = vpop.f32.mrf.mxu0
    %v4177 = vadd.f32 %v690, %v4176
    %v4178 = vpop.f32.mrf.mxu0
    %v4179 = vadd.f32 %v690, %v4178
    %4180 = vmatmul.bf16.gmra.mxu0 %v157
    %v4181 = vpop.f32.mrf.mxu0
    %v4182 = vadd.f32 %v690, %v4181
    %v4183 = vpop.f32.mrf.mxu0
    %v4184 = vadd.f32 %v690, %v4183
    %4185 = vdwg.mxu0
    %4186 = vmatpush.bf16.msra.mxu0 %v2294
    %4187 = vmatpush.bf16.msra.mxu0 %v2290
    %4188 = vmatpush.bf16.msra.mxu0 %v2286
    %4189 = vmatpush.bf16.msra.mxu0 %v2282
    %4190 = vmatpush.bf16.msra.mxu0 %v2278
    %4191 = vmatpush.bf16.msra.mxu0 %v2274
    %4192 = vmatpush.bf16.msra.mxu0 %v2270
    %4193 = vmatpush.bf16.msra.mxu0 %v2266
    %4194 = vmatmul.bf16.gmra.mxu0 %v142
    %v4195 = vpop.f32.mrf.mxu0
    %v4196 = vadd.f32 %v4177, %v4195
    %v4197 = vpop.f32.mrf.mxu0
    %v4198 = vadd.f32 %v4179, %v4197
    %4199 = vmatmul.bf16.gmra.mxu0 %v158
    %v4200 = vpop.f32.mrf.mxu0
    %v4201 = vadd.f32 %v4182, %v4200
    %v4202 = vpop.f32.mrf.mxu0
    %v4203 = vadd.f32 %v4184, %v4202
    %4204 = vdwg.mxu0
    %4205 = vmatpush.bf16.msra.mxu0 %v2326
    %4206 = vmatpush.bf16.msra.mxu0 %v2322
    %4207 = vmatpush.bf16.msra.mxu0 %v2318
    %4208 = vmatpush.bf16.msra.mxu0 %v2314
    %4209 = vmatpush.bf16.msra.mxu0 %v2310
    %4210 = vmatpush.bf16.msra.mxu0 %v2306
    %4211 = vmatpush.bf16.msra.mxu0 %v2302
    %4212 = vmatpush.bf16.msra.mxu0 %v2298
    %4213 = vmatmul.bf16.gmra.mxu0 %v143
    %v4214 = vpop.f32.mrf.mxu0
    %v4215 = vadd.f32 %v4196, %v4214
    %v4216 = vpop.f32.mrf.mxu0
    %v4217 = vadd.f32 %v4198, %v4216
    %4218 = vmatmul.bf16.gmra.mxu0 %v159
    %v4219 = vpop.f32.mrf.mxu0
    %v4220 = vadd.f32 %v4201, %v4219
    %v4221 = vpop.f32.mrf.mxu0
    %v4222 = vadd.f32 %v4203, %v4221
    %4223 = vdwg.mxu0
    %4224 = vmatpush.bf16.msra.mxu0 %v2358
    %4225 = vmatpush.bf16.msra.mxu0 %v2354
    %4226 = vmatpush.bf16.msra.mxu0 %v2350
    %4227 = vmatpush.bf16.msra.mxu0 %v2346
    %4228 = vmatpush.bf16.msra.mxu0 %v2342
    %4229 = vmatpush.bf16.msra.mxu0 %v2338
    %4230 = vmatpush.bf16.msra.mxu0 %v2334
    %4231 = vmatpush.bf16.msra.mxu0 %v2330
    %4232 = vmatmul.bf16.gmra.mxu0 %v144
    %v4233 = vpop.f32.mrf.mxu0
    %v4234 = vadd.f32 %v4215, %v4233
    %v4235 = vpop.f32.mrf.mxu0
    %v4236 = vadd.f32 %v4217, %v4235
    %4237 = vmatmul.bf16.gmra.mxu0 %v160
    %v4238 = vpop.f32.mrf.mxu0
    %v4239 = vadd.f32 %v4220, %v4238
    %v4240 = vpop.f32.mrf.mxu0
    %v4241 = vadd.f32 %v4222, %v4240
    %4242 = vdwg.mxu0
    %4243 = vmatpush.bf16.msra.mxu0 %v2390
    %4244 = vmatpush.bf16.msra.mxu0 %v2386
    %4245 = vmatpush.bf16.msra.mxu0 %v2382
    %4246 = vmatpush.bf16.msra.mxu0 %v2378
    %4247 = vmatpush.bf16.msra.mxu0 %v2374
    %4248 = vmatpush.bf16.msra.mxu0 %v2370
    %4249 = vmatpush.bf16.msra.mxu0 %v2366
    %4250 = vmatpush.bf16.msra.mxu0 %v2362
    %4251 = vmatmul.bf16.gmra.mxu0 %v145
    %v4252 = vpop.f32.mrf.mxu0
    %v4253 = vadd.f32 %v4234, %v4252
    %v4254 = vpop.f32.mrf.mxu0
    %v4255 = vadd.f32 %v4236, %v4254
    %4256 = vmatmul.bf16.gmra.mxu0 %v161
    %v4257 = vpop.f32.mrf.mxu0
    %v4258 = vadd.f32 %v4239, %v4257
    %v4259 = vpop.f32.mrf.mxu0
    %v4260 = vadd.f32 %v4241, %v4259
    %4261 = vdwg.mxu0
    %4262 = vmatpush.bf16.msra.mxu0 %v2422
    %4263 = vmatpush.bf16.msra.mxu0 %v2418
    %4264 = vmatpush.bf16.msra.mxu0 %v2414
    %4265 = vmatpush.bf16.msra.mxu0 %v2410
    %4266 = vmatpush.bf16.msra.mxu0 %v2406
    %4267 = vmatpush.bf16.msra.mxu0 %v2402
    %4268 = vmatpush.bf16.msra.mxu0 %v2398
    %4269 = vmatpush.bf16.msra.mxu0 %v2394
    %4270 = vmatmul.bf16.gmra.mxu0 %v146
    %v4271 = vpop.f32.mrf.mxu0
    %v4272 = vadd.f32 %v4253, %v4271
    %v4273 = vpop.f32.mrf.mxu0
    %v4274 = vadd.f32 %v4255, %v4273
    %4275 = vmatmul.bf16.gmra.mxu0 %v162
    %v4276 = vpop.f32.mrf.mxu0
    %v4277 = vadd.f32 %v4258, %v4276
    %v4278 = vpop.f32.mrf.mxu0
    %v4279 = vadd.f32 %v4260, %v4278
    %4280 = vdwg.mxu0
    %4281 = vmatpush.bf16.msra.mxu0 %v2454
    %4282 = vmatpush.bf16.msra.mxu0 %v2450
    %4283 = vmatpush.bf16.msra.mxu0 %v2446
    %4284 = vmatpush.bf16.msra.mxu0 %v2442
    %4285 = vmatpush.bf16.msra.mxu0 %v2438
    %4286 = vmatpush.bf16.msra.mxu0 %v2434
    %4287 = vmatpush.bf16.msra.mxu0 %v2430
    %4288 = vmatpush.bf16.msra.mxu0 %v2426
    %4289 = vmatmul.bf16.gmra.mxu0 %v147
    %v4290 = vpop.f32.mrf.mxu0
    %v4291 = vadd.f32 %v4272, %v4290
    %v4292 = vpop.f32.mrf.mxu0
    %v4293 = vadd.f32 %v4274, %v4292
    %4294 = vmatmul.bf16.gmra.mxu0 %v163
    %v4295 = vpop.f32.mrf.mxu0
    %v4296 = vadd.f32 %v4277, %v4295
    %v4297 = vpop.f32.mrf.mxu0
    %v4298 = vadd.f32 %v4279, %v4297
    %4299 = vdwg.mxu0
    %4300 = vmatpush.bf16.msra.mxu0 %v2486
    %4301 = vmatpush.bf16.msra.mxu0 %v2482
    %4302 = vmatpush.bf16.msra.mxu0 %v2478
    %4303 = vmatpush.bf16.msra.mxu0 %v2474
    %4304 = vmatpush.bf16.msra.mxu0 %v2470
    %4305 = vmatpush.bf16.msra.mxu0 %v2466
    %4306 = vmatpush.bf16.msra.mxu0 %v2462
    %4307 = vmatpush.bf16.msra.mxu0 %v2458
    %4308 = vmatmul.bf16.gmra.mxu0 %v148
    %v4309 = vpop.f32.mrf.mxu0
    %v4310 = vadd.f32 %v4291, %v4309
    %v4311 = vpop.f32.mrf.mxu0
    %v4312 = vadd.f32 %v4293, %v4311
    %4313 = vmatmul.bf16.gmra.mxu0 %v164
    %v4314 = vpop.f32.mrf.mxu0
    %v4315 = vadd.f32 %v4296, %v4314
    %v4316 = vpop.f32.mrf.mxu0
    %v4317 = vadd.f32 %v4298, %v4316
    %4318 = vdwg.mxu0
    %4319 = vmatpush.bf16.msra.mxu0 %v2518
    %4320 = vmatpush.bf16.msra.mxu0 %v2514
    %4321 = vmatpush.bf16.msra.mxu0 %v2510
    %4322 = vmatpush.bf16.msra.mxu0 %v2506
    %4323 = vmatpush.bf16.msra.mxu0 %v2502
    %4324 = vmatpush.bf16.msra.mxu0 %v2498
    %4325 = vmatpush.bf16.msra.mxu0 %v2494
    %4326 = vmatpush.bf16.msra.mxu0 %v2490
    %4327 = vmatmul.bf16.gmra.mxu0 %v149
    %v4328 = vpop.f32.mrf.mxu0
    %v4329 = vadd.f32 %v4310, %v4328
    %v4330 = vpop.f32.mrf.mxu0
    %v4331 = vadd.f32 %v4312, %v4330
    %4332 = vmatmul.bf16.gmra.mxu0 %v165
    %v4333 = vpop.f32.mrf.mxu0
    %v4334 = vadd.f32 %v4315, %v4333
    %v4335 = vpop.f32.mrf.mxu0
    %v4336 = vadd.f32 %v4317, %v4335
    %4337 = vdwg.mxu0
    %4338 = vmatpush.bf16.msra.mxu0 %v2550
    %4339 = vmatpush.bf16.msra.mxu0 %v2546
    %4340 = vmatpush.bf16.msra.mxu0 %v2542
    %4341 = vmatpush.bf16.msra.mxu0 %v2538
    %4342 = vmatpush.bf16.msra.mxu0 %v2534
    %4343 = vmatpush.bf16.msra.mxu0 %v2530
    %4344 = vmatpush.bf16.msra.mxu0 %v2526
    %4345 = vmatpush.bf16.msra.mxu0 %v2522
    %4346 = vmatmul.bf16.gmra.mxu0 %v150
    %v4347 = vpop.f32.mrf.mxu0
    %v4348 = vadd.f32 %v4329, %v4347
    %v4349 = vpop.f32.mrf.mxu0
    %v4350 = vadd.f32 %v4331, %v4349
    %4351 = vmatmul.bf16.gmra.mxu0 %v166
    %v4352 = vpop.f32.mrf.mxu0
    %v4353 = vadd.f32 %v4334, %v4352
    %v4354 = vpop.f32.mrf.mxu0
    %v4355 = vadd.f32 %v4336, %v4354
    %4356 = vdwg.mxu0
    %4357 = vmatpush.bf16.msra.mxu0 %v2582
    %4358 = vmatpush.bf16.msra.mxu0 %v2578
    %4359 = vmatpush.bf16.msra.mxu0 %v2574
    %4360 = vmatpush.bf16.msra.mxu0 %v2570
    %4361 = vmatpush.bf16.msra.mxu0 %v2566
    %4362 = vmatpush.bf16.msra.mxu0 %v2562
    %4363 = vmatpush.bf16.msra.mxu0 %v2558
    %4364 = vmatpush.bf16.msra.mxu0 %v2554
    %4365 = vmatmul.bf16.gmra.mxu0 %v151
    %v4366 = vpop.f32.mrf.mxu0
    %v4367 = vadd.f32 %v4348, %v4366
    %v4368 = vpop.f32.mrf.mxu0
    %v4369 = vadd.f32 %v4350, %v4368
    %4370 = vmatmul.bf16.gmra.mxu0 %v167
    %v4371 = vpop.f32.mrf.mxu0
    %v4372 = vadd.f32 %v4353, %v4371
    %v4373 = vpop.f32.mrf.mxu0
    %v4374 = vadd.f32 %v4355, %v4373
    %4375 = vdwg.mxu0
    %4376 = vmatpush.bf16.msra.mxu0 %v2614
    %4377 = vmatpush.bf16.msra.mxu0 %v2610
    %4378 = vmatpush.bf16.msra.mxu0 %v2606
    %4379 = vmatpush.bf16.msra.mxu0 %v2602
    %4380 = vmatpush.bf16.msra.mxu0 %v2598
    %4381 = vmatpush.bf16.msra.mxu0 %v2594
    %4382 = vmatpush.bf16.msra.mxu0 %v2590
    %4383 = vmatpush.bf16.msra.mxu0 %v2586
    %4384 = vmatmul.bf16.gmra.mxu0 %v152
    %v4385 = vpop.f32.mrf.mxu0
    %v4386 = vadd.f32 %v4367, %v4385
    %v4387 = vpop.f32.mrf.mxu0
    %v4388 = vadd.f32 %v4369, %v4387
    %4389 = vmatmul.bf16.gmra.mxu0 %v168
    %v4390 = vpop.f32.mrf.mxu0
    %v4391 = vadd.f32 %v4372, %v4390
    %v4392 = vpop.f32.mrf.mxu0
    %v4393 = vadd.f32 %v4374, %v4392
    %4394 = vdwg.mxu0
    %4395 = vmatpush.bf16.msra.mxu0 %v2646
    %4396 = vmatpush.bf16.msra.mxu0 %v2642
    %4397 = vmatpush.bf16.msra.mxu0 %v2638
    %4398 = vmatpush.bf16.msra.mxu0 %v2634
    %4399 = vmatpush.bf16.msra.mxu0 %v2630
    %4400 = vmatpush.bf16.msra.mxu0 %v2626
    %4401 = vmatpush.bf16.msra.mxu0 %v2622
    %4402 = vmatpush.bf16.msra.mxu0 %v2618
    %4403 = vmatmul.bf16.gmra.mxu0 %v153
    %v4404 = vpop.f32.mrf.mxu0
    %v4405 = vadd.f32 %v4386, %v4404
    %v4406 = vpop.f32.mrf.mxu0
    %v4407 = vadd.f32 %v4388, %v4406
    %4408 = vmatmul.bf16.gmra.mxu0 %v169
    %v4409 = vpop.f32.mrf.mxu0
    %v4410 = vadd.f32 %v4391, %v4409
    %v4411 = vpop.f32.mrf.mxu0
    %v4412 = vadd.f32 %v4393, %v4411
    %4413 = vdwg.mxu0
    %4414 = vmatpush.bf16.msra.mxu0 %v2678
    %4415 = vmatpush.bf16.msra.mxu0 %v2674
    %4416 = vmatpush.bf16.msra.mxu0 %v2670
    %4417 = vmatpush.bf16.msra.mxu0 %v2666
    %4418 = vmatpush.bf16.msra.mxu0 %v2662
    %4419 = vmatpush.bf16.msra.mxu0 %v2658
    %4420 = vmatpush.bf16.msra.mxu0 %v2654
    %4421 = vmatpush.bf16.msra.mxu0 %v2650
    %4422 = vmatmul.bf16.gmra.mxu0 %v154
    %v4423 = vpop.f32.mrf.mxu0
    %v4424 = vadd.f32 %v4405, %v4423
    %v4425 = vpop.f32.mrf.mxu0
    %v4426 = vadd.f32 %v4407, %v4425
    %4427 = vmatmul.bf16.gmra.mxu0 %v170
    %v4428 = vpop.f32.mrf.mxu0
    %v4429 = vadd.f32 %v4410, %v4428
    %v4430 = vpop.f32.mrf.mxu0
    %v4431 = vadd.f32 %v4412, %v4430
    %4432 = vdwg.mxu0
    %4433 = vmatpush.bf16.msra.mxu0 %v2710
    %4434 = vmatpush.bf16.msra.mxu0 %v2706
    %4435 = vmatpush.bf16.msra.mxu0 %v2702
    %4436 = vmatpush.bf16.msra.mxu0 %v2698
    %4437 = vmatpush.bf16.msra.mxu0 %v2694
    %4438 = vmatpush.bf16.msra.mxu0 %v2690
    %4439 = vmatpush.bf16.msra.mxu0 %v2686
    %4440 = vmatpush.bf16.msra.mxu0 %v2682
    %4441 = vmatmul.bf16.gmra.mxu0 %v155
    %v4442 = vpop.f32.mrf.mxu0
    %v4443 = vadd.f32 %v4424, %v4442
    %v4444 = vpop.f32.mrf.mxu0
    %v4445 = vadd.f32 %v4426, %v4444
    %4446 = vmatmul.bf16.gmra.mxu0 %v171
    %v4447 = vpop.f32.mrf.mxu0
    %v4448 = vadd.f32 %v4429, %v4447
    %v4449 = vpop.f32.mrf.mxu0
    %v4450 = vadd.f32 %v4431, %v4449
    %4451 = vdwg.mxu0
    %4452 = vmatpush.bf16.msra.mxu0 %v2742
    %4453 = vmatpush.bf16.msra.mxu0 %v2738
    %4454 = vmatpush.bf16.msra.mxu0 %v2734
    %4455 = vmatpush.bf16.msra.mxu0 %v2730
    %4456 = vmatpush.bf16.msra.mxu0 %v2726
    %4457 = vmatpush.bf16.msra.mxu0 %v2722
    %4458 = vmatpush.bf16.msra.mxu0 %v2718
    %4459 = vmatpush.bf16.msra.mxu0 %v2714
    %4460 = vmatmul.bf16.gmra.mxu0 %v156
    %v4461 = vpop.f32.mrf.mxu0
    %v4462 = vadd.f32 %v4443, %v4461
    %v4463 = vpop.f32.mrf.mxu0
    %v4464 = vadd.f32 %v4445, %v4463
    %4465 = vmatmul.bf16.gmra.mxu0 %v172
    %v4466 = vpop.f32.mrf.mxu0
    %v4467 = vadd.f32 %v4448, %v4466
    %v4468 = vpop.f32.mrf.mxu0
    %v4469 = vadd.f32 %v4450, %v4468
    %4470 = vdwg.mxu0
    %v4471 = vmax.f32 %v3550, 0.0
    %v4472 = vmax.f32 %v3854, 0.0
    %v4473 = vmax.f32 %v4158, 0.0
    %v4474 = vmax.f32 %v4462, 0.0
    %v4475 = vmax.f32 %v3552, 0.0
    %v4476 = vmax.f32 %v3856, 0.0
    %v4477 = vmax.f32 %v4160, 0.0
    %v4478 = vmax.f32 %v4464, 0.0
    %v4479 = vmax.f32 %v3555, 0.0
    %v4480 = vmax.f32 %v3859, 0.0
    %v4481 = vmax.f32 %v4163, 0.0
    %v4482 = vmax.f32 %v4467, 0.0
    %v4483 = vmax.f32 %v3557, 0.0
    %v4484 = vmax.f32 %v3861, 0.0
    %v4485 = vmax.f32 %v4165, 0.0
    %v4486 = vmax.f32 %v4469, 0.0
    %v4487 = vld [vmem:[#allocation8] sm:$0xf]
    %v4489 = vperm.slane %v4487, 0
    %v4490 = vperm.slane %v4487, 1
    %v4491 = vperm.slane %v4487, 2
    %v4492 = vperm.slane %v4487, 3
    %v4497 = vmul.f32 %v4471, %v4489
    %v4498 = vmul.f32 %v4472, %v4490
    %v4499 = vmul.f32 %v4473, %v4491
    %v4500 = vmul.f32 %v4474, %v4492
    %v4501 = vmul.f32 %v4475, %v4489
    %v4502 = vmul.f32 %v4476, %v4490
    %v4503 = vmul.f32 %v4477, %v4491
    %v4504 = vmul.f32 %v4478, %v4492
    %v4505 = vmul.f32 %v4479, %v4489
    %v4506 = vmul.f32 %v4480, %v4490
    %v4507 = vmul.f32 %v4481, %v4491
    %v4508 = vmul.f32 %v4482, %v4492
    %v4509 = vmul.f32 %v4483, %v4489
    %v4510 = vmul.f32 %v4484, %v4490
    %v4511 = vmul.f32 %v4485, %v4491
    %v4512 = vmul.f32 %v4486, %v4492
    %v4513 = vadd.f32 %v4497, %v4498
    %v4514 = vadd.f32 %v4513, %v4499
    %v4515 = vadd.f32 %v4514, %v4500
    %4516 = vadd.xlane.f32.xlu0 %v4515
    %v4517 = vpop.xlane.xlu0 %4516
    %v4518 = vadd.f32 %v4501, %v4502
    %v4519 = vadd.f32 %v4518, %v4503
    %v4520 = vadd.f32 %v4519, %v4504
    %4521 = vadd.xlane.f32.xlu0 %v4520
    %v4522 = vpop.xlane.xlu0 %4521
    %v4523 = vadd.f32 %v4505, %v4506
    %v4524 = vadd.f32 %v4523, %v4507
    %v4525 = vadd.f32 %v4524, %v4508
    %4526 = vadd.xlane.f32.xlu0 %v4525
    %v4527 = vpop.xlane.xlu0 %4526
    %v4528 = vadd.f32 %v4509, %v4510
    %v4529 = vadd.f32 %v4528, %v4511
    %v4530 = vadd.f32 %v4529, %v4512
    %4531 = vadd.xlane.f32.xlu0 %v4530
    %v4532 = vpop.xlane.xlu0 %4531
    %v4533 = vmax.f32 %v4517, %v4522
    %v4534 = vrot.slane %v4533, 4
    %v4535 = vmax.f32 %v4533, %v4534
    %v4536 = vrot.slane %v4535, 2
    %v4537 = vmax.f32 %v4535, %v4536
    %v4538 = vrot.slane %v4537, 1
    %v4539 = vmax.f32 %v4537, %v4538
    %v4540 = vmax.f32 %v4527, %v4532
    %v4541 = vrot.slane %v4540, 4
    %v4542 = vmax.f32 %v4540, %v4541
    %v4543 = vrot.slane %v4542, 2
    %v4544 = vmax.f32 %v4542, %v4543
    %v4545 = vrot.slane %v4544, 1
    %v4546 = vmax.f32 %v4544, %v4545
    %v4547 = vsub.f32 %v4517, %v4539
    %v4548 = vsub.f32 %v4522, %v4539
    %v4549 = vsub.f32 %v4527, %v4546
    %v4550 = vsub.f32 %v4532, %v4546
    %v4551 = vmul.f32 %v4547, 1.442695
    %v4552 = vpow.pop %v4551
    %v4553 = vmul.f32 %v4548, 1.442695
    %v4554 = vpow.pop %v4553
    %v4555 = vmul.f32 %v4549, 1.442695
    %v4556 = vpow.pop %v4555
    %v4557 = vmul.f32 %v4550, 1.442695
    %v4558 = vpow.pop %v4557
    %v4559 = vadd.f32 %v4552, %v4554
    %v4560 = vrot.slane %v4559, 4
    %v4561 = vadd.f32 %v4559, %v4560
    %v4562 = vrot.slane %v4561, 2
    %v4563 = vadd.f32 %v4561, %v4562
    %v4564 = vrot.slane %v4563, 1
    %v4565 = vadd.f32 %v4563, %v4564
    %v4566 = vadd.f32 %v4556, %v4558
    %v4567 = vrot.slane %v4566, 4
    %v4568 = vadd.f32 %v4566, %v4567
    %v4569 = vrot.slane %v4568, 2
    %v4570 = vadd.f32 %v4568, %v4569
    %v4571 = vrot.slane %v4570, 1
    %v4572 = vadd.f32 %v4570, %v4571
    %v4573 = vrcp.pop %v4565
    %v4574 = vrcp.pop %v4572
    %v4575 = vmul.f32 %v4552, %v4573
    %v4576 = vmul.f32 %v4554, %v4573
    %v4577 = vmul.f32 %v4556, %v4574
    %v4578 = vmul.f32 %v4558, %v4574
    %v4579 = vadd.f32 %v4575, 1.0
    %v4580 = vadd.f32 %v4576, 1.0
    %v4581 = vadd.f32 %v4577, 1.0
    %v4582 = vadd.f32 %v4578, 1.0
    %v4583 = vmul.f32 %v77, %v4579
    %v4584 = vmul.f32 %v78, %v4579
    %v4585 = vmul.f32 %v79, %v4579
    %v4586 = vmul.f32 %v80, %v4579
    %v4587 = vmul.f32 %v81, %v4579
    %v4588 = vmul.f32 %v82, %v4579
    %v4589 = vmul.f32 %v83, %v4579
    %v4590 = vmul.f32 %v84, %v4579
    %v4591 = vmul.f32 %v85, %v4579
    %v4592 = vmul.f32 %v86, %v4579
    %v4593 = vmul.f32 %v87, %v4579
    %v4594 = vmul.f32 %v88, %v4579
    %v4595 = vmul.f32 %v89, %v4579
    %v4596 = vmul.f32 %v90, %v4579
    %v4597 = vmul.f32 %v91, %v4579
    %v4598 = vmul.f32 %v92, %v4579
    %v4599 = vmul.f32 %v93, %v4580
    %v4600 = vmul.f32 %v94, %v4580
    %v4601 = vmul.f32 %v95, %v4580
    %v4602 = vmul.f32 %v96, %v4580
    %v4603 = vmul.f32 %v97, %v4580
    %v4604 = vmul.f32 %v98, %v4580
    %v4605 = vmul.f32 %v99, %v4580
    %v4606 = vmul.f32 %v100, %v4580
    %v4607 = vmul.f32 %v101, %v4580
    %v4608 = vmul.f32 %v102, %v4580
    %v4609 = vmul.f32 %v103, %v4580
    %v4610 = vmul.f32 %v104, %v4580
    %v4611 = vmul.f32 %v105, %v4580
    %v4612 = vmul.f32 %v106, %v4580
    %v4613 = vmul.f32 %v107, %v4580
    %v4614 = vmul.f32 %v108, %v4580
    %v4615 = vmul.f32 %v109, %v4581
    %v4616 = vmul.f32 %v110, %v4581
    %v4617 = vmul.f32 %v111, %v4581
    %v4618 = vmul.f32 %v112, %v4581
    %v4619 = vmul.f32 %v113, %v4581
    %v4620 = vmul.f32 %v114, %v4581
    %v4621 = vmul.f32 %v115, %v4581
    %v4622 = vmul.f32 %v116, %v4581
    %v4623 = vmul.f32 %v117, %v4581
    %v4624 = vmul.f32 %v118, %v4581
    %v4625 = vmul.f32 %v119, %v4581
    %v4626 = vmul.f32 %v120, %v4581
    %v4627 = vmul.f32 %v121, %v4581
    %v4628 = vmul.f32 %v122, %v4581
    %v4629 = vmul.f32 %v123, %v4581
    %v4630 = vmul.f32 %v124, %v4581
    %v4631 = vmul.f32 %v125, %v4582
    %v4632 = vmul.f32 %v126, %v4582
    %v4633 = vmul.f32 %v127, %v4582
    %v4634 = vmul.f32 %v128, %v4582
    %v4635 = vmul.f32 %v129, %v4582
    %v4636 = vmul.f32 %v130, %v4582
    %v4637 = vmul.f32 %v131, %v4582
    %v4638 = vmul.f32 %v132, %v4582
    %v4639 = vmul.f32 %v133, %v4582
    %v4640 = vmul.f32 %v134, %v4582
    %v4641 = vmul.f32 %v135, %v4582
    %v4642 = vmul.f32 %v136, %v4582
    %v4643 = vmul.f32 %v137, %v4582
    %v4644 = vmul.f32 %v138, %v4582
    %v4645 = vmul.f32 %v139, %v4582
    %v4646 = vmul.f32 %v140, %v4582
    %v4647 = vmax.f32 %v4583, %v4599
    %v4648 = vrot.slane %v4647, 4
    %v4649 = vmax.f32 %v4647, %v4648
    %v4650 = vrot.slane %v4649, 2
    %v4651 = vmax.f32 %v4649, %v4650
    %v4652 = vrot.slane %v4651, 1
    %v4653 = vmax.f32 %v4651, %v4652
    %v4654 = vmax.f32 %v4584, %v4600
    %v4655 = vrot.slane %v4654, 4
    %v4656 = vmax.f32 %v4654, %v4655
    %v4657 = vrot.slane %v4656, 2
    %v4658 = vmax.f32 %v4656, %v4657
    %v4659 = vrot.slane %v4658, 1
    %v4660 = vmax.f32 %v4658, %v4659
    %v4661 = vmax.f32 %v4585, %v4601
    %v4662 = vrot.slane %v4661, 4
    %v4663 = vmax.f32 %v4661, %v4662
    %v4664 = vrot.slane %v4663, 2
    %v4665 = vmax.f32 %v4663, %v4664
    %v4666 = vrot.slane %v4665, 1
    %v4667 = vmax.f32 %v4665, %v4666
    %v4668 = vmax.f32 %v4586, %v4602
    %v4669 = vrot.slane %v4668, 4
    %v4670 = vmax.f32 %v4668, %v4669
    %v4671 = vrot.slane %v4670, 2
    %v4672 = vmax.f32 %v4670, %v4671
    %v4673 = vrot.slane %v4672, 1
    %v4674 = vmax.f32 %v4672, %v4673
    %v4675 = vmax.f32 %v4587, %v4603
    %v4676 = vrot.slane %v4675, 4
    %v4677 = vmax.f32 %v4675, %v4676
    %v4678 = vrot.slane %v4677, 2
    %v4679 = vmax.f32 %v4677, %v4678
    %v4680 = vrot.slane %v4679, 1
    %v4681 = vmax.f32 %v4679, %v4680
    %v4682 = vmax.f32 %v4588, %v4604
    %v4683 = vrot.slane %v4682, 4
    %v4684 = vmax.f32 %v4682, %v4683
    %v4685 = vrot.slane %v4684, 2
    %v4686 = vmax.f32 %v4684, %v4685
    %v4687 = vrot.slane %v4686, 1
    %v4688 = vmax.f32 %v4686, %v4687
    %v4689 = vmax.f32 %v4589, %v4605
    %v4690 = vrot.slane %v4689, 4
    %v4691 = vmax.f32 %v4689, %v4690
    %v4692 = vrot.slane %v4691, 2
    %v4693 = vmax.f32 %v4691, %v4692
    %v4694 = vrot.slane %v4693, 1
    %v4695 = vmax.f32 %v4693, %v4694
    %v4696 = vmax.f32 %v4590, %v4606
    %v4697 = vrot.slane %v4696, 4
    %v4698 = vmax.f32 %v4696, %v4697
    %v4699 = vrot.slane %v4698, 2
    %v4700 = vmax.f32 %v4698, %v4699
    %v4701 = vrot.slane %v4700, 1
    %v4702 = vmax.f32 %v4700, %v4701
    %v4703 = vmax.f32 %v4591, %v4607
    %v4704 = vrot.slane %v4703, 4
    %v4705 = vmax.f32 %v4703, %v4704
    %v4706 = vrot.slane %v4705, 2
    %v4707 = vmax.f32 %v4705, %v4706
    %v4708 = vrot.slane %v4707, 1
    %v4709 = vmax.f32 %v4707, %v4708
    %v4710 = vmax.f32 %v4592, %v4608
    %v4711 = vrot.slane %v4710, 4
    %v4712 = vmax.f32 %v4710, %v4711
    %v4713 = vrot.slane %v4712, 2
    %v4714 = vmax.f32 %v4712, %v4713
    %v4715 = vrot.slane %v4714, 1
    %v4716 = vmax.f32 %v4714, %v4715
    %v4717 = vmax.f32 %v4593, %v4609
    %v4718 = vrot.slane %v4717, 4
    %v4719 = vmax.f32 %v4717, %v4718
    %v4720 = vrot.slane %v4719, 2
    %v4721 = vmax.f32 %v4719, %v4720
    %v4722 = vrot.slane %v4721, 1
    %v4723 = vmax.f32 %v4721, %v4722
    %v4724 = vmax.f32 %v4594, %v4610
    %v4725 = vrot.slane %v4724, 4
    %v4726 = vmax.f32 %v4724, %v4725
    %v4727 = vrot.slane %v4726, 2
    %v4728 = vmax.f32 %v4726, %v4727
    %v4729 = vrot.slane %v4728, 1
    %v4730 = vmax.f32 %v4728, %v4729
    %v4731 = vmax.f32 %v4595, %v4611
    %v4732 = vrot.slane %v4731, 4
    %v4733 = vmax.f32 %v4731, %v4732
    %v4734 = vrot.slane %v4733, 2
    %v4735 = vmax.f32 %v4733, %v4734
    %v4736 = vrot.slane %v4735, 1
    %v4737 = vmax.f32 %v4735, %v4736
    %v4738 = vmax.f32 %v4596, %v4612
    %v4739 = vrot.slane %v4738, 4
    %v4740 = vmax.f32 %v4738, %v4739
    %v4741 = vrot.slane %v4740, 2
    %v4742 = vmax.f32 %v4740, %v4741
    %v4743 = vrot.slane %v4742, 1
    %v4744 = vmax.f32 %v4742, %v4743
    %v4745 = vmax.f32 %v4597, %v4613
    %v4746 = vrot.slane %v4745, 4
    %v4747 = vmax.f32 %v4745, %v4746
    %v4748 = vrot.slane %v4747, 2
    %v4749 = vmax.f32 %v4747, %v4748
    %v4750 = vrot.slane %v4749, 1
    %v4751 = vmax.f32 %v4749, %v4750
    %v4752 = vmax.f32 %v4598, %v4614
    %v4753 = vrot.slane %v4752, 4
    %v4754 = vmax.f32 %v4752, %v4753
    %v4755 = vrot.slane %v4754, 2
    %v4756 = vmax.f32 %v4754, %v4755
    %v4757 = vrot.slane %v4756, 1
    %v4758 = vmax.f32 %v4756, %v4757
    %v4759 = vmax.f32 %v4615, %v4631
    %v4760 = vrot.slane %v4759, 4
    %v4761 = vmax.f32 %v4759, %v4760
    %v4762 = vrot.slane %v4761, 2
    %v4763 = vmax.f32 %v4761, %v4762
    %v4764 = vrot.slane %v4763, 1
    %v4765 = vmax.f32 %v4763, %v4764
    %v4766 = vmax.f32 %v4616, %v4632
    %v4767 = vrot.slane %v4766, 4
    %v4768 = vmax.f32 %v4766, %v4767
    %v4769 = vrot.slane %v4768, 2
    %v4770 = vmax.f32 %v4768, %v4769
    %v4771 = vrot.slane %v4770, 1
    %v4772 = vmax.f32 %v4770, %v4771
    %v4773 = vmax.f32 %v4617, %v4633
    %v4774 = vrot.slane %v4773, 4
    %v4775 = vmax.f32 %v4773, %v4774
    %v4776 = vrot.slane %v4775, 2
    %v4777 = vmax.f32 %v4775, %v4776
    %v4778 = vrot.slane %v4777, 1
    %v4779 = vmax.f32 %v4777, %v4778
    %v4780 = vmax.f32 %v4618, %v4634
    %v4781 = vrot.slane %v4780, 4
    %v4782 = vmax.f32 %v4780, %v4781
    %v4783 = vrot.slane %v4782, 2
    %v4784 = vmax.f32 %v4782, %v4783
    %v4785 = vrot.slane %v4784, 1
    %v4786 = vmax.f32 %v4784, %v4785
    %v4787 = vmax.f32 %v4619, %v4635
    %v4788 = vrot.slane %v4787, 4
    %v4789 = vmax.f32 %v4787, %v4788
    %v4790 = vrot.slane %v4789, 2
    %v4791 = vmax.f32 %v4789, %v4790
    %v4792 = vrot.slane %v4791, 1
    %v4793 = vmax.f32 %v4791, %v4792
    %v4794 = vmax.f32 %v4620, %v4636
    %v4795 = vrot.slane %v4794, 4
    %v4796 = vmax.f32 %v4794, %v4795
    %v4797 = vrot.slane %v4796, 2
    %v4798 = vmax.f32 %v4796, %v4797
    %v4799 = vrot.slane %v4798, 1
    %v4800 = vmax.f32 %v4798, %v4799
    %v4801 = vmax.f32 %v4621, %v4637
    %v4802 = vrot.slane %v4801, 4
    %v4803 = vmax.f32 %v4801, %v4802
    %v4804 = vrot.slane %v4803, 2
    %v4805 = vmax.f32 %v4803, %v4804
    %v4806 = vrot.slane %v4805, 1
    %v4807 = vmax.f32 %v4805, %v4806
    %v4808 = vmax.f32 %v4622, %v4638
    %v4809 = vrot.slane %v4808, 4
    %v4810 = vmax.f32 %v4808, %v4809
    %v4811 = vrot.slane %v4810, 2
    %v4812 = vmax.f32 %v4810, %v4811
    %v4813 = vrot.slane %v4812, 1
    %v4814 = vmax.f32 %v4812, %v4813
    %v4815 = vmax.f32 %v4623, %v4639
    %v4816 = vrot.slane %v4815, 4
    %v4817 = vmax.f32 %v4815, %v4816
    %v4818 = vrot.slane %v4817, 2
    %v4819 = vmax.f32 %v4817, %v4818
    %v4820 = vrot.slane %v4819, 1
    %v4821 = vmax.f32 %v4819, %v4820
    %v4822 = vmax.f32 %v4624, %v4640
    %v4823 = vrot.slane %v4822, 4
    %v4824 = vmax.f32 %v4822, %v4823
    %v4825 = vrot.slane %v4824, 2
    %v4826 = vmax.f32 %v4824, %v4825
    %v4827 = vrot.slane %v4826, 1
    %v4828 = vmax.f32 %v4826, %v4827
    %v4829 = vmax.f32 %v4625, %v4641
    %v4830 = vrot.slane %v4829, 4
    %v4831 = vmax.f32 %v4829, %v4830
    %v4832 = vrot.slane %v4831, 2
    %v4833 = vmax.f32 %v4831, %v4832
    %v4834 = vrot.slane %v4833, 1
    %v4835 = vmax.f32 %v4833, %v4834
    %v4836 = vmax.f32 %v4626, %v4642
    %v4837 = vrot.slane %v4836, 4
    %v4838 = vmax.f32 %v4836, %v4837
    %v4839 = vrot.slane %v4838, 2
    %v4840 = vmax.f32 %v4838, %v4839
    %v4841 = vrot.slane %v4840, 1
    %v4842 = vmax.f32 %v4840, %v4841
    %v4843 = vmax.f32 %v4627, %v4643
    %v4844 = vrot.slane %v4843, 4
    %v4845 = vmax.f32 %v4843, %v4844
    %v4846 = vrot.slane %v4845, 2
    %v4847 = vmax.f32 %v4845, %v4846
    %v4848 = vrot.slane %v4847, 1
    %v4849 = vmax.f32 %v4847, %v4848
    %v4850 = vmax.f32 %v4628, %v4644
    %v4851 = vrot.slane %v4850, 4
    %v4852 = vmax.f32 %v4850, %v4851
    %v4853 = vrot.slane %v4852, 2
    %v4854 = vmax.f32 %v4852, %v4853
    %v4855 = vrot.slane %v4854, 1
    %v4856 = vmax.f32 %v4854, %v4855
    %v4857 = vmax.f32 %v4629, %v4645
    %v4858 = vrot.slane %v4857, 4
    %v4859 = vmax.f32 %v4857, %v4858
    %v4860 = vrot.slane %v4859, 2
    %v4861 = vmax.f32 %v4859, %v4860
    %v4862 = vrot.slane %v4861, 1
    %v4863 = vmax.f32 %v4861, %v4862
    %v4864 = vmax.f32 %v4630, %v4646
    %v4865 = vrot.slane %v4864, 4
    %v4866 = vmax.f32 %v4864, %v4865
    %v4867 = vrot.slane %v4866, 2
    %v4868 = vmax.f32 %v4866, %v4867
    %v4869 = vrot.slane %v4868, 1
    %v4870 = vmax.f32 %v4868, %v4869
    %v4871 = vmul.f32 %v4653, %v4653
    %v4872 = vmul.f32 %v4660, %v4660
    %v4873 = vmul.f32 %v4667, %v4667
    %v4874 = vmul.f32 %v4674, %v4674
    %v4875 = vmul.f32 %v4681, %v4681
    %v4876 = vmul.f32 %v4688, %v4688
    %v4877 = vmul.f32 %v4695, %v4695
    %v4878 = vmul.f32 %v4702, %v4702
    %v4879 = vmul.f32 %v4709, %v4709
    %v4880 = vmul.f32 %v4716, %v4716
    %v4881 = vmul.f32 %v4723, %v4723
    %v4882 = vmul.f32 %v4730, %v4730
    %v4883 = vmul.f32 %v4737, %v4737
    %v4884 = vmul.f32 %v4744, %v4744
    %v4885 = vmul.f32 %v4751, %v4751
    %v4886 = vmul.f32 %v4758, %v4758
    %v4887 = vmul.f32 %v4765, %v4765
    %v4888 = vmul.f32 %v4772, %v4772
    %v4889 = vmul.f32 %v4779, %v4779
    %v4890 = vmul.f32 %v4786, %v4786
    %v4891 = vmul.f32 %v4793, %v4793
    %v4892 = vmul.f32 %v4800, %v4800
    %v4893 = vmul.f32 %v4807, %v4807
    %v4894 = vmul.f32 %v4814, %v4814
    %v4895 = vmul.f32 %v4821, %v4821
    %v4896 = vmul.f32 %v4828, %v4828
    %v4897 = vmul.f32 %v4835, %v4835
    %v4898 = vmul.f32 %v4842, %v4842
    %v4899 = vmul.f32 %v4849, %v4849
    %v4900 = vmul.f32 %v4856, %v4856
    %v4901 = vmul.f32 %v4863, %v4863
    %v4902 = vmul.f32 %v4870, %v4870
    %vm4935 = vcmask 1041409
    %v4936 = vsel %vm4935, %v4887, %v4871
    %v4937 = vsel %vm4935, %v4888, %v4872
    %v4938 = vsel %vm4935, %v4889, %v4873
    %v4939 = vsel %vm4935, %v4890, %v4874
    %v4940 = vsel %vm4935, %v4891, %v4875
    %v4941 = vsel %vm4935, %v4892, %v4876
    %v4942 = vsel %vm4935, %v4893, %v4877
    %v4943 = vsel %vm4935, %v4894, %v4878
    %v4944 = vsel %vm4935, %v4895, %v4879
    %v4945 = vsel %vm4935, %v4896, %v4880
    %v4946 = vsel %vm4935, %v4897, %v4881
    %v4947 = vsel %vm4935, %v4898, %v4882
    %v4948 = vsel %vm4935, %v4899, %v4883
    %v4949 = vsel %vm4935, %v4900, %v4884
    %v4950 = vsel %vm4935, %v4901, %v4885
    %v4951 = vsel %vm4935, %v4902, %v4886
    %vm4968 = vcmask 1041408
    %v4969 = vsel %vm4968, %v4936, 0.0
    %v4970 = vsel %vm4968, %v4937, 0.0
    %v4971 = vadd.f32 %v4969, %v4970
    %v4972 = vsel %vm4968, %v4938, 0.0
    %v4973 = vadd.f32 %v4971, %v4972
    %v4974 = vsel %vm4968, %v4939, 0.0
    %v4975 = vadd.f32 %v4973, %v4974
    %v4976 = vsel %vm4968, %v4940, 0.0
    %v4977 = vadd.f32 %v4975, %v4976
    %v4978 = vsel %vm4968, %v4941, 0.0
    %v4979 = vadd.f32 %v4977, %v4978
    %v4980 = vsel %vm4968, %v4942, 0.0
    %v4981 = vadd.f32 %v4979, %v4980
    %v4982 = vsel %vm4968, %v4943, 0.0
    %v4983 = vadd.f32 %v4981, %v4982
    %v4984 = vsel %vm4968, %v4944, 0.0
    %v4985 = vadd.f32 %v4983, %v4984
    %v4986 = vsel %vm4968, %v4945, 0.0
    %v4987 = vadd.f32 %v4985, %v4986
    %v4988 = vsel %vm4968, %v4946, 0.0
    %v4989 = vadd.f32 %v4987, %v4988
    %v4990 = vsel %vm4968, %v4947, 0.0
    %v4991 = vadd.f32 %v4989, %v4990
    %v4992 = vsel %vm4968, %v4948, 0.0
    %v4993 = vadd.f32 %v4991, %v4992
    %v4994 = vsel %vm4968, %v4949, 0.0
    %v4995 = vadd.f32 %v4993, %v4994
    %v4996 = vsel %vm4968, %v4950, 0.0
    %v4997 = vadd.f32 %v4995, %v4996
    %v4998 = vsel %vm4968, %v4951, 0.0
    %v4999 = vadd.f32 %v4997, %v4998
    %5000 = vadd.xlane.f32.xlu0 %v4999
    %v5001 = vpop.xlane.xlu0 %5000
    %v5002 = vmax.f32 %v5001, 1e-24
    %v5003 = vrsqrt.pop %v5002
    %v5004 = vmul.f32 %v5003, %v5002
    %v5005 = vmul.f32 %v5004, %v5003
    %v5006 = vmul.f32 0.5, %v5005
    %v5007 = vsub.f32 1.5, %v5006
    %v5008 = vmul.f32 %v5003, %v5007
    %vm5009 = vweird.f32 %v5002
    %vm5010 = vweird.f32 %v5003
    %vm5011 = vmor %vm5009, %vm5010
    %v5012 = vsel %vm5011, %v5003, %v5008
    %v5014 = vrot.slane %v5012, 1
    %v5017 = vmul.f32 %v4653, %v5012
    %v5018 = vmul.f32 %v4660, %v5012
    %v5019 = vmul.f32 %v4667, %v5012
    %v5020 = vmul.f32 %v4674, %v5012
    %v5021 = vmul.f32 %v4681, %v5012
    %v5022 = vmul.f32 %v4688, %v5012
    %v5023 = vmul.f32 %v4695, %v5012
    %v5024 = vmul.f32 %v4702, %v5012
    %v5025 = vmul.f32 %v4709, %v5012
    %v5026 = vmul.f32 %v4716, %v5012
    %v5027 = vmul.f32 %v4723, %v5012
    %v5028 = vmul.f32 %v4730, %v5012
    %v5029 = vmul.f32 %v4737, %v5012
    %v5030 = vmul.f32 %v4744, %v5012
    %v5031 = vmul.f32 %v4751, %v5012
    %v5032 = vmul.f32 %v4758, %v5012
    %v5033 = vmul.f32 %v4765, %v5014
    %v5034 = vmul.f32 %v4772, %v5014
    %v5035 = vmul.f32 %v4779, %v5014
    %v5036 = vmul.f32 %v4786, %v5014
    %v5037 = vmul.f32 %v4793, %v5014
    %v5038 = vmul.f32 %v4800, %v5014
    %v5039 = vmul.f32 %v4807, %v5014
    %v5040 = vmul.f32 %v4814, %v5014
    %v5041 = vmul.f32 %v4821, %v5014
    %v5042 = vmul.f32 %v4828, %v5014
    %v5043 = vmul.f32 %v4835, %v5014
    %v5044 = vmul.f32 %v4842, %v5014
    %v5045 = vmul.f32 %v4849, %v5014
    %v5046 = vmul.f32 %v4856, %v5014
    %v5047 = vmul.f32 %v4863, %v5014
    %v5048 = vmul.f32 %v4870, %v5014
    %v5081 = vrot.slane %v5018, 6
    %v5082 = vrot.slane %v5019, 4
    %v5083 = vrot.slane %v5020, 2
    %v5084 = vrot.slane %v5022, 6
    %v5085 = vrot.slane %v5023, 4
    %v5086 = vrot.slane %v5024, 2
    %v5087 = vrot.slane %v5026, 6
    %v5088 = vrot.slane %v5027, 4
    %v5089 = vrot.slane %v5028, 2
    %v5090 = vrot.slane %v5030, 6
    %v5091 = vrot.slane %v5031, 4
    %v5092 = vrot.slane %v5032, 2
    %v5093 = vrot.slane %v5034, 6
    %v5094 = vrot.slane %v5035, 4
    %v5095 = vrot.slane %v5036, 2
    %v5096 = vrot.slane %v5038, 6
    %v5097 = vrot.slane %v5039, 4
    %v5098 = vrot.slane %v5040, 2
    %v5099 = vrot.slane %v5042, 6
    %v5100 = vrot.slane %v5043, 4
    %v5101 = vrot.slane %v5044, 2
    %v5102 = vrot.slane %v5046, 6
    %v5103 = vrot.slane %v5047, 4
    %v5104 = vrot.slane %v5048, 2
    %v5105 = vsel %vm4968, %v5017, %v5081
    %vm5106 = vcmask 1045508
    %v5107 = vsel %vm5106, %v5082, %v5083
    %vm5108 = vcmask 1043456
    %v5109 = vsel %vm5108, %v5105, %v5107
    %v5110 = vsel %vm4968, %v5021, %v5084
    %v5111 = vsel %vm5106, %v5085, %v5086
    %v5112 = vsel %vm5108, %v5110, %v5111
    %v5113 = vsel %vm4968, %v5025, %v5087
    %v5114 = vsel %vm5106, %v5088, %v5089
    %v5115 = vsel %vm5108, %v5113, %v5114
    %v5116 = vsel %vm4968, %v5029, %v5090
    %v5117 = vsel %vm5106, %v5091, %v5092
    %v5118 = vsel %vm5108, %v5116, %v5117
    %v5119 = vsel %vm4968, %v5033, %v5093
    %v5120 = vsel %vm5106, %v5094, %v5095
    %v5121 = vsel %vm5108, %v5119, %v5120
    %v5122 = vsel %vm4968, %v5037, %v5096
    %v5123 = vsel %vm5106, %v5097, %v5098
    %v5124 = vsel %vm5108, %v5122, %v5123
    %v5125 = vsel %vm4968, %v5041, %v5099
    %v5126 = vsel %vm5106, %v5100, %v5101
    %v5127 = vsel %vm5108, %v5125, %v5126
    %v5128 = vsel %vm4968, %v5045, %v5102
    %v5129 = vsel %vm5106, %v5103, %v5104
    %v5130 = vsel %vm5108, %v5128, %v5129
    %vm5131 = vcmask 1044484
    %v5132 = vsel %vm5131, %v5109, %v5109
    %vm5133 = vcmask 1046534
    %v5134 = vsel %vm5133, %v5109, %v5132
    %v5135 = vrot.slane %v5121, 7
    %v5136 = vsel %vm4935, %v5135, %v5134
    %vm5137 = vcmask 1043459
    %v5138 = vsel %vm5137, %v5135, %v5136
    %vm5139 = vcmask 1045509
    %v5140 = vsel %vm5139, %v5135, %v5138
    %vm5141 = vcmask 1047559
    %v5142 = vsel %vm5141, %v5135, %v5140
    %v5143 = vsel %vm5131, %v5112, %v5112
    %v5144 = vsel %vm5133, %v5112, %v5143
    %v5145 = vrot.slane %v5124, 7
    %v5146 = vsel %vm4935, %v5145, %v5144
    %v5147 = vsel %vm5137, %v5145, %v5146
    %v5148 = vsel %vm5139, %v5145, %v5147
    %v5149 = vsel %vm5141, %v5145, %v5148
    %v5150 = vsel %vm5131, %v5115, %v5115
    %v5151 = vsel %vm5133, %v5115, %v5150
    %v5152 = vrot.slane %v5127, 7
    %v5153 = vsel %vm4935, %v5152, %v5151
    %v5154 = vsel %vm5137, %v5152, %v5153
    %v5155 = vsel %vm5139, %v5152, %v5154
    %v5156 = vsel %vm5141, %v5152, %v5155
    %v5157 = vsel %vm5131, %v5118, %v5118
    %v5158 = vsel %vm5133, %v5118, %v5157
    %v5159 = vrot.slane %v5130, 7
    %v5160 = vsel %vm4935, %v5159, %v5158
    %v5161 = vsel %vm5137, %v5159, %v5160
    %v5162 = vsel %vm5139, %v5159, %v5161
    %v5163 = vsel %vm5141, %v5159, %v5162
    %5168 = vst [vmem:[#allocation10] sm:$0xff] %v5142
    %5169 = vst [vmem:[#allocation10 + $0x8] sm:$0xff] %v5149
    %5170 = vst [vmem:[#allocation10 + $0x10] sm:$0xff] %v5156
    %5171 = vst [vmem:[#allocation10 + $0x18] sm:$0xff] %v5163
    // Predicated region
    $region34: #{tpu_custom_call.1} parent=1 // pred_check
      _
    $region35: #{tpu_custom_call.1} parent=1 // pred_check_branch
      %5173 = sbr.rel (0) target = $region37
    $region36: #{tpu_custom_call.1} parent=1 // pred_region
      %5175 = vsyncadd [#allocation4], 0
      %s5177 = sshll.u32 [#allocation10], 4
      %s5178 = int_to_ptr.vmem [resolvable:$true] %s5177
      %s5179 = sshll.u32 %s4, 4
      %s5180 = int_to_ptr.hbm [resolvable:$true] %s5179
      %5182 = dma.vmem_to_hbm [thread:$0]  %s5178, 512, %s5180, [#allocation4]
    $region37: #{tpu_custom_call.1} parent=1 // pred_fallthru
      _
    // Predicated region
    $region38: #{tpu_custom_call.1} parent=1 // pred_check
      _
    $region39: #{tpu_custom_call.1} parent=1 // pred_check_branch
      %5184 = sbr.rel (0) target = $region41
    $region40: #{tpu_custom_call.1} parent=1 // pred_region
      %5186 = dma.done [#allocation4], 512
    $region41: #{tpu_custom_call.1} parent=1 // pred_fallthru
      _
    %5187 = vsyncpa [#allocation3], 1
    %5188 = vsyncpa [#allocation6], 1
    %5189 = vsyncpa [#allocation9], 1
    %5190 = vsyncpa [#allocation4], 1

</llo_original>
